<compile_context>
chip_gen: v5e
topology: v5e:2x2
jax: 0.10.0
libtpu: 0.0.40
codegen_flags: <defaults>
</compile_context>

<pallas_src>
import math
import functools

import jax
import jax.numpy as jnp
from jax.experimental import pallas as pl
from jax.experimental.pallas import tpu as pltpu


# ----------------------------------------------------------------------------
# Kernel 1: sinusoidal time embedding + time MLP + ALL layers' AdaptiveRMSNorm
#           scale/shift pairs (packed into one matmul).
# ----------------------------------------------------------------------------
def _time_cond_kernel(alpha_ref, freq_ref, tm1_w_ref, tm1_b_ref,
                      tm2_w_ref, tm2_b_ref, cond_w_ref, cond_b_ref, cond_ref):
    # SinusoidalPosEmb: clamp to [1e-5, 1-1e-5], *1000, concat(sin, cos).
    a = jnp.clip(alpha_ref[...], 1e-5, 1.0 - 1e-5) * 1000.0          # (B, 1)
    ang = a * freq_ref[...]                                          # (B, D//2)
    temb_sin = jnp.concatenate([jnp.sin(ang), jnp.cos(ang)], axis=-1)  # (B, D)

    # time MLP: Linear(D, T) -> SiLU -> Linear(T, T)
    th = (jnp.dot(temb_sin.astype(jnp.bfloat16), tm1_w_ref[...],
                  preferred_element_type=jnp.float32) + tm1_b_ref[...])
    th = th * jax.nn.sigmoid(th)
    temb = (jnp.dot(th.astype(jnp.bfloat16), tm2_w_ref[...],
                    preferred_element_type=jnp.float32) + tm2_b_ref[...])  # (B, T)

    # Shared SiLU(time_emb), then every layer's norm1/norm2 scale/shift in one
    # wide matmul:  (B, T) @ (T, L*4D) + b.
    st = temb * jax.nn.sigmoid(temb)
    cond_ref[...] = (jnp.dot(st.astype(jnp.bfloat16), cond_w_ref[...],
                             preferred_element_type=jnp.float32)
                     + cond_b_ref[...])                              # (B, L*4D)


# ----------------------------------------------------------------------------
# Kernel 2: input projection + positional add + all transformer blocks +
#           final LayerNorm.  Grid over layers; activation carried in VMEM.
# ----------------------------------------------------------------------------
def _prompt_layers_kernel(
    se_ref, in_w_ref, in_b_ref, pos_ref, cond_ref,
    wqkv_ref, bqkv_ref, wo_ref, bo_ref,
    ff1_w_ref, ff1_b_ref, ff2_w_ref, ff2_b_ref,
    ln_g_ref, ln_b_ref,
    o_ref,
    x_scr,
    *, n_heads,
):
    B, K, D = o_ref.shape
    BK = B * K
    hd = D // n_heads
    inv_sqrt_hd = 1.0 / math.sqrt(hd)
    l = pl.program_id(0)

    # ---- first grid step only: input projection + positional encoding -----
    @pl.when(l == 0)
    def _():
        xf = (jnp.dot(se_ref[...].astype(jnp.bfloat16), in_w_ref[...],
                      preferred_element_type=jnp.float32)
              + in_b_ref[...])                                       # (B, K*D)
        # One-time lane-slice writes into the persistent (B, K, D) activation.
        # TODO(synk): the B-row writes are masked sublane stores; avoiding them
        # entirely would require repacking in_w to a (BK, D)-native layout.
        for kk in range(K):
            x_scr[:, kk, :] = xf[:, kk * D:(kk + 1) * D] + pos_ref[:, kk, :]

    # ---- per-layer conditioning (precomputed by the time-cond kernel) -----
    ss = cond_ref[...]                                    # (B, 4D) for layer l
    sc1, sh1 = ss[:, 0:D], ss[:, D:2 * D]                 # norm1 scale / shift
    sc2, sh2 = ss[:, 2 * D:3 * D], ss[:, 3 * D:4 * D]     # norm2 scale / shift

    def ada_rmsnorm(x3, scale, shift):
        var = jnp.mean(x3 * x3, axis=-1, keepdims=True)
        nx = x3 * jax.lax.rsqrt(var + 1e-6)
        return nx * (1.0 + scale[:, None, :]) + shift[:, None, :]

    x = x_scr[...]                                        # (B, K, D) f32

    # ----------------------- self-attention --------------------------------
    res = x
    h = ada_rmsnorm(x, sc1, sh1)
    hb = h.reshape(BK, D).astype(jnp.bfloat16)
    qkv = (jnp.dot(hb, wqkv_ref[0], preferred_element_type=jnp.float32)
           + bqkv_ref[0])                                 # (BK, 3D) f32
    q = qkv[:, 0 * D:1 * D].reshape(B, K, D)
    k = qkv[:, 1 * D:2 * D].reshape(B, K, D)
    v = qkv[:, 2 * D:3 * D].reshape(B, K, D)

    ctx_heads = []
    for hh in range(n_heads):
        lo = hh * hd
        qh = q[:, :, lo:lo + hd]
        kh = k[:, :, lo:lo + hd]
        vh = v[:, :, lo:lo + hd]
        s = jnp.einsum("bqd,bkd->bqk", qh, kh,
                       preferred_element_type=jnp.float32) * inv_sqrt_hd
        s = s - jnp.max(s, axis=-1, keepdims=True)
        p = jnp.exp(s)
        p = p / jnp.sum(p, axis=-1, keepdims=True)        # exact softmax
        ctx_heads.append(jnp.einsum("bqk,bkd->bqd", p, vh,
                                    preferred_element_type=jnp.float32))
    # Lane-concat per-head contexts, then ONE (BK, D) @ (D, D) output proj.
    ctx = jnp.concatenate(ctx_heads, axis=-1).reshape(BK, D)
    attn = (jnp.dot(ctx.astype(jnp.bfloat16), wo_ref[0],
                    preferred_element_type=jnp.float32) + bo_ref[0])
    x = res + attn.reshape(B, K, D)

    # ----------------------- feed-forward (SwiGLU) --------------------------
    res = x
    h = ada_rmsnorm(x, sc2, sh2)
    hb = h.reshape(BK, D).astype(jnp.bfloat16)
    hf = (jnp.dot(hb, ff1_w_ref[0], preferred_element_type=jnp.float32)
          + ff1_b_ref[0])                                 # (BK, 8D)
    half = 4 * D
    xp, gate = hf[:, :half], hf[:, half:]                 # torch: x, gate = chunk
    ff = (gate * jax.nn.sigmoid(gate)) * xp               # silu(gate) * x
    ff = (jnp.dot(ff.astype(jnp.bfloat16), ff2_w_ref[0],
                  preferred_element_type=jnp.float32) + ff2_b_ref[0])  # (BK, D)
    x = res + ff.reshape(B, K, D)

    x_scr[...] = x                                        # carry to next layer

    # ---- last grid step only: final LayerNorm (torch default eps=1e-5) ----
    @pl.when(l == pl.num_programs(0) - 1)
    def _():
        mean = jnp.mean(x, axis=-1, keepdims=True)
        var = jnp.mean((x - mean) * (x - mean), axis=-1, keepdims=True)
        nx = (x - mean) * jax.lax.rsqrt(var + 1e-5)
        o_ref[...] = nx * ln_g_ref[...] + ln_b_ref[...]


# ----------------------------------------------------------------------------
# Parameters + forward wrapper
# ----------------------------------------------------------------------------
def init_params(key, *, S, D, K, T, n_layers, n_heads):
    L = n_layers
    ks = jax.random.split(key, 10)

    def w(k, shape, scale=0.02):
        return jax.random.normal(k, shape, jnp.float32) * scale

    bf = lambda x: x.astype(jnp.bfloat16)

    half = D // 2
    # TODO(synk): odd decoder_emb_dim (zero-pad branch of SinusoidalPosEmb) not handled; D assumed even.
    freqs = jnp.exp(
        jnp.arange(half, dtype=jnp.float32) * (-math.log(10000.0) / (half - 1))
    ).reshape(1, half)

    # Per-layer AdaptiveRMSNorm conditioning weights packed along N:
    # layer l columns [l*4D, l*4D+2D) = norm1 (scale|shift), next 2D = norm2.
    n1_w = w(ks[4], (L, T, 2 * D))
    n2_w = w(ks[7], (L, T, 2 * D))
    cond_w = jnp.concatenate(
        [jnp.concatenate([n1_w[l], n2_w[l]], axis=-1) for l in range(L)], axis=-1)
    cond_b = jnp.zeros((1, L * 4 * D), jnp.float32)

    return dict(
        k=K, d=D, t=T, n_heads=n_heads, n_layers=L,
        freqs=freqs,
        in_w=bf(w(ks[0], (S, K * D))), in_b=jnp.zeros((1, K * D), jnp.float32),
        tm1_w=bf(w(ks[1], (D, T))), tm1_b=jnp.zeros((1, T), jnp.float32),
        tm2_w=bf(w(ks[2], (T, T))), tm2_b=jnp.zeros((1, T), jnp.float32),
        cond_w=bf(cond_w), cond_b=cond_b,
        pos=w(ks[3], (1, K, D), 1.0),                     # positional_encoding ~ randn
        wqkv=bf(w(ks[5], (L, D, 3 * D))), bqkv=jnp.zeros((L, 1, 3 * D), jnp.float32),
        wo=bf(w(ks[6], (L, D, D))), bo=jnp.zeros((L, 1, D), jnp.float32),
        ff1_w=bf(w(ks[8], (L, D, 8 * D))), ff1_b=jnp.zeros((L, 1, 8 * D), jnp.float32),
        ff2_w=bf(w(ks[9], (L, 4 * D, D))), ff2_b=jnp.zeros((L, 1, D), jnp.float32),
        ln_g=jnp.ones((1, 1, D), jnp.float32), ln_b=jnp.zeros((1, 1, D), jnp.float32),
    )


def prompt_generator_forward(params, sentence_embedding, alpha_t):
    B = sentence_embedding.shape[0]
    K, D = params["k"], params["d"]
    L, H = params["n_layers"], params["n_heads"]

    # ---- Kernel 1: time conditioning (tiny; keeps 58% of weight bytes out of
    #      the main kernel's critical path). ----------------------------------
    cond = pl.pallas_call(
        _time_cond_kernel,
        out_shape=jax.ShapeDtypeStruct((B, L * 4 * D), jnp.float32),
    )(alpha_t.astype(jnp.float32).reshape(B, 1), params["freqs"],
      params["tm1_w"], params["tm1_b"], params["tm2_w"], params["tm2_b"],
      params["cond_w"], params["cond_b"])

    # ---- Kernel 2: layer-grid main kernel ----------------------------------
    operands = [sentence_embedding.astype(jnp.float32),
                params["in_w"], params["in_b"], params["pos"], cond,
                params["wqkv"], params["bqkv"], params["wo"], params["bo"],
                params["ff1_w"], params["ff1_b"], params["ff2_w"], params["ff2_b"],
                params["ln_g"], params["ln_b"]]

    def const(arr):
        # Constant block index across the layer grid => fetched once, kept resident.
        return pl.BlockSpec(arr.shape, lambda l, _n=arr.ndim: (0,) * _n)

    in_specs = [
        const(operands[0]),                                  # sentence embedding
        const(operands[1]), const(operands[2]),              # input projection
        const(operands[3]),                                  # positional encoding
        pl.BlockSpec((B, 4 * D), lambda l: (0, l)),          # layer l scale/shift
        pl.BlockSpec((1, D, 3 * D), lambda l: (l, 0, 0)),    # wqkv
        pl.BlockSpec((1, 1, 3 * D), lambda l: (l, 0, 0)),    # bqkv
        pl.BlockSpec((1, D, D), lambda l: (l, 0, 0)),        # wo
        pl.BlockSpec((1, 1, D), lambda l: (l, 0, 0)),        # bo
        pl.BlockSpec((1, D, 8 * D), lambda l: (l, 0, 0)),    # ff1_w
        pl.BlockSpec((1, 1, 8 * D), lambda l: (l, 0, 0)),    # ff1_b
        pl.BlockSpec((1, 4 * D, D), lambda l: (l, 0, 0)),    # ff2_w
        pl.BlockSpec((1, 1, D), lambda l: (l, 0, 0)),        # ff2_b
        const(operands[13]), const(operands[14]),            # final LayerNorm
    ]

    # VMEM limit derived from the actual operand footprint, capped by hardware.
    op_bytes = sum(int(a.size) * a.dtype.itemsize for a in operands)
    try:
        vmem_cap = int(pltpu.get_tpu_info().vmem_capacity_bytes)
    except Exception:
        vmem_cap = 64 << 20          # conservative (v7x) fallback
    vmem_limit = int(max(16 << 20,
                         min(vmem_cap - (8 << 20), 2 * op_bytes + (8 << 20))))

    kernel = functools.partial(_prompt_layers_kernel, n_heads=H)
    return pl.pallas_call(
        kernel,
        out_shape=jax.ShapeDtypeStruct((B, K, D), jnp.float32),
        grid=(L,),
        in_specs=in_specs,
        out_specs=pl.BlockSpec((B, K, D), lambda l: (0, 0, 0)),
        scratch_shapes=[pltpu.VMEM((B, K, D), jnp.float32)],  # activation carry
        compiler_params=pltpu.CompilerParams(
            dimension_semantics=("arbitrary",),
            vmem_limit_bytes=vmem_limit),
    )(*operands)


# ----------------------------------------------------------------------------
if __name__ == "__main__":
    B, S, D, K = 2, 64, 128, 8       # small shapes consistent with the module
    n_layers, n_heads = 2, 4
    T = 4 * D

    key = jax.random.PRNGKey(0)
    pkey, xkey, akey = jax.random.split(key, 3)

    params = init_params(pkey, S=S, D=D, K=K, T=T,
                         n_layers=n_layers, n_heads=n_heads)
    sentence_embedding = jax.random.normal(xkey, (B, S), jnp.float32)
    alpha_t = jax.random.uniform(akey, (B,), jnp.float32)

    out = prompt_generator_forward(params, sentence_embedding, alpha_t)
    out = jax.block_until_ready(out)
    assert out.shape == (B, K, D)
    assert bool(jnp.all(jnp.isfinite(out)))
    # TODO(synk): dropout layers are identity (eval mode); no RNG dropout kernel.
    print("KERNEL_OK")
</pallas_src>

<mosaic_0001>
module attributes {stable_mosaic.version = 11 : i64} {
  func.func @_time_cond_kernel(%arg0: memref<2x1xf32, #tpu.memory_space<vmem>>, %arg1: memref<1x64xf32, #tpu.memory_space<vmem>>, %arg2: memref<128x512xbf16, #tpu.memory_space<vmem>>, %arg3: memref<1x512xf32, #tpu.memory_space<vmem>>, %arg4: memref<512x512xbf16, #tpu.memory_space<vmem>>, %arg5: memref<1x512xf32, #tpu.memory_space<vmem>>, %arg6: memref<512x1024xbf16, #tpu.memory_space<vmem>>, %arg7: memref<1x1024xf32, #tpu.memory_space<vmem>>, %arg8: memref<2x1024xf32, #tpu.memory_space<vmem>>) attributes {dimension_semantics = [], scalar_prefetch = 0 : i64, scratch_operands = 0 : i64, tpu.core_type = #tpu.core_type<tc>} {
    %c0 = arith.constant 0 : index
    %c0_0 = arith.constant 0 : index
    %0 = vector.load %arg0[%c0, %c0_0] : memref<2x1xf32, #tpu.memory_space<vmem>>, vector<2x1xf32>
    %cst = arith.constant 9.99999974E-6 : f32
    %cst_1 = arith.constant 0.999989986 : f32
    %1 = vector.broadcast %cst : f32 to vector<2x1xf32>
    %2 = arith.maximumf %1, %0 : vector<2x1xf32>
    %3 = vector.broadcast %cst_1 : f32 to vector<2x1xf32>
    %4 = arith.minimumf %3, %2 : vector<2x1xf32>
    %cst_2 = arith.constant 1.000000e+03 : f32
    %5 = vector.broadcast %cst_2 : f32 to vector<2x1xf32>
    %6 = arith.mulf %4, %5 : vector<2x1xf32>
    %c0_3 = arith.constant 0 : index
    %c0_4 = arith.constant 0 : index
    %7 = vector.load %arg1[%c0_3, %c0_4] : memref<1x64xf32, #tpu.memory_space<vmem>>, vector<1x64xf32>
    %8 = vector.broadcast %6 : vector<2x1xf32> to vector<2x64xf32>
    %9 = vector.broadcast %7 : vector<1x64xf32> to vector<2x64xf32>
    %10 = arith.mulf %8, %9 : vector<2x64xf32>
    %11 = math.sin %10 : vector<2x64xf32>
    %12 = math.cos %10 : vector<2x64xf32>
    %13 = tpu.concatenate %11, %12 in 1 : vector<2x64xf32>, vector<2x64xf32> -> vector<2x128xf32>
    %14 = arith.truncf %13 : vector<2x128xf32> to vector<2x128xbf16>
    %c0_5 = arith.constant 0 : index
    %c0_6 = arith.constant 0 : index
    %15 = vector.load %arg2[%c0_5, %c0_6] : memref<128x512xbf16, #tpu.memory_space<vmem>>, vector<128x512xbf16>
    %cst_7 = arith.constant dense<0.000000e+00> : vector<2x512xf32>
    %16 = tpu.matmul %14, %15, %cst_7 {dimension_numbers = #tpu.dot_dimension_numbers<[1], [0], [0], [1], [0, 0, 1, 1], [], []>} : vector<2x128xbf16>, vector<128x512xbf16>, vector<2x512xf32> -> vector<2x512xf32>
    %c0_8 = arith.constant 0 : index
    %c0_9 = arith.constant 0 : index
    %17 = vector.load %arg3[%c0_8, %c0_9] : memref<1x512xf32, #tpu.memory_space<vmem>>, vector<1x512xf32>
    %18 = vector.broadcast %17 : vector<1x512xf32> to vector<2x512xf32>
    %19 = arith.addf %16, %18 : vector<2x512xf32>
    %20 = arith.negf %19 : vector<2x512xf32>
    %21 = math.exp %20 : vector<2x512xf32>
    %cst_10 = arith.constant 1.000000e+00 : f32
    %22 = vector.broadcast %cst_10 : f32 to vector<2x512xf32>
    %23 = arith.addf %22, %21 : vector<2x512xf32>
    %24 = arith.divf %22, %23 : vector<2x512xf32>
    %25 = arith.mulf %19, %24 : vector<2x512xf32>
    %26 = arith.truncf %25 : vector<2x512xf32> to vector<2x512xbf16>
    %c0_11 = arith.constant 0 : index
    %c0_12 = arith.constant 0 : index
    %27 = vector.load %arg4[%c0_11, %c0_12] : memref<512x512xbf16, #tpu.memory_space<vmem>>, vector<512x512xbf16>
    %cst_13 = arith.constant dense<0.000000e+00> : vector<2x512xf32>
    %28 = tpu.matmul %26, %27, %cst_13 {dimension_numbers = #tpu.dot_dimension_numbers<[1], [0], [0], [1], [0, 0, 1, 1], [], []>} : vector<2x512xbf16>, vector<512x512xbf16>, vector<2x512xf32> -> vector<2x512xf32>
    %c0_14 = arith.constant 0 : index
    %c0_15 = arith.constant 0 : index
    %29 = vector.load %arg5[%c0_14, %c0_15] : memref<1x512xf32, #tpu.memory_space<vmem>>, vector<1x512xf32>
    %30 = vector.broadcast %29 : vector<1x512xf32> to vector<2x512xf32>
    %31 = arith.addf %28, %30 : vector<2x512xf32>
    %32 = arith.negf %31 : vector<2x512xf32>
    %33 = math.exp %32 : vector<2x512xf32>
    %cst_16 = arith.constant 1.000000e+00 : f32
    %34 = vector.broadcast %cst_16 : f32 to vector<2x512xf32>
    %35 = arith.addf %34, %33 : vector<2x512xf32>
    %36 = arith.divf %34, %35 : vector<2x512xf32>
    %37 = arith.mulf %31, %36 : vector<2x512xf32>
    %38 = arith.truncf %37 : vector<2x512xf32> to vector<2x512xbf16>
    %c0_17 = arith.constant 0 : index
    %c0_18 = arith.constant 0 : index
    %39 = vector.load %arg6[%c0_17, %c0_18] : memref<512x1024xbf16, #tpu.memory_space<vmem>>, vector<512x1024xbf16>
    %cst_19 = arith.constant dense<0.000000e+00> : vector<2x1024xf32>
    %40 = tpu.matmul %38, %39, %cst_19 {dimension_numbers = #tpu.dot_dimension_numbers<[1], [0], [0], [1], [0, 0, 1, 1], [], []>} : vector<2x512xbf16>, vector<512x1024xbf16>, vector<2x1024xf32> -> vector<2x1024xf32>
    %c0_20 = arith.constant 0 : index
    %c0_21 = arith.constant 0 : index
    %41 = vector.load %arg7[%c0_20, %c0_21] : memref<1x1024xf32, #tpu.memory_space<vmem>>, vector<1x1024xf32>
    %42 = vector.broadcast %41 : vector<1x1024xf32> to vector<2x1024xf32>
    %43 = arith.addf %40, %42 : vector<2x1024xf32>
    %c0_22 = arith.constant 0 : index
    %c0_23 = arith.constant 0 : index
    %44 = vector.load %arg8[%c0_22, %c0_23] : memref<2x1024xf32, #tpu.memory_space<vmem>>, vector<2x1024xf32>
    tpu.vector_store %arg8[%c0_22, %c0_23], %43 {strides = array<i32>} : memref<2x1024xf32, #tpu.memory_space<vmem>>, vector<2x1024xf32>,
    return
  }
}

</mosaic_0001>

<llo_original>
// kernel: tpu_custom_call.1
$region0: #{tpu_custom_call.1}
  #allocation0 [shape = 'u32[]', space=smem, size = 0x4, offset = 0x4, fixed_abs, tag = 'smem constant byte address 0x4 - core index']
  #allocation1 [shape = 'u32[72,128]{1,0:T(1,128)}', space=vmem, size = 0x9000, scoped, tag = 'internal scratch']
  %s0 = inlined_call_operand.vmem [shape: f32[2,1], index: 0, kind: input, shape index: {}]
  %s1 = inlined_call_operand.vmem [shape: f32[1,64], index: 1, kind: input, shape index: {}]
  %s2 = inlined_call_operand.hbm [shape: bf16[128,512], index: 2, kind: input, shape index: {}]
  %s3 = inlined_call_operand.hbm [shape: f32[1,512], index: 3, kind: input, shape index: {}]
  %s4 = inlined_call_operand.hbm [shape: bf16[512,512], index: 4, kind: input, shape index: {}]
  %s5 = inlined_call_operand.hbm [shape: f32[1,512], index: 5, kind: input, shape index: {}]
  %s6 = inlined_call_operand.hbm [shape: bf16[512,1024], index: 6, kind: input, shape index: {}]
  %s7 = inlined_call_operand.vmem [shape: f32[1,1024], index: 7, kind: input, shape index: {}]
  %s8 = inlined_call_operand.hbm [shape: f32[2,1024], index: 8, kind: output, shape index: {}]
  %s9 = sld [smem:[#allocation0]]
  $region62: #{tpu_custom_call.1} parent=0
    _
  %s11 = ssub.s32 1, %s9
  %s12 = scalar_select 0, %s11, %s9
  $region1: #{tpu_custom_call.1} parent=0
    #allocation2 [shape = 'u8[131072]{0}', space=vmem, size = 0x20000, scoped, tag = 'input window, operand 2, single buffered']
    #allocation3 [shape = 's32[1]{0}', space=sflag, size = 0x4, scoped, tag = 'scoped memory for tpu_custom_call.1']
    #allocation4 [shape = 's32[1]{0}', space=sflag, size = 0x4, scoped, tag = 'scoped memory for tpu_custom_call.1']
    #allocation5 [shape = 'u8[2048]{0}', space=vmem, size = 0x800, scoped, tag = 'input window, operand 3, single buffered']
    #allocation6 [shape = 's32[1]{0}', space=sflag, size = 0x4, scoped, tag = 'scoped memory for tpu_custom_call.1']
    #allocation7 [shape = 'u8[524288]{0}', space=vmem, size = 0x80000, scoped, tag = 'input window, operand 4, single buffered']
    #allocation8 [shape = 'u8[2048]{0}', space=vmem, size = 0x800, scoped, tag = 'input window, operand 5, single buffered']
    #allocation9 [shape = 's32[1]{0}', space=sflag, size = 0x4, scoped, tag = 'scoped memory for tpu_custom_call.1']
    #allocation10 [shape = 'u8[1048576]{0}', space=vmem, size = 0x100000, scoped, tag = 'input window, operand 6, single buffered']
    #allocation11 [shape = 'u8[8192]{0}', space=vmem, size = 0x2000, scoped, tag = 'output window, operand 0, single buffered']
    %13 = vsyncpa [#allocation3], 0
    %14 = vsyncpa [#allocation6], 0
    %15 = vsyncpa [#allocation9], 0
    %16 = vsyncpa [#allocation4], 0
    // Predicated region
    $region2: #{tpu_custom_call.1} parent=1 // pred_check
      _
    $region3: #{tpu_custom_call.1} parent=1 // pred_check_branch
      %18 = sbr.rel (0) target = $region5
    $region4: #{tpu_custom_call.1} parent=1 // pred_region
      _
    $region5: #{tpu_custom_call.1} parent=1 // pred_fallthru
      _
    // Predicated region
    $region6: #{tpu_custom_call.1} parent=1 // pred_check
      _
    $region7: #{tpu_custom_call.1} parent=1 // pred_check_branch
      %20 = sbr.rel (0) target = $region9
    $region8: #{tpu_custom_call.1} parent=1 // pred_region
      _
    $region9: #{tpu_custom_call.1} parent=1 // pred_fallthru
      _
    // Predicated region
    $region10: #{tpu_custom_call.1} parent=1 // pred_check
      _
    $region11: #{tpu_custom_call.1} parent=1 // pred_check_branch
      %22 = sbr.rel (0) target = $region13
    $region12: #{tpu_custom_call.1} parent=1 // pred_region
      %24 = vsyncadd [#allocation3], 0
      %s25 = sshll.u32 %s2, 4
      %s26 = int_to_ptr.hbm [resolvable:$true] %s25
      %s27 = sshll.u32 [#allocation2], 4
      %s28 = int_to_ptr.vmem [resolvable:$true] %s27
      %33 = dma.hbm_to_vmem [thread:$0]  %s26, 4096, %s28, [#allocation3], 256, 256, 16
    $region13: #{tpu_custom_call.1} parent=1 // pred_fallthru
      _
    // Predicated region
    $region14: #{tpu_custom_call.1} parent=1 // pred_check
      _
    $region15: #{tpu_custom_call.1} parent=1 // pred_check_branch
      %35 = sbr.rel (0) target = $region17
    $region16: #{tpu_custom_call.1} parent=1 // pred_region
      %37 = vsyncadd [#allocation6], 0
      %s39 = sshll.u32 %s3, 4
      %s40 = int_to_ptr.hbm [resolvable:$true] %s39
      %s41 = sshll.u32 [#allocation5], 4
      %s42 = int_to_ptr.vmem [resolvable:$true] %s41
      %44 = dma.hbm_to_vmem [thread:$0]  %s40, 64, %s42, [#allocation6]
    $region17: #{tpu_custom_call.1} parent=1 // pred_fallthru
      _
    // Predicated region
    $region18: #{tpu_custom_call.1} parent=1 // pred_check
      _
    $region19: #{tpu_custom_call.1} parent=1 // pred_check_branch
      %46 = sbr.rel (0) target = $region21
    $region20: #{tpu_custom_call.1} parent=1 // pred_region
      %48 = vsyncadd [#allocation6], 0
      %s49 = sshll.u32 %s4, 4
      %s50 = int_to_ptr.hbm [resolvable:$true] %s49
      %s51 = sshll.u32 [#allocation7], 4
      %s52 = int_to_ptr.vmem [resolvable:$true] %s51
      %57 = dma.hbm_to_vmem [thread:$0]  %s50, 16384, %s52, [#allocation6], 256, 256, 16
    $region21: #{tpu_custom_call.1} parent=1 // pred_fallthru
      _
    // Predicated region
    $region22: #{tpu_custom_call.1} parent=1 // pred_check
      _
    $region23: #{tpu_custom_call.1} parent=1 // pred_check_branch
      %59 = sbr.rel (0) target = $region25
    $region24: #{tpu_custom_call.1} parent=1 // pred_region
      %61 = vsyncadd [#allocation9], 0
      %s63 = sshll.u32 %s5, 4
      %s64 = int_to_ptr.hbm [resolvable:$true] %s63
      %s65 = sshll.u32 [#allocation8], 4
      %s66 = int_to_ptr.vmem [resolvable:$true] %s65
      %68 = dma.hbm_to_vmem [thread:$0]  %s64, 64, %s66, [#allocation9]
    $region25: #{tpu_custom_call.1} parent=1 // pred_fallthru
      _
    // Predicated region
    $region26: #{tpu_custom_call.1} parent=1 // pred_check
      _
    $region27: #{tpu_custom_call.1} parent=1 // pred_check_branch
      %70 = sbr.rel (0) target = $region29
    $region28: #{tpu_custom_call.1} parent=1 // pred_region
      %72 = vsyncadd [#allocation9], 0
      %s73 = sshll.u32 %s6, 4
      %s74 = int_to_ptr.hbm [resolvable:$true] %s73
      %s75 = sshll.u32 [#allocation10], 4
      %s76 = int_to_ptr.vmem [resolvable:$true] %s75
      %81 = dma.hbm_to_vmem [thread:$0]  %s74, 32768, %s76, [#allocation9], 512, 512, 32
    $region29: #{tpu_custom_call.1} parent=1 // pred_fallthru
      _
    // Predicated region
    $region30: #{tpu_custom_call.1} parent=1 // pred_check
      _
    $region31: #{tpu_custom_call.1} parent=1 // pred_check_branch
      %83 = sbr.rel (0) target = $region33
    $region32: #{tpu_custom_call.1} parent=1 // pred_region
      _
    $region33: #{tpu_custom_call.1} parent=1 // pred_fallthru
      _
    // Predicated region
    $region34: #{tpu_custom_call.1} parent=1 // pred_check
      _
    $region35: #{tpu_custom_call.1} parent=1 // pred_check_branch
      %85 = sbr.rel (0) target = $region37
    $region36: #{tpu_custom_call.1} parent=1 // pred_region
      %87 = dma.done [#allocation3], 4096
    $region37: #{tpu_custom_call.1} parent=1 // pred_fallthru
      _
    // Predicated region
    $region38: #{tpu_custom_call.1} parent=1 // pred_check
      _
    $region39: #{tpu_custom_call.1} parent=1 // pred_check_branch
      %89 = sbr.rel (0) target = $region41
    $region40: #{tpu_custom_call.1} parent=1 // pred_region
      %91 = dma.done [#allocation6], 64
    $region41: #{tpu_custom_call.1} parent=1 // pred_fallthru
      _
    // Predicated region
    $region42: #{tpu_custom_call.1} parent=1 // pred_check
      _
    $region43: #{tpu_custom_call.1} parent=1 // pred_check_branch
      %93 = sbr.rel (0) target = $region45
    $region44: #{tpu_custom_call.1} parent=1 // pred_region
      %95 = dma.done [#allocation6], 16384
    $region45: #{tpu_custom_call.1} parent=1 // pred_fallthru
      _
    // Predicated region
    $region46: #{tpu_custom_call.1} parent=1 // pred_check
      _
    $region47: #{tpu_custom_call.1} parent=1 // pred_check_branch
      %97 = sbr.rel (0) target = $region49
    $region48: #{tpu_custom_call.1} parent=1 // pred_region
      %99 = dma.done [#allocation9], 64
    $region49: #{tpu_custom_call.1} parent=1 // pred_fallthru
      _
    // Predicated region
    $region50: #{tpu_custom_call.1} parent=1 // pred_check
      _
    $region51: #{tpu_custom_call.1} parent=1 // pred_check_branch
      %101 = sbr.rel (0) target = $region53
    $region52: #{tpu_custom_call.1} parent=1 // pred_region
      %103 = dma.done [#allocation9], 32768
    $region53: #{tpu_custom_call.1} parent=1 // pred_fallthru
      _
    %v104 = vld [vmem:[%s0] sm:$0x3]
    %v105 = vmax.f32 %v104, 1e-05
    %v106 = vmin.f32 %v105, 0.99999
    %v107 = vmul.f32 %v106, 1000.0
    %v108 = vld [vmem:[%s1] sm:$0x1]
    %110 = vset.pattern.permute.xlu0 0
    %111 = vperm.xlu0 %110, %v107
    %v112 = vpop.permute.xlu0 %111
    %v115 = vperm.slane %v108, 0
    %v117 = vmul.f32 %v112, %v115
    %v118 = vand.u32 2147483647, %v117
    %vm119 = vcmp.le.f32.partialorder %v118, 0.7853982
    %vm120 = vcmp.lt.s32.totalorder %v117, 0
    %v121 = vand.u32 %v117, 2139095040
    %v122 = vshrl.u32 %v121, 23
    %v123 = vsub.s32 %v122, 127
    %v124 = vand.u32 2147483647, %v117
    %v125 = vand.u32 %v124, 8388607
    %v126 = vor.u32 %v125, 8388608
    %v127 = vsub.s32 0, %v126
    %v128 = vadd.s32 %v123, 1
    %vm129 = vcmp.gt.s32.totalorder %v128, 0
    %v130 = vsel %vm129, %v128, 0
    %v131 = vshrl.u32 %v130, 5
    %v132 = vand.u32 %v130, 31
    %v133 = vsub.s32 32, %v132
    %v134 = vshrl.u32 683565275, %v133
    %v135 = vshll.u32 683565275, %v132
    %v136 = vshrl.u32 2475754826, %v133
    %v137 = vor.u32 %v135, %v136
    %v138 = vshll.u32 2475754826, %v132
    %v139 = vshrl.u32 2131351028, %v133
    %v140 = vor.u32 %v138, %v139
    %v141 = vshll.u32 2131351028, %v132
    %v142 = vshrl.u32 2102212464, %v133
    %v143 = vor.u32 %v141, %v142
    %v144 = vshll.u32 2102212464, %v132
    %v145 = vshrl.u32 920167782, %v133
    %v146 = vor.u32 %v144, %v145
    %v147 = vshll.u32 920167782, %v132
    %v148 = vshrl.u32 1326507024, %v133
    %v149 = vor.u32 %v147, %v148
    %vm150 = vcmp.lt.s32.totalorder %v131, 1
    %vm151 = vcmp.lt.s32.totalorder %v131, 2
    %vm152 = vcmp.lt.s32.totalorder %v131, 3
    %vm153 = vcmp.lt.s32.totalorder %v131, 4
    %v154 = vsel %vm150, %v134, %v137
    %v155 = vsel %vm153, %v143, 2102212464
    %v156 = vsel %vm152, %v140, %v155
    %v157 = vsel %vm151, %v154, %v156
    %v158 = vsel %vm150, %v137, %v140
    %v159 = vsel %vm153, %v146, 920167782
    %v160 = vsel %vm152, %v143, %v159
    %v161 = vsel %vm151, %v158, %v160
    %v162 = vsel %vm150, %v140, %v143
    %v163 = vsel %vm153, %v149, 1326507024
    %v164 = vsel %vm152, %v146, %v163
    %v165 = vsel %vm151, %v162, %v164
    %v166 = vshll.u32 %v126, 8
    %v167 = vand.u32 %v166, 65535
    %v168 = vshrl.u32 %v166, 16
    %v169 = vand.u32 %v165, 65535
    %v170 = vshrl.u32 %v165, 16
    %v171 = vmul.u32 %v167, %v169
    %v172 = vmul.u32 %v167, %v170
    %v173 = vmul.u32 %v168, %v169
    %v174 = vmul.u32 %v168, %v170
    %v175 = vshll.u32 %v172, 16
    %v176 = vshrl.u32 %v172, 16
    %v177 = vshll.u32 %v173, 16
    %v178 = vshrl.u32 %v173, 16
    %vm179 = vc.u32 %v171, %v175
    %v180 = vsel %vm179, 1, 0
    %v181 = vadd.s32 %v171, %v175
    %v182 = vadd.s32 %v174, %v180
    %vm183 = vc.u32 %v181, %v177
    %v184 = vsel %vm183, 1, 0
    %v185 = vadd.s32 %v181, %v177
    %v186 = vadd.s32 %v182, %v184
    %v187 = vadd.s32 %v186, %v176
    %v188 = vadd.s32 %v187, %v178
    %v189 = vand.u32 %v166, 65535
    %v190 = vshrl.u32 %v166, 16
    %v191 = vand.u32 %v161, 65535
    %v192 = vshrl.u32 %v161, 16
    %v193 = vmul.u32 %v189, %v191
    %v194 = vmul.u32 %v189, %v192
    %v195 = vmul.u32 %v190, %v191
    %v196 = vmul.u32 %v190, %v192
    %v197 = vshll.u32 %v194, 16
    %v198 = vshrl.u32 %v194, 16
    %v199 = vshll.u32 %v195, 16
    %v200 = vshrl.u32 %v195, 16
    %vm201 = vc.u32 %v193, %v197
    %v202 = vsel %vm201, 1, 0
    %v203 = vadd.s32 %v193, %v197
    %v204 = vadd.s32 %v196, %v202
    %vm205 = vc.u32 %v203, %v199
    %v206 = vsel %vm205, 1, 0
    %v207 = vadd.s32 %v203, %v199
    %v208 = vadd.s32 %v204, %v206
    %v209 = vadd.s32 %v208, %v198
    %v210 = vadd.s32 %v209, %v200
    %v211 = vmul.u32 %v166, %v157
    %v212 = vadd.s32 %v188, %v207
    %vm213 = vc.u32 %v188, %v207
    %v214 = vadd.s32 %v210, 1
    %v215 = vsel %vm213, %v214, %v210
    %v216 = vadd.s32 %v211, %v215
    %v217 = vadd.s32 %v216, 536870912
    %v218 = vshrl.u32 %v217, 30
    %v219 = vshll.u32 %v218, 30
    %v220 = vsub.s32 %v216, %v219
    %vm221 = vcmp.lt.s32.totalorder %v220, 0
    %v222 = vsub.s32 0, %v220
    %v223 = vsel %vm221, %v222, %v220
    %v224 = vclz %v223
    %v225 = vsub.s32 %v224, 2
    %vm226 = vcmp.gt.s32.totalorder 0, %v225
    %v227 = vsel %vm226, 0, %v225
    %v228 = vsub.s32 32, %v227
    %v229 = vshll.u32 %v220, %v227
    %v230 = vshrl.u32 %v212, %v228
    %v231 = vor.u32 %v229, %v230
    %v232 = vsub.s32 4294967266, %v227
    %v233 = vadd.s32 %v232, 127
    %v234 = vshll.u32 %v233, 23
    %v235 = vor.u32 4788187, %v234
    %v236 = vand.u32 2147483647, %v235
    %v238 = vcvt.s32.f32 %v231
    %v239 = vmul.f32 %v238, %v236
    %v240 = vxor.u32 %v239, 2147483648
    %v241 = vsel %vm120, %v240, %v239
    %v242 = vsub.s32 4, %v218
    %v243 = vsel %vm120, %v242, %v218
    %v244 = vsel %vm119, %v117, %v241
    %v245 = vsel %vm119, 0, %v243
    %v246 = vmul.f32 %v244, %v244
    %v247 = vmul.f32 %v246, -0.001358992
    %v248 = vadd.f32 %v247, 0.041655596
    %v249 = vmul.f32 %v246, %v248
    %v250 = vadd.f32 %v249, -0.4999988
    %v251 = vmul.f32 %v246, %v250
    %v252 = vadd.f32 1.0, %v251
    %v253 = vmul.f32 %v244, %v244
    %v254 = vmul.f32 %v253, -0.00019511016
    %v255 = vadd.f32 %v254, 0.008332121
    %v256 = vmul.f32 %v253, %v255
    %v257 = vadd.f32 %v256, -0.16666654
    %v258 = vmul.f32 %v253, %v257
    %v259 = vadd.f32 %v258, 1.0
    %v260 = vmul.f32 %v259, %v244
    %vm261 = vweird.f32 %v117
    %v262 = vadd.s32 %v245, 3
    %v263 = vand.u32 %v262, 3
    %vm264 = vcmp.lt.s32.totalorder %v263, 2
    %vm265 = vcmp.eq.s32.totalorder %v263, 0
    %v266 = vxor.u32 %v260, 2147483648
    %v267 = vsel %vm265, %v252, %v266
    %vm268 = vcmp.eq.s32.totalorder %v263, 2
    %v269 = vxor.u32 %v252, 2147483648
    %v270 = vsel %vm268, %v269, %v260
    %v271 = vsel %vm264, %v267, %v270
    %v272 = vsel %vm261, nan, %v271
    %v273 = vand.u32 2147483647, %v117
    %vm274 = vcmp.le.f32.partialorder %v273, 0.7853982
    %vm275 = vcmp.lt.s32.totalorder %v117, 0
    %v276 = vand.u32 %v117, 2139095040
    %v277 = vshrl.u32 %v276, 23
    %v278 = vsub.s32 %v277, 127
    %v279 = vand.u32 2147483647, %v117
    %v280 = vand.u32 %v279, 8388607
    %v281 = vor.u32 %v280, 8388608
    %v282 = vsub.s32 0, %v281
    %v283 = vadd.s32 %v278, 1
    %vm284 = vcmp.gt.s32.totalorder %v283, 0
    %v285 = vsel %vm284, %v283, 0
    %v286 = vshrl.u32 %v285, 5
    %v287 = vand.u32 %v285, 31
    %v288 = vsub.s32 32, %v287
    %v289 = vshrl.u32 683565275, %v288
    %v290 = vshll.u32 683565275, %v287
    %v291 = vshrl.u32 2475754826, %v288
    %v292 = vor.u32 %v290, %v291
    %v293 = vshll.u32 2475754826, %v287
    %v294 = vshrl.u32 2131351028, %v288
    %v295 = vor.u32 %v293, %v294
    %v296 = vshll.u32 2131351028, %v287
    %v297 = vshrl.u32 2102212464, %v288
    %v298 = vor.u32 %v296, %v297
    %v299 = vshll.u32 2102212464, %v287
    %v300 = vshrl.u32 920167782, %v288
    %v301 = vor.u32 %v299, %v300
    %v302 = vshll.u32 920167782, %v287
    %v303 = vshrl.u32 1326507024, %v288
    %v304 = vor.u32 %v302, %v303
    %vm305 = vcmp.lt.s32.totalorder %v286, 1
    %vm306 = vcmp.lt.s32.totalorder %v286, 2
    %vm307 = vcmp.lt.s32.totalorder %v286, 3
    %vm308 = vcmp.lt.s32.totalorder %v286, 4
    %v309 = vsel %vm305, %v289, %v292
    %v310 = vsel %vm308, %v298, 2102212464
    %v311 = vsel %vm307, %v295, %v310
    %v312 = vsel %vm306, %v309, %v311
    %v313 = vsel %vm305, %v292, %v295
    %v314 = vsel %vm308, %v301, 920167782
    %v315 = vsel %vm307, %v298, %v314
    %v316 = vsel %vm306, %v313, %v315
    %v317 = vsel %vm305, %v295, %v298
    %v318 = vsel %vm308, %v304, 1326507024
    %v319 = vsel %vm307, %v301, %v318
    %v320 = vsel %vm306, %v317, %v319
    %v321 = vshll.u32 %v281, 8
    %v322 = vand.u32 %v321, 65535
    %v323 = vshrl.u32 %v321, 16
    %v324 = vand.u32 %v320, 65535
    %v325 = vshrl.u32 %v320, 16
    %v326 = vmul.u32 %v322, %v324
    %v327 = vmul.u32 %v322, %v325
    %v328 = vmul.u32 %v323, %v324
    %v329 = vmul.u32 %v323, %v325
    %v330 = vshll.u32 %v327, 16
    %v331 = vshrl.u32 %v327, 16
    %v332 = vshll.u32 %v328, 16
    %v333 = vshrl.u32 %v328, 16
    %vm334 = vc.u32 %v326, %v330
    %v335 = vsel %vm334, 1, 0
    %v336 = vadd.s32 %v326, %v330
    %v337 = vadd.s32 %v329, %v335
    %vm338 = vc.u32 %v336, %v332
    %v339 = vsel %vm338, 1, 0
    %v340 = vadd.s32 %v336, %v332
    %v341 = vadd.s32 %v337, %v339
    %v342 = vadd.s32 %v341, %v331
    %v343 = vadd.s32 %v342, %v333
    %v344 = vand.u32 %v321, 65535
    %v345 = vshrl.u32 %v321, 16
    %v346 = vand.u32 %v316, 65535
    %v347 = vshrl.u32 %v316, 16
    %v348 = vmul.u32 %v344, %v346
    %v349 = vmul.u32 %v344, %v347
    %v350 = vmul.u32 %v345, %v346
    %v351 = vmul.u32 %v345, %v347
    %v352 = vshll.u32 %v349, 16
    %v353 = vshrl.u32 %v349, 16
    %v354 = vshll.u32 %v350, 16
    %v355 = vshrl.u32 %v350, 16
    %vm356 = vc.u32 %v348, %v352
    %v357 = vsel %vm356, 1, 0
    %v358 = vadd.s32 %v348, %v352
    %v359 = vadd.s32 %v351, %v357
    %vm360 = vc.u32 %v358, %v354
    %v361 = vsel %vm360, 1, 0
    %v362 = vadd.s32 %v358, %v354
    %v363 = vadd.s32 %v359, %v361
    %v364 = vadd.s32 %v363, %v353
    %v365 = vadd.s32 %v364, %v355
    %v366 = vmul.u32 %v321, %v312
    %v367 = vadd.s32 %v343, %v362
    %vm368 = vc.u32 %v343, %v362
    %v369 = vadd.s32 %v365, 1
    %v370 = vsel %vm368, %v369, %v365
    %v371 = vadd.s32 %v366, %v370
    %v372 = vadd.s32 %v371, 536870912
    %v373 = vshrl.u32 %v372, 30
    %v374 = vshll.u32 %v373, 30
    %v375 = vsub.s32 %v371, %v374
    %vm376 = vcmp.lt.s32.totalorder %v375, 0
    %v377 = vsub.s32 0, %v375
    %v378 = vsel %vm376, %v377, %v375
    %v379 = vclz %v378
    %v380 = vsub.s32 %v379, 2
    %vm381 = vcmp.gt.s32.totalorder 0, %v380
    %v382 = vsel %vm381, 0, %v380
    %v383 = vsub.s32 32, %v382
    %v384 = vshll.u32 %v375, %v382
    %v385 = vshrl.u32 %v367, %v383
    %v386 = vor.u32 %v384, %v385
    %v387 = vsub.s32 4294967266, %v382
    %v388 = vadd.s32 %v387, 127
    %v389 = vshll.u32 %v388, 23
    %v390 = vor.u32 4788187, %v389
    %v391 = vand.u32 2147483647, %v390
    %v393 = vcvt.s32.f32 %v386
    %v394 = vmul.f32 %v393, %v391
    %v395 = vxor.u32 %v394, 2147483648
    %v396 = vsel %vm275, %v395, %v394
    %v397 = vsub.s32 4, %v373
    %v398 = vsel %vm275, %v397, %v373
    %v399 = vsel %vm274, %v117, %v396
    %v400 = vsel %vm274, 0, %v398
    %v401 = vmul.f32 %v399, %v399
    %v402 = vmul.f32 %v401, -0.001358992
    %v403 = vadd.f32 %v402, 0.041655596
    %v404 = vmul.f32 %v401, %v403
    %v405 = vadd.f32 %v404, -0.4999988
    %v406 = vmul.f32 %v401, %v405
    %v407 = vadd.f32 1.0, %v406
    %v408 = vmul.f32 %v399, %v399
    %v409 = vmul.f32 %v408, -0.00019511016
    %v410 = vadd.f32 %v409, 0.008332121
    %v411 = vmul.f32 %v408, %v410
    %v412 = vadd.f32 %v411, -0.16666654
    %v413 = vmul.f32 %v408, %v412
    %v414 = vadd.f32 %v413, 1.0
    %v415 = vmul.f32 %v414, %v399
    %vm416 = vweird.f32 %v117
    %v417 = vand.u32 %v400, 3
    %vm418 = vcmp.lt.s32.totalorder %v417, 2
    %vm419 = vcmp.eq.s32.totalorder %v417, 0
    %v420 = vxor.u32 %v415, 2147483648
    %v421 = vsel %vm419, %v407, %v420
    %vm422 = vcmp.eq.s32.totalorder %v417, 2
    %v423 = vxor.u32 %v407, 2147483648
    %v424 = vsel %vm422, %v423, %v415
    %v425 = vsel %vm418, %v421, %v424
    %v426 = vsel %vm416, nan, %v425
    %428 = vrot.lane.b32.xlu0 %v426, 64
    %v429 = vpop.permute.xlu0 %428
    %vm431 = vcmask 523264
    %v432 = vsel %vm431, %v272, %v429
    %v433 = vpack.c.bf16 %v432, %v432
    %v434 = vld [vmem:[#allocation2] sm:$0xff]
    %v435 = vld [vmem:[#allocation2 + $0x8] sm:$0xff]
    %v436 = vld [vmem:[#allocation2 + $0x10] sm:$0xff]
    %v437 = vld [vmem:[#allocation2 + $0x18] sm:$0xff]
    %v438 = vld [vmem:[#allocation2 + $0x20] sm:$0xff]
    %v439 = vld [vmem:[#allocation2 + $0x28] sm:$0xff]
    %v440 = vld [vmem:[#allocation2 + $0x30] sm:$0xff]
    %v441 = vld [vmem:[#allocation2 + $0x38] sm:$0xff]
    %v442 = vld [vmem:[#allocation2 + $0x40] sm:$0xff]
    %v443 = vld [vmem:[#allocation2 + $0x48] sm:$0xff]
    %v444 = vld [vmem:[#allocation2 + $0x50] sm:$0xff]
    %v445 = vld [vmem:[#allocation2 + $0x58] sm:$0xff]
    %v446 = vld [vmem:[#allocation2 + $0x60] sm:$0xff]
    %v447 = vld [vmem:[#allocation2 + $0x68] sm:$0xff]
    %v448 = vld [vmem:[#allocation2 + $0x70] sm:$0xff]
    %v449 = vld [vmem:[#allocation2 + $0x78] sm:$0xff]
    %v450 = vld [vmem:[#allocation2 + $0x80] sm:$0xff]
    %v451 = vld [vmem:[#allocation2 + $0x88] sm:$0xff]
    %v452 = vld [vmem:[#allocation2 + $0x90] sm:$0xff]
    %v453 = vld [vmem:[#allocation2 + $0x98] sm:$0xff]
    %v454 = vld [vmem:[#allocation2 + $0xa0] sm:$0xff]
    %v455 = vld [vmem:[#allocation2 + $0xa8] sm:$0xff]
    %v456 = vld [vmem:[#allocation2 + $0xb0] sm:$0xff]
    %v457 = vld [vmem:[#allocation2 + $0xb8] sm:$0xff]
    %v458 = vld [vmem:[#allocation2 + $0xc0] sm:$0xff]
    %v459 = vld [vmem:[#allocation2 + $0xc8] sm:$0xff]
    %v460 = vld [vmem:[#allocation2 + $0xd0] sm:$0xff]
    %v461 = vld [vmem:[#allocation2 + $0xd8] sm:$0xff]
    %v462 = vld [vmem:[#allocation2 + $0xe0] sm:$0xff]
    %v463 = vld [vmem:[#allocation2 + $0xe8] sm:$0xff]
    %v464 = vld [vmem:[#allocation2 + $0xf0] sm:$0xff]
    %v465 = vld [vmem:[#allocation2 + $0xf8] sm:$0xff]
    %v466 = vld [vmem:[#allocation5] sm:$0xf]
    %v468 = vperm.slane %v466, 0
    %v469 = vperm.slane %v466, 1
    %v470 = vperm.slane %v466, 2
    %v471 = vperm.slane %v466, 3
    %v508 = vunpack.c.l.b16 %v434
    %v509 = vunpack.c.h.b16 %v434
    %v510 = vunpack.c.l.b16 %v435
    %v511 = vunpack.c.h.b16 %v435
    %v512 = vunpack.c.l.b16 %v436
    %v513 = vunpack.c.h.b16 %v436
    %v514 = vunpack.c.l.b16 %v437
    %v515 = vunpack.c.h.b16 %v437
    %v516 = vunpack.c.l.b16 %v438
    %v517 = vunpack.c.h.b16 %v438
    %v518 = vunpack.c.l.b16 %v439
    %v519 = vunpack.c.h.b16 %v439
    %v520 = vunpack.c.l.b16 %v440
    %v521 = vunpack.c.h.b16 %v440
    %v522 = vunpack.c.l.b16 %v441
    %v523 = vunpack.c.h.b16 %v441
    %v524 = vunpack.c.l.b16 %v442
    %v525 = vunpack.c.h.b16 %v442
    %v526 = vunpack.c.l.b16 %v443
    %v527 = vunpack.c.h.b16 %v443
    %v528 = vunpack.c.l.b16 %v444
    %v529 = vunpack.c.h.b16 %v444
    %v530 = vunpack.c.l.b16 %v445
    %v531 = vunpack.c.h.b16 %v445
    %v532 = vunpack.c.l.b16 %v446
    %v533 = vunpack.c.h.b16 %v446
    %v534 = vunpack.c.l.b16 %v447
    %v535 = vunpack.c.h.b16 %v447
    %v536 = vunpack.c.l.b16 %v448
    %v537 = vunpack.c.h.b16 %v448
    %v538 = vunpack.c.l.b16 %v449
    %v539 = vunpack.c.h.b16 %v449
    %v540 = vunpack.c.l.b16 %v450
    %v541 = vunpack.c.h.b16 %v450
    %v542 = vunpack.c.l.b16 %v451
    %v543 = vunpack.c.h.b16 %v451
    %v544 = vunpack.c.l.b16 %v452
    %v545 = vunpack.c.h.b16 %v452
    %v546 = vunpack.c.l.b16 %v453
    %v547 = vunpack.c.h.b16 %v453
    %v548 = vunpack.c.l.b16 %v454
    %v549 = vunpack.c.h.b16 %v454
    %v550 = vunpack.c.l.b16 %v455
    %v551 = vunpack.c.h.b16 %v455
    %v552 = vunpack.c.l.b16 %v456
    %v553 = vunpack.c.h.b16 %v456
    %v554 = vunpack.c.l.b16 %v457
    %v555 = vunpack.c.h.b16 %v457
    %v556 = vunpack.c.l.b16 %v458
    %v557 = vunpack.c.h.b16 %v458
    %v558 = vunpack.c.l.b16 %v459
    %v559 = vunpack.c.h.b16 %v459
    %v560 = vunpack.c.l.b16 %v460
    %v561 = vunpack.c.h.b16 %v460
    %v562 = vunpack.c.l.b16 %v461
    %v563 = vunpack.c.h.b16 %v461
    %v564 = vunpack.c.l.b16 %v462
    %v565 = vunpack.c.h.b16 %v462
    %v566 = vunpack.c.l.b16 %v463
    %v567 = vunpack.c.h.b16 %v463
    %v568 = vunpack.c.l.b16 %v464
    %v569 = vunpack.c.h.b16 %v464
    %v570 = vunpack.c.l.b16 %v465
    %v571 = vunpack.c.h.b16 %v465
    %v572 = vpack.c.b16 %v512, %v508
    %v573 = vpack.c.b16 %v513, %v509
    %v574 = vpack.c.b16 %v514, %v510
    %v575 = vpack.c.b16 %v515, %v511
    %v576 = vpack.c.b16 %v520, %v516
    %v577 = vpack.c.b16 %v521, %v517
    %v578 = vpack.c.b16 %v522, %v518
    %v579 = vpack.c.b16 %v523, %v519
    %v580 = vpack.c.b16 %v528, %v524
    %v581 = vpack.c.b16 %v529, %v525
    %v582 = vpack.c.b16 %v530, %v526
    %v583 = vpack.c.b16 %v531, %v527
    %v584 = vpack.c.b16 %v536, %v532
    %v585 = vpack.c.b16 %v537, %v533
    %v586 = vpack.c.b16 %v538, %v534
    %v587 = vpack.c.b16 %v539, %v535
    %v588 = vpack.c.b16 %v544, %v540
    %v589 = vpack.c.b16 %v545, %v541
    %v590 = vpack.c.b16 %v546, %v542
    %v591 = vpack.c.b16 %v547, %v543
    %v592 = vpack.c.b16 %v552, %v548
    %v593 = vpack.c.b16 %v553, %v549
    %v594 = vpack.c.b16 %v554, %v550
    %v595 = vpack.c.b16 %v555, %v551
    %v596 = vpack.c.b16 %v560, %v556
    %v597 = vpack.c.b16 %v561, %v557
    %v598 = vpack.c.b16 %v562, %v558
    %v599 = vpack.c.b16 %v563, %v559
    %v600 = vpack.c.b16 %v568, %v564
    %v601 = vpack.c.b16 %v569, %v565
    %v602 = vpack.c.b16 %v570, %v566
    %v603 = vpack.c.b16 %v571, %v567
    %636 = vmatpush.bf16.msra.mxu0 %v600
    %637 = vmatpush.bf16.msra.mxu0 %v596
    %638 = vmatpush.bf16.msra.mxu0 %v592
    %639 = vmatpush.bf16.msra.mxu0 %v588
    %640 = vmatpush.bf16.msra.mxu0 %v584
    %641 = vmatpush.bf16.msra.mxu0 %v580
    %642 = vmatpush.bf16.msra.mxu0 %v576
    %643 = vmatpush.bf16.msra.mxu0 %v572
    %644 = vmatmul.bf16.gmra.mxu0 %v433
    %v645 = vpop.f32.mrf.mxu0
    %v646 = vadd.f32 %v468, %v645
    %v647 = vpop.f32.mrf.mxu0
    %648 = vdwg.mxu0
    %649 = vmatpush.bf16.msra.mxu0 %v601
    %650 = vmatpush.bf16.msra.mxu0 %v597
    %651 = vmatpush.bf16.msra.mxu0 %v593
    %652 = vmatpush.bf16.msra.mxu0 %v589
    %653 = vmatpush.bf16.msra.mxu0 %v585
    %654 = vmatpush.bf16.msra.mxu0 %v581
    %655 = vmatpush.bf16.msra.mxu0 %v577
    %656 = vmatpush.bf16.msra.mxu0 %v573
    %657 = vmatmul.bf16.gmra.mxu0 %v433
    %v658 = vpop.f32.mrf.mxu0
    %v659 = vadd.f32 %v469, %v658
    %v660 = vpop.f32.mrf.mxu0
    %661 = vdwg.mxu0
    %662 = vmatpush.bf16.msra.mxu0 %v602
    %663 = vmatpush.bf16.msra.mxu0 %v598
    %664 = vmatpush.bf16.msra.mxu0 %v594
    %665 = vmatpush.bf16.msra.mxu0 %v590
    %666 = vmatpush.bf16.msra.mxu0 %v586
    %667 = vmatpush.bf16.msra.mxu0 %v582
    %668 = vmatpush.bf16.msra.mxu0 %v578
    %669 = vmatpush.bf16.msra.mxu0 %v574
    %670 = vmatmul.bf16.gmra.mxu0 %v433
    %v671 = vpop.f32.mrf.mxu0
    %v672 = vadd.f32 %v470, %v671
    %v673 = vpop.f32.mrf.mxu0
    %674 = vdwg.mxu0
    %675 = vmatpush.bf16.msra.mxu0 %v603
    %676 = vmatpush.bf16.msra.mxu0 %v599
    %677 = vmatpush.bf16.msra.mxu0 %v595
    %678 = vmatpush.bf16.msra.mxu0 %v591
    %679 = vmatpush.bf16.msra.mxu0 %v587
    %680 = vmatpush.bf16.msra.mxu0 %v583
    %681 = vmatpush.bf16.msra.mxu0 %v579
    %682 = vmatpush.bf16.msra.mxu0 %v575
    %683 = vmatmul.bf16.gmra.mxu0 %v433
    %v684 = vpop.f32.mrf.mxu0
    %v685 = vadd.f32 %v471, %v684
    %v686 = vpop.f32.mrf.mxu0
    %687 = vdwg.mxu0
    %v688 = vxor.u32 %v646, 2147483648
    %v689 = vxor.u32 %v659, 2147483648
    %v690 = vxor.u32 %v672, 2147483648
    %v691 = vxor.u32 %v685, 2147483648
    %v692 = vmul.f32 %v688, 1.442695
    %v693 = vpow.pop %v692
    %v694 = vmul.f32 %v689, 1.442695
    %v695 = vpow.pop %v694
    %v696 = vmul.f32 %v690, 1.442695
    %v697 = vpow.pop %v696
    %v698 = vmul.f32 %v691, 1.442695
    %v699 = vpow.pop %v698
    %v700 = vadd.f32 %v693, 1.0
    %v701 = vadd.f32 %v695, 1.0
    %v702 = vadd.f32 %v697, 1.0
    %v703 = vadd.f32 %v699, 1.0
    %v704 = vrcp.pop %v700
    %v705 = vmul.f32 %v700, %v704
    %v706 = vsub.f32 1.0, %v705
    %v707 = vmul.f32 %v704, %v706
    %v708 = vadd.f32 %v704, %v707
    %vm709 = vweird.f32 %v700
    %vm710 = vweird.f32 %v704
    %vm711 = vmor %vm709, %vm710
    %v712 = vsel %vm711, %v704, %v708
    %v713 = vand.u32 2147483647, %v700
    %vm714 = vcmp.eq.f32.partialorder %v713, 8.507059e+37
    %v715 = vand.u32 %v700, 2147483648
    %v716 = vor.u32 1.1754944e-38, %v715
    %v717 = vsel %vm714, %v716, %v712
    %v718 = vmul.f32 1.0, %v717
    %v719 = vrcp.pop %v701
    %v720 = vmul.f32 %v701, %v719
    %v721 = vsub.f32 1.0, %v720
    %v722 = vmul.f32 %v719, %v721
    %v723 = vadd.f32 %v719, %v722
    %vm724 = vweird.f32 %v701
    %vm725 = vweird.f32 %v719
    %vm726 = vmor %vm724, %vm725
    %v727 = vsel %vm726, %v719, %v723
    %v728 = vand.u32 2147483647, %v701
    %vm729 = vcmp.eq.f32.partialorder %v728, 8.507059e+37
    %v730 = vand.u32 %v701, 2147483648
    %v731 = vor.u32 1.1754944e-38, %v730
    %v732 = vsel %vm729, %v731, %v727
    %v733 = vmul.f32 1.0, %v732
    %v734 = vrcp.pop %v702
    %v735 = vmul.f32 %v702, %v734
    %v736 = vsub.f32 1.0, %v735
    %v737 = vmul.f32 %v734, %v736
    %v738 = vadd.f32 %v734, %v737
    %vm739 = vweird.f32 %v702
    %vm740 = vweird.f32 %v734
    %vm741 = vmor %vm739, %vm740
    %v742 = vsel %vm741, %v734, %v738
    %v743 = vand.u32 2147483647, %v702
    %vm744 = vcmp.eq.f32.partialorder %v743, 8.507059e+37
    %v745 = vand.u32 %v702, 2147483648
    %v746 = vor.u32 1.1754944e-38, %v745
    %v747 = vsel %vm744, %v746, %v742
    %v748 = vmul.f32 1.0, %v747
    %v749 = vrcp.pop %v703
    %v750 = vmul.f32 %v703, %v749
    %v751 = vsub.f32 1.0, %v750
    %v752 = vmul.f32 %v749, %v751
    %v753 = vadd.f32 %v749, %v752
    %vm754 = vweird.f32 %v703
    %vm755 = vweird.f32 %v749
    %vm756 = vmor %vm754, %vm755
    %v757 = vsel %vm756, %v749, %v753
    %v758 = vand.u32 2147483647, %v703
    %vm759 = vcmp.eq.f32.partialorder %v758, 8.507059e+37
    %v760 = vand.u32 %v703, 2147483648
    %v761 = vor.u32 1.1754944e-38, %v760
    %v762 = vsel %vm759, %v761, %v757
    %v763 = vmul.f32 1.0, %v762
    %v764 = vmul.f32 %v646, %v718
    %v765 = vmul.f32 %v659, %v733
    %v766 = vmul.f32 %v672, %v748
    %v767 = vmul.f32 %v685, %v763
    %v768 = vpack.c.bf16 %v764, %v764
    %v769 = vpack.c.bf16 %v765, %v765
    %v770 = vpack.c.bf16 %v766, %v766
    %v771 = vpack.c.bf16 %v767, %v767
    %v772 = vld [vmem:[#allocation7] sm:$0xff]
    %v773 = vld [vmem:[#allocation7 + $0x8] sm:$0xff]
    %v774 = vld [vmem:[#allocation7 + $0x10] sm:$0xff]
    %v775 = vld [vmem:[#allocation7 + $0x18] sm:$0xff]
    %v776 = vld [vmem:[#allocation7 + $0x20] sm:$0xff]
    %v777 = vld [vmem:[#allocation7 + $0x28] sm:$0xff]
    %v778 = vld [vmem:[#allocation7 + $0x30] sm:$0xff]
    %v779 = vld [vmem:[#allocation7 + $0x38] sm:$0xff]
    %v780 = vld [vmem:[#allocation7 + $0x40] sm:$0xff]
    %v781 = vld [vmem:[#allocation7 + $0x48] sm:$0xff]
    %v782 = vld [vmem:[#allocation7 + $0x50] sm:$0xff]
    %v783 = vld [vmem:[#allocation7 + $0x58] sm:$0xff]
    %v784 = vld [vmem:[#allocation7 + $0x60] sm:$0xff]
    %v785 = vld [vmem:[#allocation7 + $0x68] sm:$0xff]
    %v786 = vld [vmem:[#allocation7 + $0x70] sm:$0xff]
    %v787 = vld [vmem:[#allocation7 + $0x78] sm:$0xff]
    %v788 = vld [vmem:[#allocation7 + $0x80] sm:$0xff]
    %v789 = vld [vmem:[#allocation7 + $0x88] sm:$0xff]
    %v790 = vld [vmem:[#allocation7 + $0x90] sm:$0xff]
    %v791 = vld [vmem:[#allocation7 + $0x98] sm:$0xff]
    %v792 = vld [vmem:[#allocation7 + $0xa0] sm:$0xff]
    %v793 = vld [vmem:[#allocation7 + $0xa8] sm:$0xff]
    %v794 = vld [vmem:[#allocation7 + $0xb0] sm:$0xff]
    %v795 = vld [vmem:[#allocation7 + $0xb8] sm:$0xff]
    %v796 = vld [vmem:[#allocation7 + $0xc0] sm:$0xff]
    %v797 = vld [vmem:[#allocation7 + $0xc8] sm:$0xff]
    %v798 = vld [vmem:[#allocation7 + $0xd0] sm:$0xff]
    %v799 = vld [vmem:[#allocation7 + $0xd8] sm:$0xff]
    %v800 = vld [vmem:[#allocation7 + $0xe0] sm:$0xff]
    %v801 = vld [vmem:[#allocation7 + $0xe8] sm:$0xff]
    %v802 = vld [vmem:[#allocation7 + $0xf0] sm:$0xff]
    %v803 = vld [vmem:[#allocation7 + $0xf8] sm:$0xff]
    %v804 = vld [vmem:[#allocation7 + $0x100] sm:$0xff]
    %v805 = vld [vmem:[#allocation7 + $0x108] sm:$0xff]
    %v806 = vld [vmem:[#allocation7 + $0x110] sm:$0xff]
    %v807 = vld [vmem:[#allocation7 + $0x118] sm:$0xff]
    %v808 = vld [vmem:[#allocation7 + $0x120] sm:$0xff]
    %v809 = vld [vmem:[#allocation7 + $0x128] sm:$0xff]
    %v810 = vld [vmem:[#allocation7 + $0x130] sm:$0xff]
    %v811 = vld [vmem:[#allocation7 + $0x138] sm:$0xff]
    %v812 = vld [vmem:[#allocation7 + $0x140] sm:$0xff]
    %v813 = vld [vmem:[#allocation7 + $0x148] sm:$0xff]
    %v814 = vld [vmem:[#allocation7 + $0x150] sm:$0xff]
    %v815 = vld [vmem:[#allocation7 + $0x158] sm:$0xff]
    %v816 = vld [vmem:[#allocation7 + $0x160] sm:$0xff]
    %v817 = vld [vmem:[#allocation7 + $0x168] sm:$0xff]
    %v818 = vld [vmem:[#allocation7 + $0x170] sm:$0xff]
    %v819 = vld [vmem:[#allocation7 + $0x178] sm:$0xff]
    %v820 = vld [vmem:[#allocation7 + $0x180] sm:$0xff]
    %v821 = vld [vmem:[#allocation7 + $0x188] sm:$0xff]
    %v822 = vld [vmem:[#allocation7 + $0x190] sm:$0xff]
    %v823 = vld [vmem:[#allocation7 + $0x198] sm:$0xff]
    %v824 = vld [vmem:[#allocation7 + $0x1a0] sm:$0xff]
    %v825 = vld [vmem:[#allocation7 + $0x1a8] sm:$0xff]
    %v826 = vld [vmem:[#allocation7 + $0x1b0] sm:$0xff]
    %v827 = vld [vmem:[#allocation7 + $0x1b8] sm:$0xff]
    %v828 = vld [vmem:[#allocation7 + $0x1c0] sm:$0xff]
    %v829 = vld [vmem:[#allocation7 + $0x1c8] sm:$0xff]
    %v830 = vld [vmem:[#allocation7 + $0x1d0] sm:$0xff]
    %v831 = vld [vmem:[#allocation7 + $0x1d8] sm:$0xff]
    %v832 = vld [vmem:[#allocation7 + $0x1e0] sm:$0xff]
    %v833 = vld [vmem:[#allocation7 + $0x1e8] sm:$0xff]
    %v834 = vld [vmem:[#allocation7 + $0x1f0] sm:$0xff]
    %v835 = vld [vmem:[#allocation7 + $0x1f8] sm:$0xff]
    %v836 = vld [vmem:[#allocation7 + $0x200] sm:$0xff]
    %v837 = vld [vmem:[#allocation7 + $0x208] sm:$0xff]
    %v838 = vld [vmem:[#allocation7 + $0x210] sm:$0xff]
    %v839 = vld [vmem:[#allocation7 + $0x218] sm:$0xff]
    %v840 = vld [vmem:[#allocation7 + $0x220] sm:$0xff]
    %v841 = vld [vmem:[#allocation7 + $0x228] sm:$0xff]
    %v842 = vld [vmem:[#allocation7 + $0x230] sm:$0xff]
    %v843 = vld [vmem:[#allocation7 + $0x238] sm:$0xff]
    %v844 = vld [vmem:[#allocation7 + $0x240] sm:$0xff]
    %v845 = vld [vmem:[#allocation7 + $0x248] sm:$0xff]
    %v846 = vld [vmem:[#allocation7 + $0x250] sm:$0xff]
    %v847 = vld [vmem:[#allocation7 + $0x258] sm:$0xff]
    %v848 = vld [vmem:[#allocation7 + $0x260] sm:$0xff]
    %v849 = vld [vmem:[#allocation7 + $0x268] sm:$0xff]
    %v850 = vld [vmem:[#allocation7 + $0x270] sm:$0xff]
    %v851 = vld [vmem:[#allocation7 + $0x278] sm:$0xff]
    %v852 = vld [vmem:[#allocation7 + $0x280] sm:$0xff]
    %v853 = vld [vmem:[#allocation7 + $0x288] sm:$0xff]
    %v854 = vld [vmem:[#allocation7 + $0x290] sm:$0xff]
    %v855 = vld [vmem:[#allocation7 + $0x298] sm:$0xff]
    %v856 = vld [vmem:[#allocation7 + $0x2a0] sm:$0xff]
    %v857 = vld [vmem:[#allocation7 + $0x2a8] sm:$0xff]
    %v858 = vld [vmem:[#allocation7 + $0x2b0] sm:$0xff]
    %v859 = vld [vmem:[#allocation7 + $0x2b8] sm:$0xff]
    %v860 = vld [vmem:[#allocation7 + $0x2c0] sm:$0xff]
    %v861 = vld [vmem:[#allocation7 + $0x2c8] sm:$0xff]
    %v862 = vld [vmem:[#allocation7 + $0x2d0] sm:$0xff]
    %v863 = vld [vmem:[#allocation7 + $0x2d8] sm:$0xff]
    %v864 = vld [vmem:[#allocation7 + $0x2e0] sm:$0xff]
    %v865 = vld [vmem:[#allocation7 + $0x2e8] sm:$0xff]
    %v866 = vld [vmem:[#allocation7 + $0x2f0] sm:$0xff]
    %v867 = vld [vmem:[#allocation7 + $0x2f8] sm:$0xff]
    %v868 = vld [vmem:[#allocation7 + $0x300] sm:$0xff]
    %v869 = vld [vmem:[#allocation7 + $0x308] sm:$0xff]
    %v870 = vld [vmem:[#allocation7 + $0x310] sm:$0xff]
    %v871 = vld [vmem:[#allocation7 + $0x318] sm:$0xff]
    %v872 = vld [vmem:[#allocation7 + $0x320] sm:$0xff]
    %v873 = vld [vmem:[#allocation7 + $0x328] sm:$0xff]
    %v874 = vld [vmem:[#allocation7 + $0x330] sm:$0xff]
    %v875 = vld [vmem:[#allocation7 + $0x338] sm:$0xff]
    %v876 = vld [vmem:[#allocation7 + $0x340] sm:$0xff]
    %v877 = vld [vmem:[#allocation7 + $0x348] sm:$0xff]
    %v878 = vld [vmem:[#allocation7 + $0x350] sm:$0xff]
    %v879 = vld [vmem:[#allocation7 + $0x358] sm:$0xff]
    %v880 = vld [vmem:[#allocation7 + $0x360] sm:$0xff]
    %v881 = vld [vmem:[#allocation7 + $0x368] sm:$0xff]
    %v882 = vld [vmem:[#allocation7 + $0x370] sm:$0xff]
    %v883 = vld [vmem:[#allocation7 + $0x378] sm:$0xff]
    %v884 = vld [vmem:[#allocation7 + $0x380] sm:$0xff]
    %v885 = vld [vmem:[#allocation7 + $0x388] sm:$0xff]
    %v886 = vld [vmem:[#allocation7 + $0x390] sm:$0xff]
    %v887 = vld [vmem:[#allocation7 + $0x398] sm:$0xff]
    %v888 = vld [vmem:[#allocation7 + $0x3a0] sm:$0xff]
    %v889 = vld [vmem:[#allocation7 + $0x3a8] sm:$0xff]
    %v890 = vld [vmem:[#allocation7 + $0x3b0] sm:$0xff]
    %v891 = vld [vmem:[#allocation7 + $0x3b8] sm:$0xff]
    %v892 = vld [vmem:[#allocation7 + $0x3c0] sm:$0xff]
    %v893 = vld [vmem:[#allocation7 + $0x3c8] sm:$0xff]
    %v894 = vld [vmem:[#allocation7 + $0x3d0] sm:$0xff]
    %v895 = vld [vmem:[#allocation7 + $0x3d8] sm:$0xff]
    %v896 = vld [vmem:[#allocation7 + $0x3e0] sm:$0xff]
    %v897 = vld [vmem:[#allocation7 + $0x3e8] sm:$0xff]
    %v898 = vld [vmem:[#allocation7 + $0x3f0] sm:$0xff]
    %v899 = vld [vmem:[#allocation7 + $0x3f8] sm:$0xff]
    %v900 = vld [vmem:[#allocation8] sm:$0xf]
    %v902 = vperm.slane %v900, 0
    %v903 = vperm.slane %v900, 1
    %v904 = vperm.slane %v900, 2
    %v905 = vperm.slane %v900, 3
    %v1038 = vunpack.c.l.b16 %v772
    %v1039 = vunpack.c.h.b16 %v772
    %v1040 = vunpack.c.l.b16 %v773
    %v1041 = vunpack.c.h.b16 %v773
    %v1042 = vunpack.c.l.b16 %v774
    %v1043 = vunpack.c.h.b16 %v774
    %v1044 = vunpack.c.l.b16 %v775
    %v1045 = vunpack.c.h.b16 %v775
    %v1046 = vunpack.c.l.b16 %v776
    %v1047 = vunpack.c.h.b16 %v776
    %v1048 = vunpack.c.l.b16 %v777
    %v1049 = vunpack.c.h.b16 %v777
    %v1050 = vunpack.c.l.b16 %v778
    %v1051 = vunpack.c.h.b16 %v778
    %v1052 = vunpack.c.l.b16 %v779
    %v1053 = vunpack.c.h.b16 %v779
    %v1054 = vunpack.c.l.b16 %v780
    %v1055 = vunpack.c.h.b16 %v780
    %v1056 = vunpack.c.l.b16 %v781
    %v1057 = vunpack.c.h.b16 %v781
    %v1058 = vunpack.c.l.b16 %v782
    %v1059 = vunpack.c.h.b16 %v782
    %v1060 = vunpack.c.l.b16 %v783
    %v1061 = vunpack.c.h.b16 %v783
    %v1062 = vunpack.c.l.b16 %v784
    %v1063 = vunpack.c.h.b16 %v784
    %v1064 = vunpack.c.l.b16 %v785
    %v1065 = vunpack.c.h.b16 %v785
    %v1066 = vunpack.c.l.b16 %v786
    %v1067 = vunpack.c.h.b16 %v786
    %v1068 = vunpack.c.l.b16 %v787
    %v1069 = vunpack.c.h.b16 %v787
    %v1070 = vunpack.c.l.b16 %v788
    %v1071 = vunpack.c.h.b16 %v788
    %v1072 = vunpack.c.l.b16 %v789
    %v1073 = vunpack.c.h.b16 %v789
    %v1074 = vunpack.c.l.b16 %v790
    %v1075 = vunpack.c.h.b16 %v790
    %v1076 = vunpack.c.l.b16 %v791
    %v1077 = vunpack.c.h.b16 %v791
    %v1078 = vunpack.c.l.b16 %v792
    %v1079 = vunpack.c.h.b16 %v792
    %v1080 = vunpack.c.l.b16 %v793
    %v1081 = vunpack.c.h.b16 %v793
    %v1082 = vunpack.c.l.b16 %v794
    %v1083 = vunpack.c.h.b16 %v794
    %v1084 = vunpack.c.l.b16 %v795
    %v1085 = vunpack.c.h.b16 %v795
    %v1086 = vunpack.c.l.b16 %v796
    %v1087 = vunpack.c.h.b16 %v796
    %v1088 = vunpack.c.l.b16 %v797
    %v1089 = vunpack.c.h.b16 %v797
    %v1090 = vunpack.c.l.b16 %v798
    %v1091 = vunpack.c.h.b16 %v798
    %v1092 = vunpack.c.l.b16 %v799
    %v1093 = vunpack.c.h.b16 %v799
    %v1094 = vunpack.c.l.b16 %v800
    %v1095 = vunpack.c.h.b16 %v800
    %v1096 = vunpack.c.l.b16 %v801
    %v1097 = vunpack.c.h.b16 %v801
    %v1098 = vunpack.c.l.b16 %v802
    %v1099 = vunpack.c.h.b16 %v802
    %v1100 = vunpack.c.l.b16 %v803
    %v1101 = vunpack.c.h.b16 %v803
    %v1102 = vunpack.c.l.b16 %v804
    %v1103 = vunpack.c.h.b16 %v804
    %v1104 = vunpack.c.l.b16 %v805
    %v1105 = vunpack.c.h.b16 %v805
    %v1106 = vunpack.c.l.b16 %v806
    %v1107 = vunpack.c.h.b16 %v806
    %v1108 = vunpack.c.l.b16 %v807
    %v1109 = vunpack.c.h.b16 %v807
    %v1110 = vunpack.c.l.b16 %v808
    %v1111 = vunpack.c.h.b16 %v808
    %v1112 = vunpack.c.l.b16 %v809
    %v1113 = vunpack.c.h.b16 %v809
    %v1114 = vunpack.c.l.b16 %v810
    %v1115 = vunpack.c.h.b16 %v810
    %v1116 = vunpack.c.l.b16 %v811
    %v1117 = vunpack.c.h.b16 %v811
    %v1118 = vunpack.c.l.b16 %v812
    %v1119 = vunpack.c.h.b16 %v812
    %v1120 = vunpack.c.l.b16 %v813
    %v1121 = vunpack.c.h.b16 %v813
    %v1122 = vunpack.c.l.b16 %v814
    %v1123 = vunpack.c.h.b16 %v814
    %v1124 = vunpack.c.l.b16 %v815
    %v1125 = vunpack.c.h.b16 %v815
    %v1126 = vunpack.c.l.b16 %v816
    %v1127 = vunpack.c.h.b16 %v816
    %v1128 = vunpack.c.l.b16 %v817
    %v1129 = vunpack.c.h.b16 %v817
    %v1130 = vunpack.c.l.b16 %v818
    %v1131 = vunpack.c.h.b16 %v818
    %v1132 = vunpack.c.l.b16 %v819
    %v1133 = vunpack.c.h.b16 %v819
    %v1134 = vunpack.c.l.b16 %v820
    %v1135 = vunpack.c.h.b16 %v820
    %v1136 = vunpack.c.l.b16 %v821
    %v1137 = vunpack.c.h.b16 %v821
    %v1138 = vunpack.c.l.b16 %v822
    %v1139 = vunpack.c.h.b16 %v822
    %v1140 = vunpack.c.l.b16 %v823
    %v1141 = vunpack.c.h.b16 %v823
    %v1142 = vunpack.c.l.b16 %v824
    %v1143 = vunpack.c.h.b16 %v824
    %v1144 = vunpack.c.l.b16 %v825
    %v1145 = vunpack.c.h.b16 %v825
    %v1146 = vunpack.c.l.b16 %v826
    %v1147 = vunpack.c.h.b16 %v826
    %v1148 = vunpack.c.l.b16 %v827
    %v1149 = vunpack.c.h.b16 %v827
    %v1150 = vunpack.c.l.b16 %v828
    %v1151 = vunpack.c.h.b16 %v828
    %v1152 = vunpack.c.l.b16 %v829
    %v1153 = vunpack.c.h.b16 %v829
    %v1154 = vunpack.c.l.b16 %v830
    %v1155 = vunpack.c.h.b16 %v830
    %v1156 = vunpack.c.l.b16 %v831
    %v1157 = vunpack.c.h.b16 %v831
    %v1158 = vunpack.c.l.b16 %v832
    %v1159 = vunpack.c.h.b16 %v832
    %v1160 = vunpack.c.l.b16 %v833
    %v1161 = vunpack.c.h.b16 %v833
    %v1162 = vunpack.c.l.b16 %v834
    %v1163 = vunpack.c.h.b16 %v834
    %v1164 = vunpack.c.l.b16 %v835
    %v1165 = vunpack.c.h.b16 %v835
    %v1166 = vunpack.c.l.b16 %v836
    %v1167 = vunpack.c.h.b16 %v836
    %v1168 = vunpack.c.l.b16 %v837
    %v1169 = vunpack.c.h.b16 %v837
    %v1170 = vunpack.c.l.b16 %v838
    %v1171 = vunpack.c.h.b16 %v838
    %v1172 = vunpack.c.l.b16 %v839
    %v1173 = vunpack.c.h.b16 %v839
    %v1174 = vunpack.c.l.b16 %v840
    %v1175 = vunpack.c.h.b16 %v840
    %v1176 = vunpack.c.l.b16 %v841
    %v1177 = vunpack.c.h.b16 %v841
    %v1178 = vunpack.c.l.b16 %v842
    %v1179 = vunpack.c.h.b16 %v842
    %v1180 = vunpack.c.l.b16 %v843
    %v1181 = vunpack.c.h.b16 %v843
    %v1182 = vunpack.c.l.b16 %v844
    %v1183 = vunpack.c.h.b16 %v844
    %v1184 = vunpack.c.l.b16 %v845
    %v1185 = vunpack.c.h.b16 %v845
    %v1186 = vunpack.c.l.b16 %v846
    %v1187 = vunpack.c.h.b16 %v846
    %v1188 = vunpack.c.l.b16 %v847
    %v1189 = vunpack.c.h.b16 %v847
    %v1190 = vunpack.c.l.b16 %v848
    %v1191 = vunpack.c.h.b16 %v848
    %v1192 = vunpack.c.l.b16 %v849
    %v1193 = vunpack.c.h.b16 %v849
    %v1194 = vunpack.c.l.b16 %v850
    %v1195 = vunpack.c.h.b16 %v850
    %v1196 = vunpack.c.l.b16 %v851
    %v1197 = vunpack.c.h.b16 %v851
    %v1198 = vunpack.c.l.b16 %v852
    %v1199 = vunpack.c.h.b16 %v852
    %v1200 = vunpack.c.l.b16 %v853
    %v1201 = vunpack.c.h.b16 %v853
    %v1202 = vunpack.c.l.b16 %v854
    %v1203 = vunpack.c.h.b16 %v854
    %v1204 = vunpack.c.l.b16 %v855
    %v1205 = vunpack.c.h.b16 %v855
    %v1206 = vunpack.c.l.b16 %v856
    %v1207 = vunpack.c.h.b16 %v856
    %v1208 = vunpack.c.l.b16 %v857
    %v1209 = vunpack.c.h.b16 %v857
    %v1210 = vunpack.c.l.b16 %v858
    %v1211 = vunpack.c.h.b16 %v858
    %v1212 = vunpack.c.l.b16 %v859
    %v1213 = vunpack.c.h.b16 %v859
    %v1214 = vunpack.c.l.b16 %v860
    %v1215 = vunpack.c.h.b16 %v860
    %v1216 = vunpack.c.l.b16 %v861
    %v1217 = vunpack.c.h.b16 %v861
    %v1218 = vunpack.c.l.b16 %v862
    %v1219 = vunpack.c.h.b16 %v862
    %v1220 = vunpack.c.l.b16 %v863
    %v1221 = vunpack.c.h.b16 %v863
    %v1222 = vunpack.c.l.b16 %v864
    %v1223 = vunpack.c.h.b16 %v864
    %v1224 = vunpack.c.l.b16 %v865
    %v1225 = vunpack.c.h.b16 %v865
    %v1226 = vunpack.c.l.b16 %v866
    %v1227 = vunpack.c.h.b16 %v866
    %v1228 = vunpack.c.l.b16 %v867
    %v1229 = vunpack.c.h.b16 %v867
    %v1230 = vunpack.c.l.b16 %v868
    %v1231 = vunpack.c.h.b16 %v868
    %v1232 = vunpack.c.l.b16 %v869
    %v1233 = vunpack.c.h.b16 %v869
    %v1234 = vunpack.c.l.b16 %v870
    %v1235 = vunpack.c.h.b16 %v870
    %v1236 = vunpack.c.l.b16 %v871
    %v1237 = vunpack.c.h.b16 %v871
    %v1238 = vunpack.c.l.b16 %v872
    %v1239 = vunpack.c.h.b16 %v872
    %v1240 = vunpack.c.l.b16 %v873
    %v1241 = vunpack.c.h.b16 %v873
    %v1242 = vunpack.c.l.b16 %v874
    %v1243 = vunpack.c.h.b16 %v874
    %v1244 = vunpack.c.l.b16 %v875
    %v1245 = vunpack.c.h.b16 %v875
    %v1246 = vunpack.c.l.b16 %v876
    %v1247 = vunpack.c.h.b16 %v876
    %v1248 = vunpack.c.l.b16 %v877
    %v1249 = vunpack.c.h.b16 %v877
    %v1250 = vunpack.c.l.b16 %v878
    %v1251 = vunpack.c.h.b16 %v878
    %v1252 = vunpack.c.l.b16 %v879
    %v1253 = vunpack.c.h.b16 %v879
    %v1254 = vunpack.c.l.b16 %v880
    %v1255 = vunpack.c.h.b16 %v880
    %v1256 = vunpack.c.l.b16 %v881
    %v1257 = vunpack.c.h.b16 %v881
    %v1258 = vunpack.c.l.b16 %v882
    %v1259 = vunpack.c.h.b16 %v882
    %v1260 = vunpack.c.l.b16 %v883
    %v1261 = vunpack.c.h.b16 %v883
    %v1262 = vunpack.c.l.b16 %v884
    %v1263 = vunpack.c.h.b16 %v884
    %v1264 = vunpack.c.l.b16 %v885
    %v1265 = vunpack.c.h.b16 %v885
    %v1266 = vunpack.c.l.b16 %v886
    %v1267 = vunpack.c.h.b16 %v886
    %v1268 = vunpack.c.l.b16 %v887
    %v1269 = vunpack.c.h.b16 %v887
    %v1270 = vunpack.c.l.b16 %v888
    %v1271 = vunpack.c.h.b16 %v888
    %v1272 = vunpack.c.l.b16 %v889
    %v1273 = vunpack.c.h.b16 %v889
    %v1274 = vunpack.c.l.b16 %v890
    %v1275 = vunpack.c.h.b16 %v890
    %v1276 = vunpack.c.l.b16 %v891
    %v1277 = vunpack.c.h.b16 %v891
    %v1278 = vunpack.c.l.b16 %v892
    %v1279 = vunpack.c.h.b16 %v892
    %v1280 = vunpack.c.l.b16 %v893
    %v1281 = vunpack.c.h.b16 %v893
    %v1282 = vunpack.c.l.b16 %v894
    %v1283 = vunpack.c.h.b16 %v894
    %v1284 = vunpack.c.l.b16 %v895
    %v1285 = vunpack.c.h.b16 %v895
    %v1286 = vunpack.c.l.b16 %v896
    %v1287 = vunpack.c.h.b16 %v896
    %v1288 = vunpack.c.l.b16 %v897
    %v1289 = vunpack.c.h.b16 %v897
    %v1290 = vunpack.c.l.b16 %v898
    %v1291 = vunpack.c.h.b16 %v898
    %v1292 = vunpack.c.l.b16 %v899
    %v1293 = vunpack.c.h.b16 %v899
    %v1294 = vpack.c.b16 %v1042, %v1038
    %v1295 = vpack.c.b16 %v1043, %v1039
    %v1296 = vpack.c.b16 %v1044, %v1040
    %v1297 = vpack.c.b16 %v1045, %v1041
    %v1298 = vpack.c.b16 %v1050, %v1046
    %v1299 = vpack.c.b16 %v1051, %v1047
    %v1300 = vpack.c.b16 %v1052, %v1048
    %v1301 = vpack.c.b16 %v1053, %v1049
    %v1302 = vpack.c.b16 %v1058, %v1054
    %v1303 = vpack.c.b16 %v1059, %v1055
    %v1304 = vpack.c.b16 %v1060, %v1056
    %v1305 = vpack.c.b16 %v1061, %v1057
    %v1306 = vpack.c.b16 %v1066, %v1062
    %v1307 = vpack.c.b16 %v1067, %v1063
    %v1308 = vpack.c.b16 %v1068, %v1064
    %v1309 = vpack.c.b16 %v1069, %v1065
    %v1310 = vpack.c.b16 %v1074, %v1070
    %v1311 = vpack.c.b16 %v1075, %v1071
    %v1312 = vpack.c.b16 %v1076, %v1072
    %v1313 = vpack.c.b16 %v1077, %v1073
    %v1314 = vpack.c.b16 %v1082, %v1078
    %v1315 = vpack.c.b16 %v1083, %v1079
    %v1316 = vpack.c.b16 %v1084, %v1080
    %v1317 = vpack.c.b16 %v1085, %v1081
    %v1318 = vpack.c.b16 %v1090, %v1086
    %v1319 = vpack.c.b16 %v1091, %v1087
    %v1320 = vpack.c.b16 %v1092, %v1088
    %v1321 = vpack.c.b16 %v1093, %v1089
    %v1322 = vpack.c.b16 %v1098, %v1094
    %v1323 = vpack.c.b16 %v1099, %v1095
    %v1324 = vpack.c.b16 %v1100, %v1096
    %v1325 = vpack.c.b16 %v1101, %v1097
    %v1326 = vpack.c.b16 %v1106, %v1102
    %v1327 = vpack.c.b16 %v1107, %v1103
    %v1328 = vpack.c.b16 %v1108, %v1104
    %v1329 = vpack.c.b16 %v1109, %v1105
    %v1330 = vpack.c.b16 %v1114, %v1110
    %v1331 = vpack.c.b16 %v1115, %v1111
    %v1332 = vpack.c.b16 %v1116, %v1112
    %v1333 = vpack.c.b16 %v1117, %v1113
    %v1334 = vpack.c.b16 %v1122, %v1118
    %v1335 = vpack.c.b16 %v1123, %v1119
    %v1336 = vpack.c.b16 %v1124, %v1120
    %v1337 = vpack.c.b16 %v1125, %v1121
    %v1338 = vpack.c.b16 %v1130, %v1126
    %v1339 = vpack.c.b16 %v1131, %v1127
    %v1340 = vpack.c.b16 %v1132, %v1128
    %v1341 = vpack.c.b16 %v1133, %v1129
    %v1342 = vpack.c.b16 %v1138, %v1134
    %v1343 = vpack.c.b16 %v1139, %v1135
    %v1344 = vpack.c.b16 %v1140, %v1136
    %v1345 = vpack.c.b16 %v1141, %v1137
    %v1346 = vpack.c.b16 %v1146, %v1142
    %v1347 = vpack.c.b16 %v1147, %v1143
    %v1348 = vpack.c.b16 %v1148, %v1144
    %v1349 = vpack.c.b16 %v1149, %v1145
    %v1350 = vpack.c.b16 %v1154, %v1150
    %v1351 = vpack.c.b16 %v1155, %v1151
    %v1352 = vpack.c.b16 %v1156, %v1152
    %v1353 = vpack.c.b16 %v1157, %v1153
    %v1354 = vpack.c.b16 %v1162, %v1158
    %v1355 = vpack.c.b16 %v1163, %v1159
    %v1356 = vpack.c.b16 %v1164, %v1160
    %v1357 = vpack.c.b16 %v1165, %v1161
    %v1358 = vpack.c.b16 %v1170, %v1166
    %v1359 = vpack.c.b16 %v1171, %v1167
    %v1360 = vpack.c.b16 %v1172, %v1168
    %v1361 = vpack.c.b16 %v1173, %v1169
    %v1362 = vpack.c.b16 %v1178, %v1174
    %v1363 = vpack.c.b16 %v1179, %v1175
    %v1364 = vpack.c.b16 %v1180, %v1176
    %v1365 = vpack.c.b16 %v1181, %v1177
    %v1366 = vpack.c.b16 %v1186, %v1182
    %v1367 = vpack.c.b16 %v1187, %v1183
    %v1368 = vpack.c.b16 %v1188, %v1184
    %v1369 = vpack.c.b16 %v1189, %v1185
    %v1370 = vpack.c.b16 %v1194, %v1190
    %v1371 = vpack.c.b16 %v1195, %v1191
    %v1372 = vpack.c.b16 %v1196, %v1192
    %v1373 = vpack.c.b16 %v1197, %v1193
    %v1374 = vpack.c.b16 %v1202, %v1198
    %v1375 = vpack.c.b16 %v1203, %v1199
    %v1376 = vpack.c.b16 %v1204, %v1200
    %v1377 = vpack.c.b16 %v1205, %v1201
    %v1378 = vpack.c.b16 %v1210, %v1206
    %v1379 = vpack.c.b16 %v1211, %v1207
    %v1380 = vpack.c.b16 %v1212, %v1208
    %v1381 = vpack.c.b16 %v1213, %v1209
    %v1382 = vpack.c.b16 %v1218, %v1214
    %v1383 = vpack.c.b16 %v1219, %v1215
    %v1384 = vpack.c.b16 %v1220, %v1216
    %v1385 = vpack.c.b16 %v1221, %v1217
    %v1386 = vpack.c.b16 %v1226, %v1222
    %v1387 = vpack.c.b16 %v1227, %v1223
    %v1388 = vpack.c.b16 %v1228, %v1224
    %v1389 = vpack.c.b16 %v1229, %v1225
    %v1390 = vpack.c.b16 %v1234, %v1230
    %v1391 = vpack.c.b16 %v1235, %v1231
    %v1392 = vpack.c.b16 %v1236, %v1232
    %v1393 = vpack.c.b16 %v1237, %v1233
    %v1394 = vpack.c.b16 %v1242, %v1238
    %v1395 = vpack.c.b16 %v1243, %v1239
    %v1396 = vpack.c.b16 %v1244, %v1240
    %v1397 = vpack.c.b16 %v1245, %v1241
    %v1398 = vpack.c.b16 %v1250, %v1246
    %v1399 = vpack.c.b16 %v1251, %v1247
    %v1400 = vpack.c.b16 %v1252, %v1248
    %v1401 = vpack.c.b16 %v1253, %v1249
    %v1402 = vpack.c.b16 %v1258, %v1254
    %v1403 = vpack.c.b16 %v1259, %v1255
    %v1404 = vpack.c.b16 %v1260, %v1256
    %v1405 = vpack.c.b16 %v1261, %v1257
    %v1406 = vpack.c.b16 %v1266, %v1262
    %v1407 = vpack.c.b16 %v1267, %v1263
    %v1408 = vpack.c.b16 %v1268, %v1264
    %v1409 = vpack.c.b16 %v1269, %v1265
    %v1410 = vpack.c.b16 %v1274, %v1270
    %v1411 = vpack.c.b16 %v1275, %v1271
    %v1412 = vpack.c.b16 %v1276, %v1272
    %v1413 = vpack.c.b16 %v1277, %v1273
    %v1414 = vpack.c.b16 %v1282, %v1278
    %v1415 = vpack.c.b16 %v1283, %v1279
    %v1416 = vpack.c.b16 %v1284, %v1280
    %v1417 = vpack.c.b16 %v1285, %v1281
    %v1418 = vpack.c.b16 %v1290, %v1286
    %v1419 = vpack.c.b16 %v1291, %v1287
    %v1420 = vpack.c.b16 %v1292, %v1288
    %v1421 = vpack.c.b16 %v1293, %v1289
    %1550 = vmatpush.bf16.msra.mxu0 %v1322
    %1551 = vmatpush.bf16.msra.mxu0 %v1318
    %1552 = vmatpush.bf16.msra.mxu0 %v1314
    %1553 = vmatpush.bf16.msra.mxu0 %v1310
    %1554 = vmatpush.bf16.msra.mxu0 %v1306
    %1555 = vmatpush.bf16.msra.mxu0 %v1302
    %1556 = vmatpush.bf16.msra.mxu0 %v1298
    %1557 = vmatpush.bf16.msra.mxu0 %v1294
    %1558 = vmatmul.bf16.gmra.mxu0 %v768
    %v1559 = vpop.f32.mrf.mxu0
    %v1560 = vadd.f32 %v902, %v1559
    %v1561 = vpop.f32.mrf.mxu0
    %1562 = vdwg.mxu0
    %1563 = vmatpush.bf16.msra.mxu0 %v1354
    %1564 = vmatpush.bf16.msra.mxu0 %v1350
    %1565 = vmatpush.bf16.msra.mxu0 %v1346
    %1566 = vmatpush.bf16.msra.mxu0 %v1342
    %1567 = vmatpush.bf16.msra.mxu0 %v1338
    %1568 = vmatpush.bf16.msra.mxu0 %v1334
    %1569 = vmatpush.bf16.msra.mxu0 %v1330
    %1570 = vmatpush.bf16.msra.mxu0 %v1326
    %1571 = vmatmul.bf16.gmra.mxu0 %v769
    %v1572 = vpop.f32.mrf.mxu0
    %v1573 = vadd.f32 %v1560, %v1572
    %v1574 = vpop.f32.mrf.mxu0
    %1575 = vdwg.mxu0
    %1576 = vmatpush.bf16.msra.mxu0 %v1386
    %1577 = vmatpush.bf16.msra.mxu0 %v1382
    %1578 = vmatpush.bf16.msra.mxu0 %v1378
    %1579 = vmatpush.bf16.msra.mxu0 %v1374
    %1580 = vmatpush.bf16.msra.mxu0 %v1370
    %1581 = vmatpush.bf16.msra.mxu0 %v1366
    %1582 = vmatpush.bf16.msra.mxu0 %v1362
    %1583 = vmatpush.bf16.msra.mxu0 %v1358
    %1584 = vmatmul.bf16.gmra.mxu0 %v770
    %v1585 = vpop.f32.mrf.mxu0
    %v1586 = vadd.f32 %v1573, %v1585
    %v1587 = vpop.f32.mrf.mxu0
    %1588 = vdwg.mxu0
    %1589 = vmatpush.bf16.msra.mxu0 %v1418
    %1590 = vmatpush.bf16.msra.mxu0 %v1414
    %1591 = vmatpush.bf16.msra.mxu0 %v1410
    %1592 = vmatpush.bf16.msra.mxu0 %v1406
    %1593 = vmatpush.bf16.msra.mxu0 %v1402
    %1594 = vmatpush.bf16.msra.mxu0 %v1398
    %1595 = vmatpush.bf16.msra.mxu0 %v1394
    %1596 = vmatpush.bf16.msra.mxu0 %v1390
    %1597 = vmatmul.bf16.gmra.mxu0 %v771
    %v1598 = vpop.f32.mrf.mxu0
    %v1599 = vadd.f32 %v1586, %v1598
    %v1600 = vpop.f32.mrf.mxu0
    %1601 = vdwg.mxu0
    %1602 = vmatpush.bf16.msra.mxu0 %v1323
    %1603 = vmatpush.bf16.msra.mxu0 %v1319
    %1604 = vmatpush.bf16.msra.mxu0 %v1315
    %1605 = vmatpush.bf16.msra.mxu0 %v1311
    %1606 = vmatpush.bf16.msra.mxu0 %v1307
    %1607 = vmatpush.bf16.msra.mxu0 %v1303
    %1608 = vmatpush.bf16.msra.mxu0 %v1299
    %1609 = vmatpush.bf16.msra.mxu0 %v1295
    %1610 = vmatmul.bf16.gmra.mxu0 %v768
    %v1611 = vpop.f32.mrf.mxu0
    %v1612 = vadd.f32 %v903, %v1611
    %v1613 = vpop.f32.mrf.mxu0
    %1614 = vdwg.mxu0
    %1615 = vmatpush.bf16.msra.mxu0 %v1355
    %1616 = vmatpush.bf16.msra.mxu0 %v1351
    %1617 = vmatpush.bf16.msra.mxu0 %v1347
    %1618 = vmatpush.bf16.msra.mxu0 %v1343
    %1619 = vmatpush.bf16.msra.mxu0 %v1339
    %1620 = vmatpush.bf16.msra.mxu0 %v1335
    %1621 = vmatpush.bf16.msra.mxu0 %v1331
    %1622 = vmatpush.bf16.msra.mxu0 %v1327
    %1623 = vmatmul.bf16.gmra.mxu0 %v769
    %v1624 = vpop.f32.mrf.mxu0
    %v1625 = vadd.f32 %v1612, %v1624
    %v1626 = vpop.f32.mrf.mxu0
    %1627 = vdwg.mxu0
    %1628 = vmatpush.bf16.msra.mxu0 %v1387
    %1629 = vmatpush.bf16.msra.mxu0 %v1383
    %1630 = vmatpush.bf16.msra.mxu0 %v1379
    %1631 = vmatpush.bf16.msra.mxu0 %v1375
    %1632 = vmatpush.bf16.msra.mxu0 %v1371
    %1633 = vmatpush.bf16.msra.mxu0 %v1367
    %1634 = vmatpush.bf16.msra.mxu0 %v1363
    %1635 = vmatpush.bf16.msra.mxu0 %v1359
    %1636 = vmatmul.bf16.gmra.mxu0 %v770
    %v1637 = vpop.f32.mrf.mxu0
    %v1638 = vadd.f32 %v1625, %v1637
    %v1639 = vpop.f32.mrf.mxu0
    %1640 = vdwg.mxu0
    %1641 = vmatpush.bf16.msra.mxu0 %v1419
    %1642 = vmatpush.bf16.msra.mxu0 %v1415
    %1643 = vmatpush.bf16.msra.mxu0 %v1411
    %1644 = vmatpush.bf16.msra.mxu0 %v1407
    %1645 = vmatpush.bf16.msra.mxu0 %v1403
    %1646 = vmatpush.bf16.msra.mxu0 %v1399
    %1647 = vmatpush.bf16.msra.mxu0 %v1395
    %1648 = vmatpush.bf16.msra.mxu0 %v1391
    %1649 = vmatmul.bf16.gmra.mxu0 %v771
    %v1650 = vpop.f32.mrf.mxu0
    %v1651 = vadd.f32 %v1638, %v1650
    %v1652 = vpop.f32.mrf.mxu0
    %1653 = vdwg.mxu0
    %1654 = vmatpush.bf16.msra.mxu0 %v1324
    %1655 = vmatpush.bf16.msra.mxu0 %v1320
    %1656 = vmatpush.bf16.msra.mxu0 %v1316
    %1657 = vmatpush.bf16.msra.mxu0 %v1312
    %1658 = vmatpush.bf16.msra.mxu0 %v1308
    %1659 = vmatpush.bf16.msra.mxu0 %v1304
    %1660 = vmatpush.bf16.msra.mxu0 %v1300
    %1661 = vmatpush.bf16.msra.mxu0 %v1296
    %1662 = vmatmul.bf16.gmra.mxu0 %v768
    %v1663 = vpop.f32.mrf.mxu0
    %v1664 = vadd.f32 %v904, %v1663
    %v1665 = vpop.f32.mrf.mxu0
    %1666 = vdwg.mxu0
    %1667 = vmatpush.bf16.msra.mxu0 %v1356
    %1668 = vmatpush.bf16.msra.mxu0 %v1352
    %1669 = vmatpush.bf16.msra.mxu0 %v1348
    %1670 = vmatpush.bf16.msra.mxu0 %v1344
    %1671 = vmatpush.bf16.msra.mxu0 %v1340
    %1672 = vmatpush.bf16.msra.mxu0 %v1336
    %1673 = vmatpush.bf16.msra.mxu0 %v1332
    %1674 = vmatpush.bf16.msra.mxu0 %v1328
    %1675 = vmatmul.bf16.gmra.mxu0 %v769
    %v1676 = vpop.f32.mrf.mxu0
    %v1677 = vadd.f32 %v1664, %v1676
    %v1678 = vpop.f32.mrf.mxu0
    %1679 = vdwg.mxu0
    %1680 = vmatpush.bf16.msra.mxu0 %v1388
    %1681 = vmatpush.bf16.msra.mxu0 %v1384
    %1682 = vmatpush.bf16.msra.mxu0 %v1380
    %1683 = vmatpush.bf16.msra.mxu0 %v1376
    %1684 = vmatpush.bf16.msra.mxu0 %v1372
    %1685 = vmatpush.bf16.msra.mxu0 %v1368
    %1686 = vmatpush.bf16.msra.mxu0 %v1364
    %1687 = vmatpush.bf16.msra.mxu0 %v1360
    %1688 = vmatmul.bf16.gmra.mxu0 %v770
    %v1689 = vpop.f32.mrf.mxu0
    %v1690 = vadd.f32 %v1677, %v1689
    %v1691 = vpop.f32.mrf.mxu0
    %1692 = vdwg.mxu0
    %1693 = vmatpush.bf16.msra.mxu0 %v1420
    %1694 = vmatpush.bf16.msra.mxu0 %v1416
    %1695 = vmatpush.bf16.msra.mxu0 %v1412
    %1696 = vmatpush.bf16.msra.mxu0 %v1408
    %1697 = vmatpush.bf16.msra.mxu0 %v1404
    %1698 = vmatpush.bf16.msra.mxu0 %v1400
    %1699 = vmatpush.bf16.msra.mxu0 %v1396
    %1700 = vmatpush.bf16.msra.mxu0 %v1392
    %1701 = vmatmul.bf16.gmra.mxu0 %v771
    %v1702 = vpop.f32.mrf.mxu0
    %v1703 = vadd.f32 %v1690, %v1702
    %v1704 = vpop.f32.mrf.mxu0
    %1705 = vdwg.mxu0
    %1706 = vmatpush.bf16.msra.mxu0 %v1325
    %1707 = vmatpush.bf16.msra.mxu0 %v1321
    %1708 = vmatpush.bf16.msra.mxu0 %v1317
    %1709 = vmatpush.bf16.msra.mxu0 %v1313
    %1710 = vmatpush.bf16.msra.mxu0 %v1309
    %1711 = vmatpush.bf16.msra.mxu0 %v1305
    %1712 = vmatpush.bf16.msra.mxu0 %v1301
    %1713 = vmatpush.bf16.msra.mxu0 %v1297
    %1714 = vmatmul.bf16.gmra.mxu0 %v768
    %v1715 = vpop.f32.mrf.mxu0
    %v1716 = vadd.f32 %v905, %v1715
    %v1717 = vpop.f32.mrf.mxu0
    %1718 = vdwg.mxu0
    %1719 = vmatpush.bf16.msra.mxu0 %v1357
    %1720 = vmatpush.bf16.msra.mxu0 %v1353
    %1721 = vmatpush.bf16.msra.mxu0 %v1349
    %1722 = vmatpush.bf16.msra.mxu0 %v1345
    %1723 = vmatpush.bf16.msra.mxu0 %v1341
    %1724 = vmatpush.bf16.msra.mxu0 %v1337
    %1725 = vmatpush.bf16.msra.mxu0 %v1333
    %1726 = vmatpush.bf16.msra.mxu0 %v1329
    %1727 = vmatmul.bf16.gmra.mxu0 %v769
    %v1728 = vpop.f32.mrf.mxu0
    %v1729 = vadd.f32 %v1716, %v1728
    %v1730 = vpop.f32.mrf.mxu0
    %1731 = vdwg.mxu0
    %1732 = vmatpush.bf16.msra.mxu0 %v1389
    %1733 = vmatpush.bf16.msra.mxu0 %v1385
    %1734 = vmatpush.bf16.msra.mxu0 %v1381
    %1735 = vmatpush.bf16.msra.mxu0 %v1377
    %1736 = vmatpush.bf16.msra.mxu0 %v1373
    %1737 = vmatpush.bf16.msra.mxu0 %v1369
    %1738 = vmatpush.bf16.msra.mxu0 %v1365
    %1739 = vmatpush.bf16.msra.mxu0 %v1361
    %1740 = vmatmul.bf16.gmra.mxu0 %v770
    %v1741 = vpop.f32.mrf.mxu0
    %v1742 = vadd.f32 %v1729, %v1741
    %v1743 = vpop.f32.mrf.mxu0
    %1744 = vdwg.mxu0
    %1745 = vmatpush.bf16.msra.mxu0 %v1421
    %1746 = vmatpush.bf16.msra.mxu0 %v1417
    %1747 = vmatpush.bf16.msra.mxu0 %v1413
    %1748 = vmatpush.bf16.msra.mxu0 %v1409
    %1749 = vmatpush.bf16.msra.mxu0 %v1405
    %1750 = vmatpush.bf16.msra.mxu0 %v1401
    %1751 = vmatpush.bf16.msra.mxu0 %v1397
    %1752 = vmatpush.bf16.msra.mxu0 %v1393
    %1753 = vmatmul.bf16.gmra.mxu0 %v771
    %v1754 = vpop.f32.mrf.mxu0
    %v1755 = vadd.f32 %v1742, %v1754
    %v1756 = vpop.f32.mrf.mxu0
    %1757 = vdwg.mxu0
    %v1758 = vxor.u32 %v1599, 2147483648
    %v1759 = vxor.u32 %v1651, 2147483648
    %v1760 = vxor.u32 %v1703, 2147483648
    %v1761 = vxor.u32 %v1755, 2147483648
    %v1762 = vmul.f32 %v1758, 1.442695
    %v1763 = vpow.pop %v1762
    %v1764 = vmul.f32 %v1759, 1.442695
    %v1765 = vpow.pop %v1764
    %v1766 = vmul.f32 %v1760, 1.442695
    %v1767 = vpow.pop %v1766
    %v1768 = vmul.f32 %v1761, 1.442695
    %v1769 = vpow.pop %v1768
    %v1770 = vadd.f32 %v1763, 1.0
    %v1771 = vadd.f32 %v1765, 1.0
    %v1772 = vadd.f32 %v1767, 1.0
    %v1773 = vadd.f32 %v1769, 1.0
    %v1774 = vrcp.pop %v1770
    %v1775 = vmul.f32 %v1770, %v1774
    %v1776 = vsub.f32 1.0, %v1775
    %v1777 = vmul.f32 %v1774, %v1776
    %v1778 = vadd.f32 %v1774, %v1777
    %vm1779 = vweird.f32 %v1770
    %vm1780 = vweird.f32 %v1774
    %vm1781 = vmor %vm1779, %vm1780
    %v1782 = vsel %vm1781, %v1774, %v1778
    %v1783 = vand.u32 2147483647, %v1770
    %vm1784 = vcmp.eq.f32.partialorder %v1783, 8.507059e+37
    %v1785 = vand.u32 %v1770, 2147483648
    %v1786 = vor.u32 1.1754944e-38, %v1785
    %v1787 = vsel %vm1784, %v1786, %v1782
    %v1788 = vmul.f32 1.0, %v1787
    %v1789 = vrcp.pop %v1771
    %v1790 = vmul.f32 %v1771, %v1789
    %v1791 = vsub.f32 1.0, %v1790
    %v1792 = vmul.f32 %v1789, %v1791
    %v1793 = vadd.f32 %v1789, %v1792
    %vm1794 = vweird.f32 %v1771
    %vm1795 = vweird.f32 %v1789
    %vm1796 = vmor %vm1794, %vm1795
    %v1797 = vsel %vm1796, %v1789, %v1793
    %v1798 = vand.u32 2147483647, %v1771
    %vm1799 = vcmp.eq.f32.partialorder %v1798, 8.507059e+37
    %v1800 = vand.u32 %v1771, 2147483648
    %v1801 = vor.u32 1.1754944e-38, %v1800
    %v1802 = vsel %vm1799, %v1801, %v1797
    %v1803 = vmul.f32 1.0, %v1802
    %v1804 = vrcp.pop %v1772
    %v1805 = vmul.f32 %v1772, %v1804
    %v1806 = vsub.f32 1.0, %v1805
    %v1807 = vmul.f32 %v1804, %v1806
    %v1808 = vadd.f32 %v1804, %v1807
    %vm1809 = vweird.f32 %v1772
    %vm1810 = vweird.f32 %v1804
    %vm1811 = vmor %vm1809, %vm1810
    %v1812 = vsel %vm1811, %v1804, %v1808
    %v1813 = vand.u32 2147483647, %v1772
    %vm1814 = vcmp.eq.f32.partialorder %v1813, 8.507059e+37
    %v1815 = vand.u32 %v1772, 2147483648
    %v1816 = vor.u32 1.1754944e-38, %v1815
    %v1817 = vsel %vm1814, %v1816, %v1812
    %v1818 = vmul.f32 1.0, %v1817
    %v1819 = vrcp.pop %v1773
    %v1820 = vmul.f32 %v1773, %v1819
    %v1821 = vsub.f32 1.0, %v1820
    %v1822 = vmul.f32 %v1819, %v1821
    %v1823 = vadd.f32 %v1819, %v1822
    %vm1824 = vweird.f32 %v1773
    %vm1825 = vweird.f32 %v1819
    %vm1826 = vmor %vm1824, %vm1825
    %v1827 = vsel %vm1826, %v1819, %v1823
    %v1828 = vand.u32 2147483647, %v1773
    %vm1829 = vcmp.eq.f32.partialorder %v1828, 8.507059e+37
    %v1830 = vand.u32 %v1773, 2147483648
    %v1831 = vor.u32 1.1754944e-38, %v1830
    %v1832 = vsel %vm1829, %v1831, %v1827
    %v1833 = vmul.f32 1.0, %v1832
    %v1834 = vmul.f32 %v1599, %v1788
    %v1835 = vmul.f32 %v1651, %v1803
    %v1836 = vmul.f32 %v1703, %v1818
    %v1837 = vmul.f32 %v1755, %v1833
    %v1838 = vpack.c.bf16 %v1834, %v1834
    %v1839 = vpack.c.bf16 %v1835, %v1835
    %v1840 = vpack.c.bf16 %v1836, %v1836
    %v1841 = vpack.c.bf16 %v1837, %v1837
    %v1842 = vld [vmem:[#allocation10] sm:$0xff]
    %v1843 = vld [vmem:[#allocation10 + $0x8] sm:$0xff]
    %v1844 = vld [vmem:[#allocation10 + $0x10] sm:$0xff]
    %v1845 = vld [vmem:[#allocation10 + $0x18] sm:$0xff]
    %v1846 = vld [vmem:[#allocation10 + $0x20] sm:$0xff]
    %v1847 = vld [vmem:[#allocation10 + $0x28] sm:$0xff]
    %v1848 = vld [vmem:[#allocation10 + $0x30] sm:$0xff]
    %v1849 = vld [vmem:[#allocation10 + $0x38] sm:$0xff]
    %v1850 = vld [vmem:[#allocation10 + $0x40] sm:$0xff]
    %v1851 = vld [vmem:[#allocation10 + $0x48] sm:$0xff]
    %v1852 = vld [vmem:[#allocation10 + $0x50] sm:$0xff]
    %v1853 = vld [vmem:[#allocation10 + $0x58] sm:$0xff]
    %v1854 = vld [vmem:[#allocation10 + $0x60] sm:$0xff]
    %v1855 = vld [vmem:[#allocation10 + $0x68] sm:$0xff]
    %v1856 = vld [vmem:[#allocation10 + $0x70] sm:$0xff]
    %v1857 = vld [vmem:[#allocation10 + $0x78] sm:$0xff]
    %v1858 = vld [vmem:[#allocation10 + $0x80] sm:$0xff]
    %v1859 = vld [vmem:[#allocation10 + $0x88] sm:$0xff]
    %v1860 = vld [vmem:[#allocation10 + $0x90] sm:$0xff]
    %v1861 = vld [vmem:[#allocation10 + $0x98] sm:$0xff]
    %v1862 = vld [vmem:[#allocation10 + $0xa0] sm:$0xff]
    %v1863 = vld [vmem:[#allocation10 + $0xa8] sm:$0xff]
    %v1864 = vld [vmem:[#allocation10 + $0xb0] sm:$0xff]
    %v1865 = vld [vmem:[#allocation10 + $0xb8] sm:$0xff]
    %v1866 = vld [vmem:[#allocation10 + $0xc0] sm:$0xff]
    %v1867 = vld [vmem:[#allocation10 + $0xc8] sm:$0xff]
    %v1868 = vld [vmem:[#allocation10 + $0xd0] sm:$0xff]
    %v1869 = vld [vmem:[#allocation10 + $0xd8] sm:$0xff]
    %v1870 = vld [vmem:[#allocation10 + $0xe0] sm:$0xff]
    %v1871 = vld [vmem:[#allocation10 + $0xe8] sm:$0xff]
    %v1872 = vld [vmem:[#allocation10 + $0xf0] sm:$0xff]
    %v1873 = vld [vmem:[#allocation10 + $0xf8] sm:$0xff]
    %v1874 = vld [vmem:[#allocation10 + $0x100] sm:$0xff]
    %v1875 = vld [vmem:[#allocation10 + $0x108] sm:$0xff]
    %v1876 = vld [vmem:[#allocation10 + $0x110] sm:$0xff]
    %v1877 = vld [vmem:[#allocation10 + $0x118] sm:$0xff]
    %v1878 = vld [vmem:[#allocation10 + $0x120] sm:$0xff]
    %v1879 = vld [vmem:[#allocation10 + $0x128] sm:$0xff]
    %v1880 = vld [vmem:[#allocation10 + $0x130] sm:$0xff]
    %v1881 = vld [vmem:[#allocation10 + $0x138] sm:$0xff]
    %v1882 = vld [vmem:[#allocation10 + $0x140] sm:$0xff]
    %v1883 = vld [vmem:[#allocation10 + $0x148] sm:$0xff]
    %v1884 = vld [vmem:[#allocation10 + $0x150] sm:$0xff]
    %v1885 = vld [vmem:[#allocation10 + $0x158] sm:$0xff]
    %v1886 = vld [vmem:[#allocation10 + $0x160] sm:$0xff]
    %v1887 = vld [vmem:[#allocation10 + $0x168] sm:$0xff]
    %v1888 = vld [vmem:[#allocation10 + $0x170] sm:$0xff]
    %v1889 = vld [vmem:[#allocation10 + $0x178] sm:$0xff]
    %v1890 = vld [vmem:[#allocation10 + $0x180] sm:$0xff]
    %v1891 = vld [vmem:[#allocation10 + $0x188] sm:$0xff]
    %v1892 = vld [vmem:[#allocation10 + $0x190] sm:$0xff]
    %v1893 = vld [vmem:[#allocation10 + $0x198] sm:$0xff]
    %v1894 = vld [vmem:[#allocation10 + $0x1a0] sm:$0xff]
    %v1895 = vld [vmem:[#allocation10 + $0x1a8] sm:$0xff]
    %v1896 = vld [vmem:[#allocation10 + $0x1b0] sm:$0xff]
    %v1897 = vld [vmem:[#allocation10 + $0x1b8] sm:$0xff]
    %v1898 = vld [vmem:[#allocation10 + $0x1c0] sm:$0xff]
    %v1899 = vld [vmem:[#allocation10 + $0x1c8] sm:$0xff]
    %v1900 = vld [vmem:[#allocation10 + $0x1d0] sm:$0xff]
    %v1901 = vld [vmem:[#allocation10 + $0x1d8] sm:$0xff]
    %v1902 = vld [vmem:[#allocation10 + $0x1e0] sm:$0xff]
    %v1903 = vld [vmem:[#allocation10 + $0x1e8] sm:$0xff]
    %v1904 = vld [vmem:[#allocation10 + $0x1f0] sm:$0xff]
    %v1905 = vld [vmem:[#allocation10 + $0x1f8] sm:$0xff]
    %v1906 = vld [vmem:[#allocation10 + $0x200] sm:$0xff]
    %v1907 = vld [vmem:[#allocation10 + $0x208] sm:$0xff]
    %v1908 = vld [vmem:[#allocation10 + $0x210] sm:$0xff]
    %v1909 = vld [vmem:[#allocation10 + $0x218] sm:$0xff]
    %v1910 = vld [vmem:[#allocation10 + $0x220] sm:$0xff]
    %v1911 = vld [vmem:[#allocation10 + $0x228] sm:$0xff]
    %v1912 = vld [vmem:[#allocation10 + $0x230] sm:$0xff]
    %v1913 = vld [vmem:[#allocation10 + $0x238] sm:$0xff]
    %v1914 = vld [vmem:[#allocation10 + $0x240] sm:$0xff]
    %v1915 = vld [vmem:[#allocation10 + $0x248] sm:$0xff]
    %v1916 = vld [vmem:[#allocation10 + $0x250] sm:$0xff]
    %v1917 = vld [vmem:[#allocation10 + $0x258] sm:$0xff]
    %v1918 = vld [vmem:[#allocation10 + $0x260] sm:$0xff]
    %v1919 = vld [vmem:[#allocation10 + $0x268] sm:$0xff]
    %v1920 = vld [vmem:[#allocation10 + $0x270] sm:$0xff]
    %v1921 = vld [vmem:[#allocation10 + $0x278] sm:$0xff]
    %v1922 = vld [vmem:[#allocation10 + $0x280] sm:$0xff]
    %v1923 = vld [vmem:[#allocation10 + $0x288] sm:$0xff]
    %v1924 = vld [vmem:[#allocation10 + $0x290] sm:$0xff]
    %v1925 = vld [vmem:[#allocation10 + $0x298] sm:$0xff]
    %v1926 = vld [vmem:[#allocation10 + $0x2a0] sm:$0xff]
    %v1927 = vld [vmem:[#allocation10 + $0x2a8] sm:$0xff]
    %v1928 = vld [vmem:[#allocation10 + $0x2b0] sm:$0xff]
    %v1929 = vld [vmem:[#allocation10 + $0x2b8] sm:$0xff]
    %v1930 = vld [vmem:[#allocation10 + $0x2c0] sm:$0xff]
    %v1931 = vld [vmem:[#allocation10 + $0x2c8] sm:$0xff]
    %v1932 = vld [vmem:[#allocation10 + $0x2d0] sm:$0xff]
    %v1933 = vld [vmem:[#allocation10 + $0x2d8] sm:$0xff]
    %v1934 = vld [vmem:[#allocation10 + $0x2e0] sm:$0xff]
    %v1935 = vld [vmem:[#allocation10 + $0x2e8] sm:$0xff]
    %v1936 = vld [vmem:[#allocation10 + $0x2f0] sm:$0xff]
    %v1937 = vld [vmem:[#allocation10 + $0x2f8] sm:$0xff]
    %v1938 = vld [vmem:[#allocation10 + $0x300] sm:$0xff]
    %v1939 = vld [vmem:[#allocation10 + $0x308] sm:$0xff]
    %v1940 = vld [vmem:[#allocation10 + $0x310] sm:$0xff]
    %v1941 = vld [vmem:[#allocation10 + $0x318] sm:$0xff]
    %v1942 = vld [vmem:[#allocation10 + $0x320] sm:$0xff]
    %v1943 = vld [vmem:[#allocation10 + $0x328] sm:$0xff]
    %v1944 = vld [vmem:[#allocation10 + $0x330] sm:$0xff]
    %v1945 = vld [vmem:[#allocation10 + $0x338] sm:$0xff]
    %v1946 = vld [vmem:[#allocation10 + $0x340] sm:$0xff]
    %v1947 = vld [vmem:[#allocation10 + $0x348] sm:$0xff]
    %v1948 = vld [vmem:[#allocation10 + $0x350] sm:$0xff]
    %v1949 = vld [vmem:[#allocation10 + $0x358] sm:$0xff]
    %v1950 = vld [vmem:[#allocation10 + $0x360] sm:$0xff]
    %v1951 = vld [vmem:[#allocation10 + $0x368] sm:$0xff]
    %v1952 = vld [vmem:[#allocation10 + $0x370] sm:$0xff]
    %v1953 = vld [vmem:[#allocation10 + $0x378] sm:$0xff]
    %v1954 = vld [vmem:[#allocation10 + $0x380] sm:$0xff]
    %v1955 = vld [vmem:[#allocation10 + $0x388] sm:$0xff]
    %v1956 = vld [vmem:[#allocation10 + $0x390] sm:$0xff]
    %v1957 = vld [vmem:[#allocation10 + $0x398] sm:$0xff]
    %v1958 = vld [vmem:[#allocation10 + $0x3a0] sm:$0xff]
    %v1959 = vld [vmem:[#allocation10 + $0x3a8] sm:$0xff]
    %v1960 = vld [vmem:[#allocation10 + $0x3b0] sm:$0xff]
    %v1961 = vld [vmem:[#allocation10 + $0x3b8] sm:$0xff]
    %v1962 = vld [vmem:[#allocation10 + $0x3c0] sm:$0xff]
    %v1963 = vld [vmem:[#allocation10 + $0x3c8] sm:$0xff]
    %v1964 = vld [vmem:[#allocation10 + $0x3d0] sm:$0xff]
    %v1965 = vld [vmem:[#allocation10 + $0x3d8] sm:$0xff]
    %v1966 = vld [vmem:[#allocation10 + $0x3e0] sm:$0xff]
    %v1967 = vld [vmem:[#allocation10 + $0x3e8] sm:$0xff]
    %v1968 = vld [vmem:[#allocation10 + $0x3f0] sm:$0xff]
    %v1969 = vld [vmem:[#allocation10 + $0x3f8] sm:$0xff]
    %v1970 = vld [vmem:[#allocation10 + $0x400] sm:$0xff]
    %v1971 = vld [vmem:[#allocation10 + $0x408] sm:$0xff]
    %v1972 = vld [vmem:[#allocation10 + $0x410] sm:$0xff]
    %v1973 = vld [vmem:[#allocation10 + $0x418] sm:$0xff]
    %v1974 = vld [vmem:[#allocation10 + $0x420] sm:$0xff]
    %v1975 = vld [vmem:[#allocation10 + $0x428] sm:$0xff]
    %v1976 = vld [vmem:[#allocation10 + $0x430] sm:$0xff]
    %v1977 = vld [vmem:[#allocation10 + $0x438] sm:$0xff]
    %v1978 = vld [vmem:[#allocation10 + $0x440] sm:$0xff]
    %v1979 = vld [vmem:[#allocation10 + $0x448] sm:$0xff]
    %v1980 = vld [vmem:[#allocation10 + $0x450] sm:$0xff]
    %v1981 = vld [vmem:[#allocation10 + $0x458] sm:$0xff]
    %v1982 = vld [vmem:[#allocation10 + $0x460] sm:$0xff]
    %v1983 = vld [vmem:[#allocation10 + $0x468] sm:$0xff]
    %v1984 = vld [vmem:[#allocation10 + $0x470] sm:$0xff]
    %v1985 = vld [vmem:[#allocation10 + $0x478] sm:$0xff]
    %v1986 = vld [vmem:[#allocation10 + $0x480] sm:$0xff]
    %v1987 = vld [vmem:[#allocation10 + $0x488] sm:$0xff]
    %v1988 = vld [vmem:[#allocation10 + $0x490] sm:$0xff]
    %v1989 = vld [vmem:[#allocation10 + $0x498] sm:$0xff]
    %v1990 = vld [vmem:[#allocation10 + $0x4a0] sm:$0xff]
    %v1991 = vld [vmem:[#allocation10 + $0x4a8] sm:$0xff]
    %v1992 = vld [vmem:[#allocation10 + $0x4b0] sm:$0xff]
    %v1993 = vld [vmem:[#allocation10 + $0x4b8] sm:$0xff]
    %v1994 = vld [vmem:[#allocation10 + $0x4c0] sm:$0xff]
    %v1995 = vld [vmem:[#allocation10 + $0x4c8] sm:$0xff]
    %v1996 = vld [vmem:[#allocation10 + $0x4d0] sm:$0xff]
    %v1997 = vld [vmem:[#allocation10 + $0x4d8] sm:$0xff]
    %v1998 = vld [vmem:[#allocation10 + $0x4e0] sm:$0xff]
    %v1999 = vld [vmem:[#allocation10 + $0x4e8] sm:$0xff]
    %v2000 = vld [vmem:[#allocation10 + $0x4f0] sm:$0xff]
    %v2001 = vld [vmem:[#allocation10 + $0x4f8] sm:$0xff]
    %v2002 = vld [vmem:[#allocation10 + $0x500] sm:$0xff]
    %v2003 = vld [vmem:[#allocation10 + $0x508] sm:$0xff]
    %v2004 = vld [vmem:[#allocation10 + $0x510] sm:$0xff]
    %v2005 = vld [vmem:[#allocation10 + $0x518] sm:$0xff]
    %v2006 = vld [vmem:[#allocation10 + $0x520] sm:$0xff]
    %v2007 = vld [vmem:[#allocation10 + $0x528] sm:$0xff]
    %v2008 = vld [vmem:[#allocation10 + $0x530] sm:$0xff]
    %v2009 = vld [vmem:[#allocation10 + $0x538] sm:$0xff]
    %v2010 = vld [vmem:[#allocation10 + $0x540] sm:$0xff]
    %v2011 = vld [vmem:[#allocation10 + $0x548] sm:$0xff]
    %v2012 = vld [vmem:[#allocation10 + $0x550] sm:$0xff]
    %v2013 = vld [vmem:[#allocation10 + $0x558] sm:$0xff]
    %v2014 = vld [vmem:[#allocation10 + $0x560] sm:$0xff]
    %v2015 = vld [vmem:[#allocation10 + $0x568] sm:$0xff]
    %v2016 = vld [vmem:[#allocation10 + $0x570] sm:$0xff]
    %v2017 = vld [vmem:[#allocation10 + $0x578] sm:$0xff]
    %v2018 = vld [vmem:[#allocation10 + $0x580] sm:$0xff]
    %v2019 = vld [vmem:[#allocation10 + $0x588] sm:$0xff]
    %v2020 = vld [vmem:[#allocation10 + $0x590] sm:$0xff]
    %v2021 = vld [vmem:[#allocation10 + $0x598] sm:$0xff]
    %v2022 = vld [vmem:[#allocation10 + $0x5a0] sm:$0xff]
    %v2023 = vld [vmem:[#allocation10 + $0x5a8] sm:$0xff]
    %v2024 = vld [vmem:[#allocation10 + $0x5b0] sm:$0xff]
    %v2025 = vld [vmem:[#allocation10 + $0x5b8] sm:$0xff]
    %v2026 = vld [vmem:[#allocation10 + $0x5c0] sm:$0xff]
    %v2027 = vld [vmem:[#allocation10 + $0x5c8] sm:$0xff]
    %v2028 = vld [vmem:[#allocation10 + $0x5d0] sm:$0xff]
    %v2029 = vld [vmem:[#allocation10 + $0x5d8] sm:$0xff]
    %v2030 = vld [vmem:[#allocation10 + $0x5e0] sm:$0xff]
    %v2031 = vld [vmem:[#allocation10 + $0x5e8] sm:$0xff]
    %v2032 = vld [vmem:[#allocation10 + $0x5f0] sm:$0xff]
    %v2033 = vld [vmem:[#allocation10 + $0x5f8] sm:$0xff]
    %v2034 = vld [vmem:[#allocation10 + $0x600] sm:$0xff]
    %v2035 = vld [vmem:[#allocation10 + $0x608] sm:$0xff]
    %v2036 = vld [vmem:[#allocation10 + $0x610] sm:$0xff]
    %v2037 = vld [vmem:[#allocation10 + $0x618] sm:$0xff]
    %v2038 = vld [vmem:[#allocation10 + $0x620] sm:$0xff]
    %v2039 = vld [vmem:[#allocation10 + $0x628] sm:$0xff]
    %v2040 = vld [vmem:[#allocation10 + $0x630] sm:$0xff]
    %v2041 = vld [vmem:[#allocation10 + $0x638] sm:$0xff]
    %v2042 = vld [vmem:[#allocation10 + $0x640] sm:$0xff]
    %v2043 = vld [vmem:[#allocation10 + $0x648] sm:$0xff]
    %v2044 = vld [vmem:[#allocation10 + $0x650] sm:$0xff]
    %v2045 = vld [vmem:[#allocation10 + $0x658] sm:$0xff]
    %v2046 = vld [vmem:[#allocation10 + $0x660] sm:$0xff]
    %v2047 = vld [vmem:[#allocation10 + $0x668] sm:$0xff]
    %v2048 = vld [vmem:[#allocation10 + $0x670] sm:$0xff]
    %v2049 = vld [vmem:[#allocation10 + $0x678] sm:$0xff]
    %v2050 = vld [vmem:[#allocation10 + $0x680] sm:$0xff]
    %v2051 = vld [vmem:[#allocation10 + $0x688] sm:$0xff]
    %v2052 = vld [vmem:[#allocation10 + $0x690] sm:$0xff]
    %v2053 = vld [vmem:[#allocation10 + $0x698] sm:$0xff]
    %v2054 = vld [vmem:[#allocation10 + $0x6a0] sm:$0xff]
    %v2055 = vld [vmem:[#allocation10 + $0x6a8] sm:$0xff]
    %v2056 = vld [vmem:[#allocation10 + $0x6b0] sm:$0xff]
    %v2057 = vld [vmem:[#allocation10 + $0x6b8] sm:$0xff]
    %v2058 = vld [vmem:[#allocation10 + $0x6c0] sm:$0xff]
    %v2059 = vld [vmem:[#allocation10 + $0x6c8] sm:$0xff]
    %v2060 = vld [vmem:[#allocation10 + $0x6d0] sm:$0xff]
    %v2061 = vld [vmem:[#allocation10 + $0x6d8] sm:$0xff]
    %v2062 = vld [vmem:[#allocation10 + $0x6e0] sm:$0xff]
    %v2063 = vld [vmem:[#allocation10 + $0x6e8] sm:$0xff]
    %v2064 = vld [vmem:[#allocation10 + $0x6f0] sm:$0xff]
    %v2065 = vld [vmem:[#allocation10 + $0x6f8] sm:$0xff]
    %v2066 = vld [vmem:[#allocation10 + $0x700] sm:$0xff]
    %v2067 = vld [vmem:[#allocation10 + $0x708] sm:$0xff]
    %v2068 = vld [vmem:[#allocation10 + $0x710] sm:$0xff]
    %v2069 = vld [vmem:[#allocation10 + $0x718] sm:$0xff]
    %v2070 = vld [vmem:[#allocation10 + $0x720] sm:$0xff]
    %v2071 = vld [vmem:[#allocation10 + $0x728] sm:$0xff]
    %v2072 = vld [vmem:[#allocation10 + $0x730] sm:$0xff]
    %v2073 = vld [vmem:[#allocation10 + $0x738] sm:$0xff]
    %v2074 = vld [vmem:[#allocation10 + $0x740] sm:$0xff]
    %v2075 = vld [vmem:[#allocation10 + $0x748] sm:$0xff]
    %v2076 = vld [vmem:[#allocation10 + $0x750] sm:$0xff]
    %v2077 = vld [vmem:[#allocation10 + $0x758] sm:$0xff]
    %v2078 = vld [vmem:[#allocation10 + $0x760] sm:$0xff]
    %v2079 = vld [vmem:[#allocation10 + $0x768] sm:$0xff]
    %v2080 = vld [vmem:[#allocation10 + $0x770] sm:$0xff]
    %v2081 = vld [vmem:[#allocation10 + $0x778] sm:$0xff]
    %v2082 = vld [vmem:[#allocation10 + $0x780] sm:$0xff]
    %v2083 = vld [vmem:[#allocation10 + $0x788] sm:$0xff]
    %v2084 = vld [vmem:[#allocation10 + $0x790] sm:$0xff]
    %v2085 = vld [vmem:[#allocation10 + $0x798] sm:$0xff]
    %v2086 = vld [vmem:[#allocation10 + $0x7a0] sm:$0xff]
    %v2087 = vld [vmem:[#allocation10 + $0x7a8] sm:$0xff]
    %v2088 = vld [vmem:[#allocation10 + $0x7b0] sm:$0xff]
    %v2089 = vld [vmem:[#allocation10 + $0x7b8] sm:$0xff]
    %v2090 = vld [vmem:[#allocation10 + $0x7c0] sm:$0xff]
    %v2091 = vld [vmem:[#allocation10 + $0x7c8] sm:$0xff]
    %v2092 = vld [vmem:[#allocation10 + $0x7d0] sm:$0xff]
    %v2093 = vld [vmem:[#allocation10 + $0x7d8] sm:$0xff]
    %v2094 = vld [vmem:[#allocation10 + $0x7e0] sm:$0xff]
    %v2095 = vld [vmem:[#allocation10 + $0x7e8] sm:$0xff]
    %v2096 = vld [vmem:[#allocation10 + $0x7f0] sm:$0xff]
    %v2097 = vld [vmem:[#allocation10 + $0x7f8] sm:$0xff]
    %v2098 = vld [vmem:[%s7] sm:$0xff]
    %v2100 = vperm.slane %v2098, 0
    %v2101 = vperm.slane %v2098, 1
    %v2102 = vperm.slane %v2098, 2
    %v2103 = vperm.slane %v2098, 3
    %v2104 = vperm.slane %v2098, 4
    %v2105 = vperm.slane %v2098, 5
    %v2106 = vperm.slane %v2098, 6
    %v2107 = vperm.slane %v2098, 7
    %v2372 = vunpack.c.l.b16 %v1842
    %v2373 = vunpack.c.h.b16 %v1842
    %v2374 = vunpack.c.l.b16 %v1843
    %v2375 = vunpack.c.h.b16 %v1843
    %v2376 = vunpack.c.l.b16 %v1844
    %v2377 = vunpack.c.h.b16 %v1844
    %v2378 = vunpack.c.l.b16 %v1845
    %v2379 = vunpack.c.h.b16 %v1845
    %v2380 = vunpack.c.l.b16 %v1846
    %v2381 = vunpack.c.h.b16 %v1846
    %v2382 = vunpack.c.l.b16 %v1847
    %v2383 = vunpack.c.h.b16 %v1847
    %v2384 = vunpack.c.l.b16 %v1848
    %v2385 = vunpack.c.h.b16 %v1848
    %v2386 = vunpack.c.l.b16 %v1849
    %v2387 = vunpack.c.h.b16 %v1849
    %v2388 = vunpack.c.l.b16 %v1850
    %v2389 = vunpack.c.h.b16 %v1850
    %v2390 = vunpack.c.l.b16 %v1851
    %v2391 = vunpack.c.h.b16 %v1851
    %v2392 = vunpack.c.l.b16 %v1852
    %v2393 = vunpack.c.h.b16 %v1852
    %v2394 = vunpack.c.l.b16 %v1853
    %v2395 = vunpack.c.h.b16 %v1853
    %v2396 = vunpack.c.l.b16 %v1854
    %v2397 = vunpack.c.h.b16 %v1854
    %v2398 = vunpack.c.l.b16 %v1855
    %v2399 = vunpack.c.h.b16 %v1855
    %v2400 = vunpack.c.l.b16 %v1856
    %v2401 = vunpack.c.h.b16 %v1856
    %v2402 = vunpack.c.l.b16 %v1857
    %v2403 = vunpack.c.h.b16 %v1857
    %v2404 = vunpack.c.l.b16 %v1858
    %v2405 = vunpack.c.h.b16 %v1858
    %v2406 = vunpack.c.l.b16 %v1859
    %v2407 = vunpack.c.h.b16 %v1859
    %v2408 = vunpack.c.l.b16 %v1860
    %v2409 = vunpack.c.h.b16 %v1860
    %v2410 = vunpack.c.l.b16 %v1861
    %v2411 = vunpack.c.h.b16 %v1861
    %v2412 = vunpack.c.l.b16 %v1862
    %v2413 = vunpack.c.h.b16 %v1862
    %v2414 = vunpack.c.l.b16 %v1863
    %v2415 = vunpack.c.h.b16 %v1863
    %v2416 = vunpack.c.l.b16 %v1864
    %v2417 = vunpack.c.h.b16 %v1864
    %v2418 = vunpack.c.l.b16 %v1865
    %v2419 = vunpack.c.h.b16 %v1865
    %v2420 = vunpack.c.l.b16 %v1866
    %v2421 = vunpack.c.h.b16 %v1866
    %v2422 = vunpack.c.l.b16 %v1867
    %v2423 = vunpack.c.h.b16 %v1867
    %v2424 = vunpack.c.l.b16 %v1868
    %v2425 = vunpack.c.h.b16 %v1868
    %v2426 = vunpack.c.l.b16 %v1869
    %v2427 = vunpack.c.h.b16 %v1869
    %v2428 = vunpack.c.l.b16 %v1870
    %v2429 = vunpack.c.h.b16 %v1870
    %v2430 = vunpack.c.l.b16 %v1871
    %v2431 = vunpack.c.h.b16 %v1871
    %v2432 = vunpack.c.l.b16 %v1872
    %v2433 = vunpack.c.h.b16 %v1872
    %v2434 = vunpack.c.l.b16 %v1873
    %v2435 = vunpack.c.h.b16 %v1873
    %v2436 = vunpack.c.l.b16 %v1874
    %v2437 = vunpack.c.h.b16 %v1874
    %v2438 = vunpack.c.l.b16 %v1875
    %v2439 = vunpack.c.h.b16 %v1875
    %v2440 = vunpack.c.l.b16 %v1876
    %v2441 = vunpack.c.h.b16 %v1876
    %v2442 = vunpack.c.l.b16 %v1877
    %v2443 = vunpack.c.h.b16 %v1877
    %v2444 = vunpack.c.l.b16 %v1878
    %v2445 = vunpack.c.h.b16 %v1878
    %v2446 = vunpack.c.l.b16 %v1879
    %v2447 = vunpack.c.h.b16 %v1879
    %v2448 = vunpack.c.l.b16 %v1880
    %v2449 = vunpack.c.h.b16 %v1880
    %v2450 = vunpack.c.l.b16 %v1881
    %v2451 = vunpack.c.h.b16 %v1881
    %v2452 = vunpack.c.l.b16 %v1882
    %v2453 = vunpack.c.h.b16 %v1882
    %v2454 = vunpack.c.l.b16 %v1883
    %v2455 = vunpack.c.h.b16 %v1883
    %v2456 = vunpack.c.l.b16 %v1884
    %v2457 = vunpack.c.h.b16 %v1884
    %v2458 = vunpack.c.l.b16 %v1885
    %v2459 = vunpack.c.h.b16 %v1885
    %v2460 = vunpack.c.l.b16 %v1886
    %v2461 = vunpack.c.h.b16 %v1886
    %v2462 = vunpack.c.l.b16 %v1887
    %v2463 = vunpack.c.h.b16 %v1887
    %v2464 = vunpack.c.l.b16 %v1888
    %v2465 = vunpack.c.h.b16 %v1888
    %v2466 = vunpack.c.l.b16 %v1889
    %v2467 = vunpack.c.h.b16 %v1889
    %v2468 = vunpack.c.l.b16 %v1890
    %v2469 = vunpack.c.h.b16 %v1890
    %v2470 = vunpack.c.l.b16 %v1891
    %v2471 = vunpack.c.h.b16 %v1891
    %v2472 = vunpack.c.l.b16 %v1892
    %v2473 = vunpack.c.h.b16 %v1892
    %v2474 = vunpack.c.l.b16 %v1893
    %v2475 = vunpack.c.h.b16 %v1893
    %v2476 = vunpack.c.l.b16 %v1894
    %v2477 = vunpack.c.h.b16 %v1894
    %v2478 = vunpack.c.l.b16 %v1895
    %v2479 = vunpack.c.h.b16 %v1895
    %v2480 = vunpack.c.l.b16 %v1896
    %v2481 = vunpack.c.h.b16 %v1896
    %v2482 = vunpack.c.l.b16 %v1897
    %v2483 = vunpack.c.h.b16 %v1897
    %v2484 = vunpack.c.l.b16 %v1898
    %v2485 = vunpack.c.h.b16 %v1898
    %v2486 = vunpack.c.l.b16 %v1899
    %v2487 = vunpack.c.h.b16 %v1899
    %v2488 = vunpack.c.l.b16 %v1900
    %v2489 = vunpack.c.h.b16 %v1900
    %v2490 = vunpack.c.l.b16 %v1901
    %v2491 = vunpack.c.h.b16 %v1901
    %v2492 = vunpack.c.l.b16 %v1902
    %v2493 = vunpack.c.h.b16 %v1902
    %v2494 = vunpack.c.l.b16 %v1903
    %v2495 = vunpack.c.h.b16 %v1903
    %v2496 = vunpack.c.l.b16 %v1904
    %v2497 = vunpack.c.h.b16 %v1904
    %v2498 = vunpack.c.l.b16 %v1905
    %v2499 = vunpack.c.h.b16 %v1905
    %v2500 = vunpack.c.l.b16 %v1906
    %v2501 = vunpack.c.h.b16 %v1906
    %v2502 = vunpack.c.l.b16 %v1907
    %v2503 = vunpack.c.h.b16 %v1907
    %v2504 = vunpack.c.l.b16 %v1908
    %v2505 = vunpack.c.h.b16 %v1908
    %v2506 = vunpack.c.l.b16 %v1909
    %v2507 = vunpack.c.h.b16 %v1909
    %v2508 = vunpack.c.l.b16 %v1910
    %v2509 = vunpack.c.h.b16 %v1910
    %v2510 = vunpack.c.l.b16 %v1911
    %v2511 = vunpack.c.h.b16 %v1911
    %v2512 = vunpack.c.l.b16 %v1912
    %v2513 = vunpack.c.h.b16 %v1912
    %v2514 = vunpack.c.l.b16 %v1913
    %v2515 = vunpack.c.h.b16 %v1913
    %v2516 = vunpack.c.l.b16 %v1914
    %v2517 = vunpack.c.h.b16 %v1914
    %v2518 = vunpack.c.l.b16 %v1915
    %v2519 = vunpack.c.h.b16 %v1915
    %v2520 = vunpack.c.l.b16 %v1916
    %v2521 = vunpack.c.h.b16 %v1916
    %v2522 = vunpack.c.l.b16 %v1917
    %v2523 = vunpack.c.h.b16 %v1917
    %v2524 = vunpack.c.l.b16 %v1918
    %v2525 = vunpack.c.h.b16 %v1918
    %v2526 = vunpack.c.l.b16 %v1919
    %v2527 = vunpack.c.h.b16 %v1919
    %v2528 = vunpack.c.l.b16 %v1920
    %v2529 = vunpack.c.h.b16 %v1920
    %v2530 = vunpack.c.l.b16 %v1921
    %v2531 = vunpack.c.h.b16 %v1921
    %v2532 = vunpack.c.l.b16 %v1922
    %v2533 = vunpack.c.h.b16 %v1922
    %v2534 = vunpack.c.l.b16 %v1923
    %v2535 = vunpack.c.h.b16 %v1923
    %v2536 = vunpack.c.l.b16 %v1924
    %v2537 = vunpack.c.h.b16 %v1924
    %v2538 = vunpack.c.l.b16 %v1925
    %v2539 = vunpack.c.h.b16 %v1925
    %v2540 = vunpack.c.l.b16 %v1926
    %v2541 = vunpack.c.h.b16 %v1926
    %v2542 = vunpack.c.l.b16 %v1927
    %v2543 = vunpack.c.h.b16 %v1927
    %v2544 = vunpack.c.l.b16 %v1928
    %v2545 = vunpack.c.h.b16 %v1928
    %v2546 = vunpack.c.l.b16 %v1929
    %v2547 = vunpack.c.h.b16 %v1929
    %v2548 = vunpack.c.l.b16 %v1930
    %v2549 = vunpack.c.h.b16 %v1930
    %v2550 = vunpack.c.l.b16 %v1931
    %v2551 = vunpack.c.h.b16 %v1931
    %v2552 = vunpack.c.l.b16 %v1932
    %v2553 = vunpack.c.h.b16 %v1932
    %v2554 = vunpack.c.l.b16 %v1933
    %v2555 = vunpack.c.h.b16 %v1933
    %v2556 = vunpack.c.l.b16 %v1934
    %v2557 = vunpack.c.h.b16 %v1934
    %v2558 = vunpack.c.l.b16 %v1935
    %v2559 = vunpack.c.h.b16 %v1935
    %v2560 = vunpack.c.l.b16 %v1936
    %v2561 = vunpack.c.h.b16 %v1936
    %v2562 = vunpack.c.l.b16 %v1937
    %v2563 = vunpack.c.h.b16 %v1937
    %v2564 = vunpack.c.l.b16 %v1938
    %v2565 = vunpack.c.h.b16 %v1938
    %v2566 = vunpack.c.l.b16 %v1939
    %v2567 = vunpack.c.h.b16 %v1939
    %v2568 = vunpack.c.l.b16 %v1940
    %v2569 = vunpack.c.h.b16 %v1940
    %v2570 = vunpack.c.l.b16 %v1941
    %v2571 = vunpack.c.h.b16 %v1941
    %v2572 = vunpack.c.l.b16 %v1942
    %v2573 = vunpack.c.h.b16 %v1942
    %v2574 = vunpack.c.l.b16 %v1943
    %v2575 = vunpack.c.h.b16 %v1943
    %v2576 = vunpack.c.l.b16 %v1944
    %v2577 = vunpack.c.h.b16 %v1944
    %v2578 = vunpack.c.l.b16 %v1945
    %v2579 = vunpack.c.h.b16 %v1945
    %v2580 = vunpack.c.l.b16 %v1946
    %v2581 = vunpack.c.h.b16 %v1946
    %v2582 = vunpack.c.l.b16 %v1947
    %v2583 = vunpack.c.h.b16 %v1947
    %v2584 = vunpack.c.l.b16 %v1948
    %v2585 = vunpack.c.h.b16 %v1948
    %v2586 = vunpack.c.l.b16 %v1949
    %v2587 = vunpack.c.h.b16 %v1949
    %v2588 = vunpack.c.l.b16 %v1950
    %v2589 = vunpack.c.h.b16 %v1950
    %v2590 = vunpack.c.l.b16 %v1951
    %v2591 = vunpack.c.h.b16 %v1951
    %v2592 = vunpack.c.l.b16 %v1952
    %v2593 = vunpack.c.h.b16 %v1952
    %v2594 = vunpack.c.l.b16 %v1953
    %v2595 = vunpack.c.h.b16 %v1953
    %v2596 = vunpack.c.l.b16 %v1954
    %v2597 = vunpack.c.h.b16 %v1954
    %v2598 = vunpack.c.l.b16 %v1955
    %v2599 = vunpack.c.h.b16 %v1955
    %v2600 = vunpack.c.l.b16 %v1956
    %v2601 = vunpack.c.h.b16 %v1956
    %v2602 = vunpack.c.l.b16 %v1957
    %v2603 = vunpack.c.h.b16 %v1957
    %v2604 = vunpack.c.l.b16 %v1958
    %v2605 = vunpack.c.h.b16 %v1958
    %v2606 = vunpack.c.l.b16 %v1959
    %v2607 = vunpack.c.h.b16 %v1959
    %v2608 = vunpack.c.l.b16 %v1960
    %v2609 = vunpack.c.h.b16 %v1960
    %v2610 = vunpack.c.l.b16 %v1961
    %v2611 = vunpack.c.h.b16 %v1961
    %v2612 = vunpack.c.l.b16 %v1962
    %v2613 = vunpack.c.h.b16 %v1962
    %v2614 = vunpack.c.l.b16 %v1963
    %v2615 = vunpack.c.h.b16 %v1963
    %v2616 = vunpack.c.l.b16 %v1964
    %v2617 = vunpack.c.h.b16 %v1964
    %v2618 = vunpack.c.l.b16 %v1965
    %v2619 = vunpack.c.h.b16 %v1965
    %v2620 = vunpack.c.l.b16 %v1966
    %v2621 = vunpack.c.h.b16 %v1966
    %v2622 = vunpack.c.l.b16 %v1967
    %v2623 = vunpack.c.h.b16 %v1967
    %v2624 = vunpack.c.l.b16 %v1968
    %v2625 = vunpack.c.h.b16 %v1968
    %v2626 = vunpack.c.l.b16 %v1969
    %v2627 = vunpack.c.h.b16 %v1969
    %v2628 = vunpack.c.l.b16 %v1970
    %v2629 = vunpack.c.h.b16 %v1970
    %v2630 = vunpack.c.l.b16 %v1971
    %v2631 = vunpack.c.h.b16 %v1971
    %v2632 = vunpack.c.l.b16 %v1972
    %v2633 = vunpack.c.h.b16 %v1972
    %v2634 = vunpack.c.l.b16 %v1973
    %v2635 = vunpack.c.h.b16 %v1973
    %v2636 = vunpack.c.l.b16 %v1974
    %v2637 = vunpack.c.h.b16 %v1974
    %v2638 = vunpack.c.l.b16 %v1975
    %v2639 = vunpack.c.h.b16 %v1975
    %v2640 = vunpack.c.l.b16 %v1976
    %v2641 = vunpack.c.h.b16 %v1976
    %v2642 = vunpack.c.l.b16 %v1977
    %v2643 = vunpack.c.h.b16 %v1977
    %v2644 = vunpack.c.l.b16 %v1978
    %v2645 = vunpack.c.h.b16 %v1978
    %v2646 = vunpack.c.l.b16 %v1979
    %v2647 = vunpack.c.h.b16 %v1979
    %v2648 = vunpack.c.l.b16 %v1980
    %v2649 = vunpack.c.h.b16 %v1980
    %v2650 = vunpack.c.l.b16 %v1981
    %v2651 = vunpack.c.h.b16 %v1981
    %v2652 = vunpack.c.l.b16 %v1982
    %v2653 = vunpack.c.h.b16 %v1982
    %v2654 = vunpack.c.l.b16 %v1983
    %v2655 = vunpack.c.h.b16 %v1983
    %v2656 = vunpack.c.l.b16 %v1984
    %v2657 = vunpack.c.h.b16 %v1984
    %v2658 = vunpack.c.l.b16 %v1985
    %v2659 = vunpack.c.h.b16 %v1985
    %v2660 = vunpack.c.l.b16 %v1986
    %v2661 = vunpack.c.h.b16 %v1986
    %v2662 = vunpack.c.l.b16 %v1987
    %v2663 = vunpack.c.h.b16 %v1987
    %v2664 = vunpack.c.l.b16 %v1988
    %v2665 = vunpack.c.h.b16 %v1988
    %v2666 = vunpack.c.l.b16 %v1989
    %v2667 = vunpack.c.h.b16 %v1989
    %v2668 = vunpack.c.l.b16 %v1990
    %v2669 = vunpack.c.h.b16 %v1990
    %v2670 = vunpack.c.l.b16 %v1991
    %v2671 = vunpack.c.h.b16 %v1991
    %v2672 = vunpack.c.l.b16 %v1992
    %v2673 = vunpack.c.h.b16 %v1992
    %v2674 = vunpack.c.l.b16 %v1993
    %v2675 = vunpack.c.h.b16 %v1993
    %v2676 = vunpack.c.l.b16 %v1994
    %v2677 = vunpack.c.h.b16 %v1994
    %v2678 = vunpack.c.l.b16 %v1995
    %v2679 = vunpack.c.h.b16 %v1995
    %v2680 = vunpack.c.l.b16 %v1996
    %v2681 = vunpack.c.h.b16 %v1996
    %v2682 = vunpack.c.l.b16 %v1997
    %v2683 = vunpack.c.h.b16 %v1997
    %v2684 = vunpack.c.l.b16 %v1998
    %v2685 = vunpack.c.h.b16 %v1998
    %v2686 = vunpack.c.l.b16 %v1999
    %v2687 = vunpack.c.h.b16 %v1999
    %v2688 = vunpack.c.l.b16 %v2000
    %v2689 = vunpack.c.h.b16 %v2000
    %v2690 = vunpack.c.l.b16 %v2001
    %v2691 = vunpack.c.h.b16 %v2001
    %v2692 = vunpack.c.l.b16 %v2002
    %v2693 = vunpack.c.h.b16 %v2002
    %v2694 = vunpack.c.l.b16 %v2003
    %v2695 = vunpack.c.h.b16 %v2003
    %v2696 = vunpack.c.l.b16 %v2004
    %v2697 = vunpack.c.h.b16 %v2004
    %v2698 = vunpack.c.l.b16 %v2005
    %v2699 = vunpack.c.h.b16 %v2005
    %v2700 = vunpack.c.l.b16 %v2006
    %v2701 = vunpack.c.h.b16 %v2006
    %v2702 = vunpack.c.l.b16 %v2007
    %v2703 = vunpack.c.h.b16 %v2007
    %v2704 = vunpack.c.l.b16 %v2008
    %v2705 = vunpack.c.h.b16 %v2008
    %v2706 = vunpack.c.l.b16 %v2009
    %v2707 = vunpack.c.h.b16 %v2009
    %v2708 = vunpack.c.l.b16 %v2010
    %v2709 = vunpack.c.h.b16 %v2010
    %v2710 = vunpack.c.l.b16 %v2011
    %v2711 = vunpack.c.h.b16 %v2011
    %v2712 = vunpack.c.l.b16 %v2012
    %v2713 = vunpack.c.h.b16 %v2012
    %v2714 = vunpack.c.l.b16 %v2013
    %v2715 = vunpack.c.h.b16 %v2013
    %v2716 = vunpack.c.l.b16 %v2014
    %v2717 = vunpack.c.h.b16 %v2014
    %v2718 = vunpack.c.l.b16 %v2015
    %v2719 = vunpack.c.h.b16 %v2015
    %v2720 = vunpack.c.l.b16 %v2016
    %v2721 = vunpack.c.h.b16 %v2016
    %v2722 = vunpack.c.l.b16 %v2017
    %v2723 = vunpack.c.h.b16 %v2017
    %v2724 = vunpack.c.l.b16 %v2018
    %v2725 = vunpack.c.h.b16 %v2018
    %v2726 = vunpack.c.l.b16 %v2019
    %v2727 = vunpack.c.h.b16 %v2019
    %v2728 = vunpack.c.l.b16 %v2020
    %v2729 = vunpack.c.h.b16 %v2020
    %v2730 = vunpack.c.l.b16 %v2021
    %v2731 = vunpack.c.h.b16 %v2021
    %v2732 = vunpack.c.l.b16 %v2022
    %v2733 = vunpack.c.h.b16 %v2022
    %v2734 = vunpack.c.l.b16 %v2023
    %v2735 = vunpack.c.h.b16 %v2023
    %v2736 = vunpack.c.l.b16 %v2024
    %v2737 = vunpack.c.h.b16 %v2024
    %v2738 = vunpack.c.l.b16 %v2025
    %v2739 = vunpack.c.h.b16 %v2025
    %v2740 = vunpack.c.l.b16 %v2026
    %v2741 = vunpack.c.h.b16 %v2026
    %v2742 = vunpack.c.l.b16 %v2027
    %v2743 = vunpack.c.h.b16 %v2027
    %v2744 = vunpack.c.l.b16 %v2028
    %v2745 = vunpack.c.h.b16 %v2028
    %v2746 = vunpack.c.l.b16 %v2029
    %v2747 = vunpack.c.h.b16 %v2029
    %v2748 = vunpack.c.l.b16 %v2030
    %v2749 = vunpack.c.h.b16 %v2030
    %v2750 = vunpack.c.l.b16 %v2031
    %v2751 = vunpack.c.h.b16 %v2031
    %v2752 = vunpack.c.l.b16 %v2032
    %v2753 = vunpack.c.h.b16 %v2032
    %v2754 = vunpack.c.l.b16 %v2033
    %v2755 = vunpack.c.h.b16 %v2033
    %v2756 = vunpack.c.l.b16 %v2034
    %v2757 = vunpack.c.h.b16 %v2034
    %v2758 = vunpack.c.l.b16 %v2035
    %v2759 = vunpack.c.h.b16 %v2035
    %v2760 = vunpack.c.l.b16 %v2036
    %v2761 = vunpack.c.h.b16 %v2036
    %v2762 = vunpack.c.l.b16 %v2037
    %v2763 = vunpack.c.h.b16 %v2037
    %v2764 = vunpack.c.l.b16 %v2038
    %v2765 = vunpack.c.h.b16 %v2038
    %v2766 = vunpack.c.l.b16 %v2039
    %v2767 = vunpack.c.h.b16 %v2039
    %v2768 = vunpack.c.l.b16 %v2040
    %v2769 = vunpack.c.h.b16 %v2040
    %v2770 = vunpack.c.l.b16 %v2041
    %v2771 = vunpack.c.h.b16 %v2041
    %v2772 = vunpack.c.l.b16 %v2042
    %v2773 = vunpack.c.h.b16 %v2042
    %v2774 = vunpack.c.l.b16 %v2043
    %v2775 = vunpack.c.h.b16 %v2043
    %v2776 = vunpack.c.l.b16 %v2044
    %v2777 = vunpack.c.h.b16 %v2044
    %v2778 = vunpack.c.l.b16 %v2045
    %v2779 = vunpack.c.h.b16 %v2045
    %v2780 = vunpack.c.l.b16 %v2046
    %v2781 = vunpack.c.h.b16 %v2046
    %v2782 = vunpack.c.l.b16 %v2047
    %v2783 = vunpack.c.h.b16 %v2047
    %v2784 = vunpack.c.l.b16 %v2048
    %v2785 = vunpack.c.h.b16 %v2048
    %v2786 = vunpack.c.l.b16 %v2049
    %v2787 = vunpack.c.h.b16 %v2049
    %v2788 = vunpack.c.l.b16 %v2050
    %v2789 = vunpack.c.h.b16 %v2050
    %v2790 = vunpack.c.l.b16 %v2051
    %v2791 = vunpack.c.h.b16 %v2051
    %v2792 = vunpack.c.l.b16 %v2052
    %v2793 = vunpack.c.h.b16 %v2052
    %v2794 = vunpack.c.l.b16 %v2053
    %v2795 = vunpack.c.h.b16 %v2053
    %v2796 = vunpack.c.l.b16 %v2054
    %v2797 = vunpack.c.h.b16 %v2054
    %v2798 = vunpack.c.l.b16 %v2055
    %v2799 = vunpack.c.h.b16 %v2055
    %v2800 = vunpack.c.l.b16 %v2056
    %v2801 = vunpack.c.h.b16 %v2056
    %v2802 = vunpack.c.l.b16 %v2057
    %v2803 = vunpack.c.h.b16 %v2057
    %v2804 = vunpack.c.l.b16 %v2058
    %v2805 = vunpack.c.h.b16 %v2058
    %v2806 = vunpack.c.l.b16 %v2059
    %v2807 = vunpack.c.h.b16 %v2059
    %v2808 = vunpack.c.l.b16 %v2060
    %v2809 = vunpack.c.h.b16 %v2060
    %v2810 = vunpack.c.l.b16 %v2061
    %v2811 = vunpack.c.h.b16 %v2061
    %v2812 = vunpack.c.l.b16 %v2062
    %v2813 = vunpack.c.h.b16 %v2062
    %v2814 = vunpack.c.l.b16 %v2063
    %v2815 = vunpack.c.h.b16 %v2063
    %v2816 = vunpack.c.l.b16 %v2064
    %v2817 = vunpack.c.h.b16 %v2064
    %v2818 = vunpack.c.l.b16 %v2065
    %v2819 = vunpack.c.h.b16 %v2065
    %v2820 = vunpack.c.l.b16 %v2066
    %v2821 = vunpack.c.h.b16 %v2066
    %v2822 = vunpack.c.l.b16 %v2067
    %v2823 = vunpack.c.h.b16 %v2067
    %v2824 = vunpack.c.l.b16 %v2068
    %v2825 = vunpack.c.h.b16 %v2068
    %v2826 = vunpack.c.l.b16 %v2069
    %v2827 = vunpack.c.h.b16 %v2069
    %v2828 = vunpack.c.l.b16 %v2070
    %v2829 = vunpack.c.h.b16 %v2070
    %v2830 = vunpack.c.l.b16 %v2071
    %v2831 = vunpack.c.h.b16 %v2071
    %v2832 = vunpack.c.l.b16 %v2072
    %v2833 = vunpack.c.h.b16 %v2072
    %v2834 = vunpack.c.l.b16 %v2073
    %v2835 = vunpack.c.h.b16 %v2073
    %v2836 = vunpack.c.l.b16 %v2074
    %v2837 = vunpack.c.h.b16 %v2074
    %v2838 = vunpack.c.l.b16 %v2075
    %v2839 = vunpack.c.h.b16 %v2075
    %v2840 = vunpack.c.l.b16 %v2076
    %v2841 = vunpack.c.h.b16 %v2076
    %v2842 = vunpack.c.l.b16 %v2077
    %v2843 = vunpack.c.h.b16 %v2077
    %v2844 = vunpack.c.l.b16 %v2078
    %v2845 = vunpack.c.h.b16 %v2078
    %v2846 = vunpack.c.l.b16 %v2079
    %v2847 = vunpack.c.h.b16 %v2079
    %v2848 = vunpack.c.l.b16 %v2080
    %v2849 = vunpack.c.h.b16 %v2080
    %v2850 = vunpack.c.l.b16 %v2081
    %v2851 = vunpack.c.h.b16 %v2081
    %v2852 = vunpack.c.l.b16 %v2082
    %v2853 = vunpack.c.h.b16 %v2082
    %v2854 = vunpack.c.l.b16 %v2083
    %v2855 = vunpack.c.h.b16 %v2083
    %v2856 = vunpack.c.l.b16 %v2084
    %v2857 = vunpack.c.h.b16 %v2084
    %v2858 = vunpack.c.l.b16 %v2085
    %v2859 = vunpack.c.h.b16 %v2085
    %v2860 = vunpack.c.l.b16 %v2086
    %v2861 = vunpack.c.h.b16 %v2086
    %v2862 = vunpack.c.l.b16 %v2087
    %v2863 = vunpack.c.h.b16 %v2087
    %v2864 = vunpack.c.l.b16 %v2088
    %v2865 = vunpack.c.h.b16 %v2088
    %v2866 = vunpack.c.l.b16 %v2089
    %v2867 = vunpack.c.h.b16 %v2089
    %v2868 = vunpack.c.l.b16 %v2090
    %v2869 = vunpack.c.h.b16 %v2090
    %v2870 = vunpack.c.l.b16 %v2091
    %v2871 = vunpack.c.h.b16 %v2091
    %v2872 = vunpack.c.l.b16 %v2092
    %v2873 = vunpack.c.h.b16 %v2092
    %v2874 = vunpack.c.l.b16 %v2093
    %v2875 = vunpack.c.h.b16 %v2093
    %v2876 = vunpack.c.l.b16 %v2094
    %v2877 = vunpack.c.h.b16 %v2094
    %v2878 = vunpack.c.l.b16 %v2095
    %v2879 = vunpack.c.h.b16 %v2095
    %v2880 = vunpack.c.l.b16 %v2096
    %v2881 = vunpack.c.h.b16 %v2096
    %v2882 = vunpack.c.l.b16 %v2097
    %v2883 = vunpack.c.h.b16 %v2097
    %v2884 = vpack.c.b16 %v2380, %v2372
    %v2885 = vpack.c.b16 %v2381, %v2373
    %v2886 = vpack.c.b16 %v2382, %v2374
    %v2887 = vpack.c.b16 %v2383, %v2375
    %v2888 = vpack.c.b16 %v2384, %v2376
    %v2889 = vpack.c.b16 %v2385, %v2377
    %v2890 = vpack.c.b16 %v2386, %v2378
    %v2891 = vpack.c.b16 %v2387, %v2379
    %v2892 = vpack.c.b16 %v2396, %v2388
    %v2893 = vpack.c.b16 %v2397, %v2389
    %v2894 = vpack.c.b16 %v2398, %v2390
    %v2895 = vpack.c.b16 %v2399, %v2391
    %v2896 = vpack.c.b16 %v2400, %v2392
    %v2897 = vpack.c.b16 %v2401, %v2393
    %v2898 = vpack.c.b16 %v2402, %v2394
    %v2899 = vpack.c.b16 %v2403, %v2395
    %v2900 = vpack.c.b16 %v2412, %v2404
    %v2901 = vpack.c.b16 %v2413, %v2405
    %v2902 = vpack.c.b16 %v2414, %v2406
    %v2903 = vpack.c.b16 %v2415, %v2407
    %v2904 = vpack.c.b16 %v2416, %v2408
    %v2905 = vpack.c.b16 %v2417, %v2409
    %v2906 = vpack.c.b16 %v2418, %v2410
    %v2907 = vpack.c.b16 %v2419, %v2411
    %v2908 = vpack.c.b16 %v2428, %v2420
    %v2909 = vpack.c.b16 %v2429, %v2421
    %v2910 = vpack.c.b16 %v2430, %v2422
    %v2911 = vpack.c.b16 %v2431, %v2423
    %v2912 = vpack.c.b16 %v2432, %v2424
    %v2913 = vpack.c.b16 %v2433, %v2425
    %v2914 = vpack.c.b16 %v2434, %v2426
    %v2915 = vpack.c.b16 %v2435, %v2427
    %v2916 = vpack.c.b16 %v2444, %v2436
    %v2917 = vpack.c.b16 %v2445, %v2437
    %v2918 = vpack.c.b16 %v2446, %v2438
    %v2919 = vpack.c.b16 %v2447, %v2439
    %v2920 = vpack.c.b16 %v2448, %v2440
    %v2921 = vpack.c.b16 %v2449, %v2441
    %v2922 = vpack.c.b16 %v2450, %v2442
    %v2923 = vpack.c.b16 %v2451, %v2443
    %v2924 = vpack.c.b16 %v2460, %v2452
    %v2925 = vpack.c.b16 %v2461, %v2453
    %v2926 = vpack.c.b16 %v2462, %v2454
    %v2927 = vpack.c.b16 %v2463, %v2455
    %v2928 = vpack.c.b16 %v2464, %v2456
    %v2929 = vpack.c.b16 %v2465, %v2457
    %v2930 = vpack.c.b16 %v2466, %v2458
    %v2931 = vpack.c.b16 %v2467, %v2459
    %v2932 = vpack.c.b16 %v2476, %v2468
    %v2933 = vpack.c.b16 %v2477, %v2469
    %v2934 = vpack.c.b16 %v2478, %v2470
    %v2935 = vpack.c.b16 %v2479, %v2471
    %v2936 = vpack.c.b16 %v2480, %v2472
    %v2937 = vpack.c.b16 %v2481, %v2473
    %v2938 = vpack.c.b16 %v2482, %v2474
    %v2939 = vpack.c.b16 %v2483, %v2475
    %v2940 = vpack.c.b16 %v2492, %v2484
    %v2941 = vpack.c.b16 %v2493, %v2485
    %v2942 = vpack.c.b16 %v2494, %v2486
    %v2943 = vpack.c.b16 %v2495, %v2487
    %v2944 = vpack.c.b16 %v2496, %v2488
    %v2945 = vpack.c.b16 %v2497, %v2489
    %v2946 = vpack.c.b16 %v2498, %v2490
    %v2947 = vpack.c.b16 %v2499, %v2491
    %v2948 = vpack.c.b16 %v2508, %v2500
    %v2949 = vpack.c.b16 %v2509, %v2501
    %v2950 = vpack.c.b16 %v2510, %v2502
    %v2951 = vpack.c.b16 %v2511, %v2503
    %v2952 = vpack.c.b16 %v2512, %v2504
    %v2953 = vpack.c.b16 %v2513, %v2505
    %v2954 = vpack.c.b16 %v2514, %v2506
    %v2955 = vpack.c.b16 %v2515, %v2507
    %v2956 = vpack.c.b16 %v2524, %v2516
    %v2957 = vpack.c.b16 %v2525, %v2517
    %v2958 = vpack.c.b16 %v2526, %v2518
    %v2959 = vpack.c.b16 %v2527, %v2519
    %v2960 = vpack.c.b16 %v2528, %v2520
    %v2961 = vpack.c.b16 %v2529, %v2521
    %v2962 = vpack.c.b16 %v2530, %v2522
    %v2963 = vpack.c.b16 %v2531, %v2523
    %v2964 = vpack.c.b16 %v2540, %v2532
    %v2965 = vpack.c.b16 %v2541, %v2533
    %v2966 = vpack.c.b16 %v2542, %v2534
    %v2967 = vpack.c.b16 %v2543, %v2535
    %v2968 = vpack.c.b16 %v2544, %v2536
    %v2969 = vpack.c.b16 %v2545, %v2537
    %v2970 = vpack.c.b16 %v2546, %v2538
    %v2971 = vpack.c.b16 %v2547, %v2539
    %v2972 = vpack.c.b16 %v2556, %v2548
    %v2973 = vpack.c.b16 %v2557, %v2549
    %v2974 = vpack.c.b16 %v2558, %v2550
    %v2975 = vpack.c.b16 %v2559, %v2551
    %v2976 = vpack.c.b16 %v2560, %v2552
    %v2977 = vpack.c.b16 %v2561, %v2553
    %v2978 = vpack.c.b16 %v2562, %v2554
    %v2979 = vpack.c.b16 %v2563, %v2555
    %v2980 = vpack.c.b16 %v2572, %v2564
    %v2981 = vpack.c.b16 %v2573, %v2565
    %v2982 = vpack.c.b16 %v2574, %v2566
    %v2983 = vpack.c.b16 %v2575, %v2567
    %v2984 = vpack.c.b16 %v2576, %v2568
    %v2985 = vpack.c.b16 %v2577, %v2569
    %v2986 = vpack.c.b16 %v2578, %v2570
    %v2987 = vpack.c.b16 %v2579, %v2571
    %v2988 = vpack.c.b16 %v2588, %v2580
    %v2989 = vpack.c.b16 %v2589, %v2581
    %v2990 = vpack.c.b16 %v2590, %v2582
    %v2991 = vpack.c.b16 %v2591, %v2583
    %v2992 = vpack.c.b16 %v2592, %v2584
    %v2993 = vpack.c.b16 %v2593, %v2585
    %v2994 = vpack.c.b16 %v2594, %v2586
    %v2995 = vpack.c.b16 %v2595, %v2587
    %v2996 = vpack.c.b16 %v2604, %v2596
    %v2997 = vpack.c.b16 %v2605, %v2597
    %v2998 = vpack.c.b16 %v2606, %v2598
    %v2999 = vpack.c.b16 %v2607, %v2599
    %v3000 = vpack.c.b16 %v2608, %v2600
    %v3001 = vpack.c.b16 %v2609, %v2601
    %v3002 = vpack.c.b16 %v2610, %v2602
    %v3003 = vpack.c.b16 %v2611, %v2603
    %v3004 = vpack.c.b16 %v2620, %v2612
    %v3005 = vpack.c.b16 %v2621, %v2613
    %v3006 = vpack.c.b16 %v2622, %v2614
    %v3007 = vpack.c.b16 %v2623, %v2615
    %v3008 = vpack.c.b16 %v2624, %v2616
    %v3009 = vpack.c.b16 %v2625, %v2617
    %v3010 = vpack.c.b16 %v2626, %v2618
    %v3011 = vpack.c.b16 %v2627, %v2619
    %v3012 = vpack.c.b16 %v2636, %v2628
    %v3013 = vpack.c.b16 %v2637, %v2629
    %v3014 = vpack.c.b16 %v2638, %v2630
    %v3015 = vpack.c.b16 %v2639, %v2631
    %v3016 = vpack.c.b16 %v2640, %v2632
    %v3017 = vpack.c.b16 %v2641, %v2633
    %v3018 = vpack.c.b16 %v2642, %v2634
    %v3019 = vpack.c.b16 %v2643, %v2635
    %v3020 = vpack.c.b16 %v2652, %v2644
    %v3021 = vpack.c.b16 %v2653, %v2645
    %v3022 = vpack.c.b16 %v2654, %v2646
    %v3023 = vpack.c.b16 %v2655, %v2647
    %v3024 = vpack.c.b16 %v2656, %v2648
    %v3025 = vpack.c.b16 %v2657, %v2649
    %v3026 = vpack.c.b16 %v2658, %v2650
    %v3027 = vpack.c.b16 %v2659, %v2651
    %v3028 = vpack.c.b16 %v2668, %v2660
    %v3029 = vpack.c.b16 %v2669, %v2661
    %v3030 = vpack.c.b16 %v2670, %v2662
    %v3031 = vpack.c.b16 %v2671, %v2663
    %v3032 = vpack.c.b16 %v2672, %v2664
    %v3033 = vpack.c.b16 %v2673, %v2665
    %v3034 = vpack.c.b16 %v2674, %v2666
    %v3035 = vpack.c.b16 %v2675, %v2667
    %v3036 = vpack.c.b16 %v2684, %v2676
    %v3037 = vpack.c.b16 %v2685, %v2677
    %v3038 = vpack.c.b16 %v2686, %v2678
    %v3039 = vpack.c.b16 %v2687, %v2679
    %v3040 = vpack.c.b16 %v2688, %v2680
    %v3041 = vpack.c.b16 %v2689, %v2681
    %v3042 = vpack.c.b16 %v2690, %v2682
    %v3043 = vpack.c.b16 %v2691, %v2683
    %v3044 = vpack.c.b16 %v2700, %v2692
    %v3045 = vpack.c.b16 %v2701, %v2693
    %v3046 = vpack.c.b16 %v2702, %v2694
    %v3047 = vpack.c.b16 %v2703, %v2695
    %v3048 = vpack.c.b16 %v2704, %v2696
    %v3049 = vpack.c.b16 %v2705, %v2697
    %v3050 = vpack.c.b16 %v2706, %v2698
    %v3051 = vpack.c.b16 %v2707, %v2699
    %v3052 = vpack.c.b16 %v2716, %v2708
    %v3053 = vpack.c.b16 %v2717, %v2709
    %v3054 = vpack.c.b16 %v2718, %v2710
    %v3055 = vpack.c.b16 %v2719, %v2711
    %v3056 = vpack.c.b16 %v2720, %v2712
    %v3057 = vpack.c.b16 %v2721, %v2713
    %v3058 = vpack.c.b16 %v2722, %v2714
    %v3059 = vpack.c.b16 %v2723, %v2715
    %v3060 = vpack.c.b16 %v2732, %v2724
    %v3061 = vpack.c.b16 %v2733, %v2725
    %v3062 = vpack.c.b16 %v2734, %v2726
    %v3063 = vpack.c.b16 %v2735, %v2727
    %v3064 = vpack.c.b16 %v2736, %v2728
    %v3065 = vpack.c.b16 %v2737, %v2729
    %v3066 = vpack.c.b16 %v2738, %v2730
    %v3067 = vpack.c.b16 %v2739, %v2731
    %v3068 = vpack.c.b16 %v2748, %v2740
    %v3069 = vpack.c.b16 %v2749, %v2741
    %v3070 = vpack.c.b16 %v2750, %v2742
    %v3071 = vpack.c.b16 %v2751, %v2743
    %v3072 = vpack.c.b16 %v2752, %v2744
    %v3073 = vpack.c.b16 %v2753, %v2745
    %v3074 = vpack.c.b16 %v2754, %v2746
    %v3075 = vpack.c.b16 %v2755, %v2747
    %v3076 = vpack.c.b16 %v2764, %v2756
    %v3077 = vpack.c.b16 %v2765, %v2757
    %v3078 = vpack.c.b16 %v2766, %v2758
    %v3079 = vpack.c.b16 %v2767, %v2759
    %v3080 = vpack.c.b16 %v2768, %v2760
    %v3081 = vpack.c.b16 %v2769, %v2761
    %v3082 = vpack.c.b16 %v2770, %v2762
    %v3083 = vpack.c.b16 %v2771, %v2763
    %v3084 = vpack.c.b16 %v2780, %v2772
    %v3085 = vpack.c.b16 %v2781, %v2773
    %v3086 = vpack.c.b16 %v2782, %v2774
    %v3087 = vpack.c.b16 %v2783, %v2775
    %v3088 = vpack.c.b16 %v2784, %v2776
    %v3089 = vpack.c.b16 %v2785, %v2777
    %v3090 = vpack.c.b16 %v2786, %v2778
    %v3091 = vpack.c.b16 %v2787, %v2779
    %v3092 = vpack.c.b16 %v2796, %v2788
    %v3093 = vpack.c.b16 %v2797, %v2789
    %v3094 = vpack.c.b16 %v2798, %v2790
    %v3095 = vpack.c.b16 %v2799, %v2791
    %v3096 = vpack.c.b16 %v2800, %v2792
    %v3097 = vpack.c.b16 %v2801, %v2793
    %v3098 = vpack.c.b16 %v2802, %v2794
    %v3099 = vpack.c.b16 %v2803, %v2795
    %v3100 = vpack.c.b16 %v2812, %v2804
    %v3101 = vpack.c.b16 %v2813, %v2805
    %v3102 = vpack.c.b16 %v2814, %v2806
    %v3103 = vpack.c.b16 %v2815, %v2807
    %v3104 = vpack.c.b16 %v2816, %v2808
    %v3105 = vpack.c.b16 %v2817, %v2809
    %v3106 = vpack.c.b16 %v2818, %v2810
    %v3107 = vpack.c.b16 %v2819, %v2811
    %v3108 = vpack.c.b16 %v2828, %v2820
    %v3109 = vpack.c.b16 %v2829, %v2821
    %v3110 = vpack.c.b16 %v2830, %v2822
    %v3111 = vpack.c.b16 %v2831, %v2823
    %v3112 = vpack.c.b16 %v2832, %v2824
    %v3113 = vpack.c.b16 %v2833, %v2825
    %v3114 = vpack.c.b16 %v2834, %v2826
    %v3115 = vpack.c.b16 %v2835, %v2827
    %v3116 = vpack.c.b16 %v2844, %v2836
    %v3117 = vpack.c.b16 %v2845, %v2837
    %v3118 = vpack.c.b16 %v2846, %v2838
    %v3119 = vpack.c.b16 %v2847, %v2839
    %v3120 = vpack.c.b16 %v2848, %v2840
    %v3121 = vpack.c.b16 %v2849, %v2841
    %v3122 = vpack.c.b16 %v2850, %v2842
    %v3123 = vpack.c.b16 %v2851, %v2843
    %v3124 = vpack.c.b16 %v2860, %v2852
    %v3125 = vpack.c.b16 %v2861, %v2853
    %v3126 = vpack.c.b16 %v2862, %v2854
    %v3127 = vpack.c.b16 %v2863, %v2855
    %v3128 = vpack.c.b16 %v2864, %v2856
    %v3129 = vpack.c.b16 %v2865, %v2857
    %v3130 = vpack.c.b16 %v2866, %v2858
    %v3131 = vpack.c.b16 %v2867, %v2859
    %v3132 = vpack.c.b16 %v2876, %v2868
    %v3133 = vpack.c.b16 %v2877, %v2869
    %v3134 = vpack.c.b16 %v2878, %v2870
    %v3135 = vpack.c.b16 %v2879, %v2871
    %v3136 = vpack.c.b16 %v2880, %v2872
    %v3137 = vpack.c.b16 %v2881, %v2873
    %v3138 = vpack.c.b16 %v2882, %v2874
    %v3139 = vpack.c.b16 %v2883, %v2875
    %3396 = vmatpush.bf16.msra.mxu0 %v2940
    %3397 = vmatpush.bf16.msra.mxu0 %v2932
    %3398 = vmatpush.bf16.msra.mxu0 %v2924
    %3399 = vmatpush.bf16.msra.mxu0 %v2916
    %3400 = vmatpush.bf16.msra.mxu0 %v2908
    %3401 = vmatpush.bf16.msra.mxu0 %v2900
    %3402 = vmatpush.bf16.msra.mxu0 %v2892
    %3403 = vmatpush.bf16.msra.mxu0 %v2884
    %3404 = vmatmul.bf16.gmra.mxu0 %v1838
    %v3405 = vpop.f32.mrf.mxu0
    %v3406 = vadd.f32 %v2100, %v3405
    %v3407 = vpop.f32.mrf.mxu0
    %3408 = vdwg.mxu0
    %3409 = vmatpush.bf16.msra.mxu0 %v3004
    %3410 = vmatpush.bf16.msra.mxu0 %v2996
    %3411 = vmatpush.bf16.msra.mxu0 %v2988
    %3412 = vmatpush.bf16.msra.mxu0 %v2980
    %3413 = vmatpush.bf16.msra.mxu0 %v2972
    %3414 = vmatpush.bf16.msra.mxu0 %v2964
    %3415 = vmatpush.bf16.msra.mxu0 %v2956
    %3416 = vmatpush.bf16.msra.mxu0 %v2948
    %3417 = vmatmul.bf16.gmra.mxu0 %v1839
    %v3418 = vpop.f32.mrf.mxu0
    %v3419 = vadd.f32 %v3406, %v3418
    %v3420 = vpop.f32.mrf.mxu0
    %3421 = vdwg.mxu0
    %3422 = vmatpush.bf16.msra.mxu0 %v3068
    %3423 = vmatpush.bf16.msra.mxu0 %v3060
    %3424 = vmatpush.bf16.msra.mxu0 %v3052
    %3425 = vmatpush.bf16.msra.mxu0 %v3044
    %3426 = vmatpush.bf16.msra.mxu0 %v3036
    %3427 = vmatpush.bf16.msra.mxu0 %v3028
    %3428 = vmatpush.bf16.msra.mxu0 %v3020
    %3429 = vmatpush.bf16.msra.mxu0 %v3012
    %3430 = vmatmul.bf16.gmra.mxu0 %v1840
    %v3431 = vpop.f32.mrf.mxu0
    %v3432 = vadd.f32 %v3419, %v3431
    %v3433 = vpop.f32.mrf.mxu0
    %3434 = vdwg.mxu0
    %3435 = vmatpush.bf16.msra.mxu0 %v3132
    %3436 = vmatpush.bf16.msra.mxu0 %v3124
    %3437 = vmatpush.bf16.msra.mxu0 %v3116
    %3438 = vmatpush.bf16.msra.mxu0 %v3108
    %3439 = vmatpush.bf16.msra.mxu0 %v3100
    %3440 = vmatpush.bf16.msra.mxu0 %v3092
    %3441 = vmatpush.bf16.msra.mxu0 %v3084
    %3442 = vmatpush.bf16.msra.mxu0 %v3076
    %3443 = vmatmul.bf16.gmra.mxu0 %v1841
    %v3444 = vpop.f32.mrf.mxu0
    %v3445 = vadd.f32 %v3432, %v3444
    %v3446 = vpop.f32.mrf.mxu0
    %3447 = vdwg.mxu0
    %3448 = vmatpush.bf16.msra.mxu0 %v2941
    %3449 = vmatpush.bf16.msra.mxu0 %v2933
    %3450 = vmatpush.bf16.msra.mxu0 %v2925
    %3451 = vmatpush.bf16.msra.mxu0 %v2917
    %3452 = vmatpush.bf16.msra.mxu0 %v2909
    %3453 = vmatpush.bf16.msra.mxu0 %v2901
    %3454 = vmatpush.bf16.msra.mxu0 %v2893
    %3455 = vmatpush.bf16.msra.mxu0 %v2885
    %3456 = vmatmul.bf16.gmra.mxu0 %v1838
    %v3457 = vpop.f32.mrf.mxu0
    %v3458 = vadd.f32 %v2101, %v3457
    %v3459 = vpop.f32.mrf.mxu0
    %3460 = vdwg.mxu0
    %3461 = vmatpush.bf16.msra.mxu0 %v3005
    %3462 = vmatpush.bf16.msra.mxu0 %v2997
    %3463 = vmatpush.bf16.msra.mxu0 %v2989
    %3464 = vmatpush.bf16.msra.mxu0 %v2981
    %3465 = vmatpush.bf16.msra.mxu0 %v2973
    %3466 = vmatpush.bf16.msra.mxu0 %v2965
    %3467 = vmatpush.bf16.msra.mxu0 %v2957
    %3468 = vmatpush.bf16.msra.mxu0 %v2949
    %3469 = vmatmul.bf16.gmra.mxu0 %v1839
    %v3470 = vpop.f32.mrf.mxu0
    %v3471 = vadd.f32 %v3458, %v3470
    %v3472 = vpop.f32.mrf.mxu0
    %3473 = vdwg.mxu0
    %3474 = vmatpush.bf16.msra.mxu0 %v3069
    %3475 = vmatpush.bf16.msra.mxu0 %v3061
    %3476 = vmatpush.bf16.msra.mxu0 %v3053
    %3477 = vmatpush.bf16.msra.mxu0 %v3045
    %3478 = vmatpush.bf16.msra.mxu0 %v3037
    %3479 = vmatpush.bf16.msra.mxu0 %v3029
    %3480 = vmatpush.bf16.msra.mxu0 %v3021
    %3481 = vmatpush.bf16.msra.mxu0 %v3013
    %3482 = vmatmul.bf16.gmra.mxu0 %v1840
    %v3483 = vpop.f32.mrf.mxu0
    %v3484 = vadd.f32 %v3471, %v3483
    %v3485 = vpop.f32.mrf.mxu0
    %3486 = vdwg.mxu0
    %3487 = vmatpush.bf16.msra.mxu0 %v3133
    %3488 = vmatpush.bf16.msra.mxu0 %v3125
    %3489 = vmatpush.bf16.msra.mxu0 %v3117
    %3490 = vmatpush.bf16.msra.mxu0 %v3109
    %3491 = vmatpush.bf16.msra.mxu0 %v3101
    %3492 = vmatpush.bf16.msra.mxu0 %v3093
    %3493 = vmatpush.bf16.msra.mxu0 %v3085
    %3494 = vmatpush.bf16.msra.mxu0 %v3077
    %3495 = vmatmul.bf16.gmra.mxu0 %v1841
    %v3496 = vpop.f32.mrf.mxu0
    %v3497 = vadd.f32 %v3484, %v3496
    %v3498 = vpop.f32.mrf.mxu0
    %3499 = vdwg.mxu0
    %3500 = vmatpush.bf16.msra.mxu0 %v2942
    %3501 = vmatpush.bf16.msra.mxu0 %v2934
    %3502 = vmatpush.bf16.msra.mxu0 %v2926
    %3503 = vmatpush.bf16.msra.mxu0 %v2918
    %3504 = vmatpush.bf16.msra.mxu0 %v2910
    %3505 = vmatpush.bf16.msra.mxu0 %v2902
    %3506 = vmatpush.bf16.msra.mxu0 %v2894
    %3507 = vmatpush.bf16.msra.mxu0 %v2886
    %3508 = vmatmul.bf16.gmra.mxu0 %v1838
    %v3509 = vpop.f32.mrf.mxu0
    %v3510 = vadd.f32 %v2102, %v3509
    %v3511 = vpop.f32.mrf.mxu0
    %3512 = vdwg.mxu0
    %3513 = vmatpush.bf16.msra.mxu0 %v3006
    %3514 = vmatpush.bf16.msra.mxu0 %v2998
    %3515 = vmatpush.bf16.msra.mxu0 %v2990
    %3516 = vmatpush.bf16.msra.mxu0 %v2982
    %3517 = vmatpush.bf16.msra.mxu0 %v2974
    %3518 = vmatpush.bf16.msra.mxu0 %v2966
    %3519 = vmatpush.bf16.msra.mxu0 %v2958
    %3520 = vmatpush.bf16.msra.mxu0 %v2950
    %3521 = vmatmul.bf16.gmra.mxu0 %v1839
    %v3522 = vpop.f32.mrf.mxu0
    %v3523 = vadd.f32 %v3510, %v3522
    %v3524 = vpop.f32.mrf.mxu0
    %3525 = vdwg.mxu0
    %3526 = vmatpush.bf16.msra.mxu0 %v3070
    %3527 = vmatpush.bf16.msra.mxu0 %v3062
    %3528 = vmatpush.bf16.msra.mxu0 %v3054
    %3529 = vmatpush.bf16.msra.mxu0 %v3046
    %3530 = vmatpush.bf16.msra.mxu0 %v3038
    %3531 = vmatpush.bf16.msra.mxu0 %v3030
    %3532 = vmatpush.bf16.msra.mxu0 %v3022
    %3533 = vmatpush.bf16.msra.mxu0 %v3014
    %3534 = vmatmul.bf16.gmra.mxu0 %v1840
    %v3535 = vpop.f32.mrf.mxu0
    %v3536 = vadd.f32 %v3523, %v3535
    %v3537 = vpop.f32.mrf.mxu0
    %3538 = vdwg.mxu0
    %3539 = vmatpush.bf16.msra.mxu0 %v3134
    %3540 = vmatpush.bf16.msra.mxu0 %v3126
    %3541 = vmatpush.bf16.msra.mxu0 %v3118
    %3542 = vmatpush.bf16.msra.mxu0 %v3110
    %3543 = vmatpush.bf16.msra.mxu0 %v3102
    %3544 = vmatpush.bf16.msra.mxu0 %v3094
    %3545 = vmatpush.bf16.msra.mxu0 %v3086
    %3546 = vmatpush.bf16.msra.mxu0 %v3078
    %3547 = vmatmul.bf16.gmra.mxu0 %v1841
    %v3548 = vpop.f32.mrf.mxu0
    %v3549 = vadd.f32 %v3536, %v3548
    %v3550 = vpop.f32.mrf.mxu0
    %3551 = vdwg.mxu0
    %3552 = vmatpush.bf16.msra.mxu0 %v2943
    %3553 = vmatpush.bf16.msra.mxu0 %v2935
    %3554 = vmatpush.bf16.msra.mxu0 %v2927
    %3555 = vmatpush.bf16.msra.mxu0 %v2919
    %3556 = vmatpush.bf16.msra.mxu0 %v2911
    %3557 = vmatpush.bf16.msra.mxu0 %v2903
    %3558 = vmatpush.bf16.msra.mxu0 %v2895
    %3559 = vmatpush.bf16.msra.mxu0 %v2887
    %3560 = vmatmul.bf16.gmra.mxu0 %v1838
    %v3561 = vpop.f32.mrf.mxu0
    %v3562 = vadd.f32 %v2103, %v3561
    %v3563 = vpop.f32.mrf.mxu0
    %3564 = vdwg.mxu0
    %3565 = vmatpush.bf16.msra.mxu0 %v3007
    %3566 = vmatpush.bf16.msra.mxu0 %v2999
    %3567 = vmatpush.bf16.msra.mxu0 %v2991
    %3568 = vmatpush.bf16.msra.mxu0 %v2983
    %3569 = vmatpush.bf16.msra.mxu0 %v2975
    %3570 = vmatpush.bf16.msra.mxu0 %v2967
    %3571 = vmatpush.bf16.msra.mxu0 %v2959
    %3572 = vmatpush.bf16.msra.mxu0 %v2951
    %3573 = vmatmul.bf16.gmra.mxu0 %v1839
    %v3574 = vpop.f32.mrf.mxu0
    %v3575 = vadd.f32 %v3562, %v3574
    %v3576 = vpop.f32.mrf.mxu0
    %3577 = vdwg.mxu0
    %3578 = vmatpush.bf16.msra.mxu0 %v3071
    %3579 = vmatpush.bf16.msra.mxu0 %v3063
    %3580 = vmatpush.bf16.msra.mxu0 %v3055
    %3581 = vmatpush.bf16.msra.mxu0 %v3047
    %3582 = vmatpush.bf16.msra.mxu0 %v3039
    %3583 = vmatpush.bf16.msra.mxu0 %v3031
    %3584 = vmatpush.bf16.msra.mxu0 %v3023
    %3585 = vmatpush.bf16.msra.mxu0 %v3015
    %3586 = vmatmul.bf16.gmra.mxu0 %v1840
    %v3587 = vpop.f32.mrf.mxu0
    %v3588 = vadd.f32 %v3575, %v3587
    %v3589 = vpop.f32.mrf.mxu0
    %3590 = vdwg.mxu0
    %3591 = vmatpush.bf16.msra.mxu0 %v3135
    %3592 = vmatpush.bf16.msra.mxu0 %v3127
    %3593 = vmatpush.bf16.msra.mxu0 %v3119
    %3594 = vmatpush.bf16.msra.mxu0 %v3111
    %3595 = vmatpush.bf16.msra.mxu0 %v3103
    %3596 = vmatpush.bf16.msra.mxu0 %v3095
    %3597 = vmatpush.bf16.msra.mxu0 %v3087
    %3598 = vmatpush.bf16.msra.mxu0 %v3079
    %3599 = vmatmul.bf16.gmra.mxu0 %v1841
    %v3600 = vpop.f32.mrf.mxu0
    %v3601 = vadd.f32 %v3588, %v3600
    %v3602 = vpop.f32.mrf.mxu0
    %3603 = vdwg.mxu0
    %3604 = vmatpush.bf16.msra.mxu0 %v2944
    %3605 = vmatpush.bf16.msra.mxu0 %v2936
    %3606 = vmatpush.bf16.msra.mxu0 %v2928
    %3607 = vmatpush.bf16.msra.mxu0 %v2920
    %3608 = vmatpush.bf16.msra.mxu0 %v2912
    %3609 = vmatpush.bf16.msra.mxu0 %v2904
    %3610 = vmatpush.bf16.msra.mxu0 %v2896
    %3611 = vmatpush.bf16.msra.mxu0 %v2888
    %3612 = vmatmul.bf16.gmra.mxu0 %v1838
    %v3613 = vpop.f32.mrf.mxu0
    %v3614 = vadd.f32 %v2104, %v3613
    %v3615 = vpop.f32.mrf.mxu0
    %3616 = vdwg.mxu0
    %3617 = vmatpush.bf16.msra.mxu0 %v3008
    %3618 = vmatpush.bf16.msra.mxu0 %v3000
    %3619 = vmatpush.bf16.msra.mxu0 %v2992
    %3620 = vmatpush.bf16.msra.mxu0 %v2984
    %3621 = vmatpush.bf16.msra.mxu0 %v2976
    %3622 = vmatpush.bf16.msra.mxu0 %v2968
    %3623 = vmatpush.bf16.msra.mxu0 %v2960
    %3624 = vmatpush.bf16.msra.mxu0 %v2952
    %3625 = vmatmul.bf16.gmra.mxu0 %v1839
    %v3626 = vpop.f32.mrf.mxu0
    %v3627 = vadd.f32 %v3614, %v3626
    %v3628 = vpop.f32.mrf.mxu0
    %3629 = vdwg.mxu0
    %3630 = vmatpush.bf16.msra.mxu0 %v3072
    %3631 = vmatpush.bf16.msra.mxu0 %v3064
    %3632 = vmatpush.bf16.msra.mxu0 %v3056
    %3633 = vmatpush.bf16.msra.mxu0 %v3048
    %3634 = vmatpush.bf16.msra.mxu0 %v3040
    %3635 = vmatpush.bf16.msra.mxu0 %v3032
    %3636 = vmatpush.bf16.msra.mxu0 %v3024
    %3637 = vmatpush.bf16.msra.mxu0 %v3016
    %3638 = vmatmul.bf16.gmra.mxu0 %v1840
    %v3639 = vpop.f32.mrf.mxu0
    %v3640 = vadd.f32 %v3627, %v3639
    %v3641 = vpop.f32.mrf.mxu0
    %3642 = vdwg.mxu0
    %3643 = vmatpush.bf16.msra.mxu0 %v3136
    %3644 = vmatpush.bf16.msra.mxu0 %v3128
    %3645 = vmatpush.bf16.msra.mxu0 %v3120
    %3646 = vmatpush.bf16.msra.mxu0 %v3112
    %3647 = vmatpush.bf16.msra.mxu0 %v3104
    %3648 = vmatpush.bf16.msra.mxu0 %v3096
    %3649 = vmatpush.bf16.msra.mxu0 %v3088
    %3650 = vmatpush.bf16.msra.mxu0 %v3080
    %3651 = vmatmul.bf16.gmra.mxu0 %v1841
    %v3652 = vpop.f32.mrf.mxu0
    %v3653 = vadd.f32 %v3640, %v3652
    %v3654 = vpop.f32.mrf.mxu0
    %3655 = vdwg.mxu0
    %3656 = vmatpush.bf16.msra.mxu0 %v2945
    %3657 = vmatpush.bf16.msra.mxu0 %v2937
    %3658 = vmatpush.bf16.msra.mxu0 %v2929
    %3659 = vmatpush.bf16.msra.mxu0 %v2921
    %3660 = vmatpush.bf16.msra.mxu0 %v2913
    %3661 = vmatpush.bf16.msra.mxu0 %v2905
    %3662 = vmatpush.bf16.msra.mxu0 %v2897
    %3663 = vmatpush.bf16.msra.mxu0 %v2889
    %3664 = vmatmul.bf16.gmra.mxu0 %v1838
    %v3665 = vpop.f32.mrf.mxu0
    %v3666 = vadd.f32 %v2105, %v3665
    %v3667 = vpop.f32.mrf.mxu0
    %3668 = vdwg.mxu0
    %3669 = vmatpush.bf16.msra.mxu0 %v3009
    %3670 = vmatpush.bf16.msra.mxu0 %v3001
    %3671 = vmatpush.bf16.msra.mxu0 %v2993
    %3672 = vmatpush.bf16.msra.mxu0 %v2985
    %3673 = vmatpush.bf16.msra.mxu0 %v2977
    %3674 = vmatpush.bf16.msra.mxu0 %v2969
    %3675 = vmatpush.bf16.msra.mxu0 %v2961
    %3676 = vmatpush.bf16.msra.mxu0 %v2953
    %3677 = vmatmul.bf16.gmra.mxu0 %v1839
    %v3678 = vpop.f32.mrf.mxu0
    %v3679 = vadd.f32 %v3666, %v3678
    %v3680 = vpop.f32.mrf.mxu0
    %3681 = vdwg.mxu0
    %3682 = vmatpush.bf16.msra.mxu0 %v3073
    %3683 = vmatpush.bf16.msra.mxu0 %v3065
    %3684 = vmatpush.bf16.msra.mxu0 %v3057
    %3685 = vmatpush.bf16.msra.mxu0 %v3049
    %3686 = vmatpush.bf16.msra.mxu0 %v3041
    %3687 = vmatpush.bf16.msra.mxu0 %v3033
    %3688 = vmatpush.bf16.msra.mxu0 %v3025
    %3689 = vmatpush.bf16.msra.mxu0 %v3017
    %3690 = vmatmul.bf16.gmra.mxu0 %v1840
    %v3691 = vpop.f32.mrf.mxu0
    %v3692 = vadd.f32 %v3679, %v3691
    %v3693 = vpop.f32.mrf.mxu0
    %3694 = vdwg.mxu0
    %3695 = vmatpush.bf16.msra.mxu0 %v3137
    %3696 = vmatpush.bf16.msra.mxu0 %v3129
    %3697 = vmatpush.bf16.msra.mxu0 %v3121
    %3698 = vmatpush.bf16.msra.mxu0 %v3113
    %3699 = vmatpush.bf16.msra.mxu0 %v3105
    %3700 = vmatpush.bf16.msra.mxu0 %v3097
    %3701 = vmatpush.bf16.msra.mxu0 %v3089
    %3702 = vmatpush.bf16.msra.mxu0 %v3081
    %3703 = vmatmul.bf16.gmra.mxu0 %v1841
    %v3704 = vpop.f32.mrf.mxu0
    %v3705 = vadd.f32 %v3692, %v3704
    %v3706 = vpop.f32.mrf.mxu0
    %3707 = vdwg.mxu0
    %3708 = vmatpush.bf16.msra.mxu0 %v2946
    %3709 = vmatpush.bf16.msra.mxu0 %v2938
    %3710 = vmatpush.bf16.msra.mxu0 %v2930
    %3711 = vmatpush.bf16.msra.mxu0 %v2922
    %3712 = vmatpush.bf16.msra.mxu0 %v2914
    %3713 = vmatpush.bf16.msra.mxu0 %v2906
    %3714 = vmatpush.bf16.msra.mxu0 %v2898
    %3715 = vmatpush.bf16.msra.mxu0 %v2890
    %3716 = vmatmul.bf16.gmra.mxu0 %v1838
    %v3717 = vpop.f32.mrf.mxu0
    %v3718 = vadd.f32 %v2106, %v3717
    %v3719 = vpop.f32.mrf.mxu0
    %3720 = vdwg.mxu0
    %3721 = vmatpush.bf16.msra.mxu0 %v3010
    %3722 = vmatpush.bf16.msra.mxu0 %v3002
    %3723 = vmatpush.bf16.msra.mxu0 %v2994
    %3724 = vmatpush.bf16.msra.mxu0 %v2986
    %3725 = vmatpush.bf16.msra.mxu0 %v2978
    %3726 = vmatpush.bf16.msra.mxu0 %v2970
    %3727 = vmatpush.bf16.msra.mxu0 %v2962
    %3728 = vmatpush.bf16.msra.mxu0 %v2954
    %3729 = vmatmul.bf16.gmra.mxu0 %v1839
    %v3730 = vpop.f32.mrf.mxu0
    %v3731 = vadd.f32 %v3718, %v3730
    %v3732 = vpop.f32.mrf.mxu0
    %3733 = vdwg.mxu0
    %3734 = vmatpush.bf16.msra.mxu0 %v3074
    %3735 = vmatpush.bf16.msra.mxu0 %v3066
    %3736 = vmatpush.bf16.msra.mxu0 %v3058
    %3737 = vmatpush.bf16.msra.mxu0 %v3050
    %3738 = vmatpush.bf16.msra.mxu0 %v3042
    %3739 = vmatpush.bf16.msra.mxu0 %v3034
    %3740 = vmatpush.bf16.msra.mxu0 %v3026
    %3741 = vmatpush.bf16.msra.mxu0 %v3018
    %3742 = vmatmul.bf16.gmra.mxu0 %v1840
    %v3743 = vpop.f32.mrf.mxu0
    %v3744 = vadd.f32 %v3731, %v3743
    %v3745 = vpop.f32.mrf.mxu0
    %3746 = vdwg.mxu0
    %3747 = vmatpush.bf16.msra.mxu0 %v3138
    %3748 = vmatpush.bf16.msra.mxu0 %v3130
    %3749 = vmatpush.bf16.msra.mxu0 %v3122
    %3750 = vmatpush.bf16.msra.mxu0 %v3114
    %3751 = vmatpush.bf16.msra.mxu0 %v3106
    %3752 = vmatpush.bf16.msra.mxu0 %v3098
    %3753 = vmatpush.bf16.msra.mxu0 %v3090
    %3754 = vmatpush.bf16.msra.mxu0 %v3082
    %3755 = vmatmul.bf16.gmra.mxu0 %v1841
    %v3756 = vpop.f32.mrf.mxu0
    %v3757 = vadd.f32 %v3744, %v3756
    %v3758 = vpop.f32.mrf.mxu0
    %3759 = vdwg.mxu0
    %3760 = vmatpush.bf16.msra.mxu0 %v2947
    %3761 = vmatpush.bf16.msra.mxu0 %v2939
    %3762 = vmatpush.bf16.msra.mxu0 %v2931
    %3763 = vmatpush.bf16.msra.mxu0 %v2923
    %3764 = vmatpush.bf16.msra.mxu0 %v2915
    %3765 = vmatpush.bf16.msra.mxu0 %v2907
    %3766 = vmatpush.bf16.msra.mxu0 %v2899
    %3767 = vmatpush.bf16.msra.mxu0 %v2891
    %3768 = vmatmul.bf16.gmra.mxu0 %v1838
    %v3769 = vpop.f32.mrf.mxu0
    %v3770 = vadd.f32 %v2107, %v3769
    %v3771 = vpop.f32.mrf.mxu0
    %3772 = vdwg.mxu0
    %3773 = vmatpush.bf16.msra.mxu0 %v3011
    %3774 = vmatpush.bf16.msra.mxu0 %v3003
    %3775 = vmatpush.bf16.msra.mxu0 %v2995
    %3776 = vmatpush.bf16.msra.mxu0 %v2987
    %3777 = vmatpush.bf16.msra.mxu0 %v2979
    %3778 = vmatpush.bf16.msra.mxu0 %v2971
    %3779 = vmatpush.bf16.msra.mxu0 %v2963
    %3780 = vmatpush.bf16.msra.mxu0 %v2955
    %3781 = vmatmul.bf16.gmra.mxu0 %v1839
    %v3782 = vpop.f32.mrf.mxu0
    %v3783 = vadd.f32 %v3770, %v3782
    %v3784 = vpop.f32.mrf.mxu0
    %3785 = vdwg.mxu0
    %3786 = vmatpush.bf16.msra.mxu0 %v3075
    %3787 = vmatpush.bf16.msra.mxu0 %v3067
    %3788 = vmatpush.bf16.msra.mxu0 %v3059
    %3789 = vmatpush.bf16.msra.mxu0 %v3051
    %3790 = vmatpush.bf16.msra.mxu0 %v3043
    %3791 = vmatpush.bf16.msra.mxu0 %v3035
    %3792 = vmatpush.bf16.msra.mxu0 %v3027
    %3793 = vmatpush.bf16.msra.mxu0 %v3019
    %3794 = vmatmul.bf16.gmra.mxu0 %v1840
    %v3795 = vpop.f32.mrf.mxu0
    %v3796 = vadd.f32 %v3783, %v3795
    %v3797 = vpop.f32.mrf.mxu0
    %3798 = vdwg.mxu0
    %3799 = vmatpush.bf16.msra.mxu0 %v3139
    %3800 = vmatpush.bf16.msra.mxu0 %v3131
    %3801 = vmatpush.bf16.msra.mxu0 %v3123
    %3802 = vmatpush.bf16.msra.mxu0 %v3115
    %3803 = vmatpush.bf16.msra.mxu0 %v3107
    %3804 = vmatpush.bf16.msra.mxu0 %v3099
    %3805 = vmatpush.bf16.msra.mxu0 %v3091
    %3806 = vmatpush.bf16.msra.mxu0 %v3083
    %3807 = vmatmul.bf16.gmra.mxu0 %v1841
    %v3808 = vpop.f32.mrf.mxu0
    %v3809 = vadd.f32 %v3796, %v3808
    %v3810 = vpop.f32.mrf.mxu0
    %3811 = vdwg.mxu0
    %v3820 = vrot.slane %v3497, 6
    %v3821 = vrot.slane %v3549, 4
    %v3822 = vrot.slane %v3601, 2
    %v3823 = vrot.slane %v3705, 6
    %v3824 = vrot.slane %v3757, 4
    %v3825 = vrot.slane %v3809, 2
    %vm3826 = vcmask 1041408
    %v3827 = vsel %vm3826, %v3445, %v3820
    %vm3828 = vcmask 1045508
    %v3829 = vsel %vm3828, %v3821, %v3822
    %vm3830 = vcmask 1043456
    %v3831 = vsel %vm3830, %v3827, %v3829
    %v3832 = vsel %vm3826, %v3653, %v3823
    %v3833 = vsel %vm3828, %v3824, %v3825
    %v3834 = vsel %vm3830, %v3832, %v3833
    %3837 = vst [vmem:[#allocation11] sm:$0xff] %v3831
    %3838 = vst [vmem:[#allocation11 + $0x8] sm:$0xff] %v3834
    // Predicated region
    $region54: #{tpu_custom_call.1} parent=1 // pred_check
      _
    $region55: #{tpu_custom_call.1} parent=1 // pred_check_branch
      %3840 = sbr.rel (0) target = $region57
    $region56: #{tpu_custom_call.1} parent=1 // pred_region
      %3842 = vsyncadd [#allocation4], 0
      %s3844 = sshll.u32 [#allocation11], 4
      %s3845 = int_to_ptr.vmem [resolvable:$true] %s3844
      %s3846 = sshll.u32 %s8, 4
      %s3847 = int_to_ptr.hbm [resolvable:$true] %s3846
      %3849 = dma.vmem_to_hbm [thread:$0]  %s3845, 256, %s3847, [#allocation4]
    $region57: #{tpu_custom_call.1} parent=1 // pred_fallthru
      _
    // Predicated region
    $region58: #{tpu_custom_call.1} parent=1 // pred_check
      _
    $region59: #{tpu_custom_call.1} parent=1 // pred_check_branch
      %3851 = sbr.rel (0) target = $region61
    $region60: #{tpu_custom_call.1} parent=1 // pred_region
      %3853 = dma.done [#allocation4], 256
    $region61: #{tpu_custom_call.1} parent=1 // pred_fallthru
      _
    %3854 = vsyncpa [#allocation3], 1
    %3855 = vsyncpa [#allocation6], 1
    %3856 = vsyncpa [#allocation9], 1
    %3857 = vsyncpa [#allocation4], 1

</llo_original>
